<compile_context>
chip_gen: v6e
topology: v6e:2x2x1
jax: 0.10.0
libtpu: 0.0.40
codegen_flags: <defaults>
</compile_context>

<pallas_src>
import jax
import jax.numpy as jnp
from jax import lax
from jax.experimental import pallas as pl
from jax.experimental.pallas import tpu as pltpu

HIDDEN = 128      # self.hidden_dim
EMB_DIM = 100     # self.dim
N_FILT = 16       # conv out_channels per branch
BATCH_TILE = 8    # sublane-aligned per-program batch tile


def _sigmoid(x):
    return 1.0 / (1.0 + jnp.exp(-x))


def myqnn_kernel(u_ref, whh_ref, w1_ref, b1_ref, w2_ref, b2_ref,
                 w3_ref, b3_ref, wo_ref, bo_ref, out_ref):
    """One batch tile.

    u_ref   : (T, BT, 4H)   precomputed x_t @ W_ih^T + b_ih + b_hh, time-major
    whh_ref : (H, 4H)       hidden->gates weight (transposed vs. PyTorch)
    w1_ref  : (2H, 16)      conv1 center tap (the only tap its 1x1 output sees)
    w2_ref  : (4, 2H, 16)   conv2 taps, one per 2x2 output position
    w3_ref  : (9, 2H, 16)   conv3 taps, one per 3x3 output position
    b*_ref  : (1, 16)       conv biases
    wo_ref  : (48, C)       output Linear weight (transposed), bo_ref: (1, C)
    out_ref : (BT, C)       final logits for this batch tile
    """
    T, BT, G = u_ref.shape
    H = G // 4

    whh = whh_ref[...]                      # loop-invariant, loaded once

    def step(t, carry):
        h, c, acc = carry
        gates = u_ref[t] + jnp.dot(h, whh, preferred_element_type=jnp.float32)
        i_g = _sigmoid(gates[:, 0:H])           # PyTorch gate order: i, f, g, o
        f_g = _sigmoid(gates[:, H:2 * H])
        g_g = jnp.tanh(gates[:, 2 * H:3 * H])
        o_g = _sigmoid(gates[:, 3 * H:4 * H])
        c_new = f_g * c + i_g * g_g
        h_new = o_g * jnp.tanh(c_new)
        return h_new, c_new, acc + h_new

    z = jnp.zeros((BT, H), jnp.float32)
    _, _, acc = lax.fori_loop(0, T, step, (z, z, z), unroll=True)

    hmean = acc * (1.0 / T)                               # (BT, H) time mean of h_t
    # cat(output1, output2, dim=2): output2 == output1 because y aliases index,
    # so the time-mean of the concat is just [hmean, hmean].
    m = jnp.concatenate([hmean, hmean], axis=1)           # (BT, 2H)

    # Conv branches on a 1x1 spatial input with padding=2: every conv output
    # position sees only the single input pixel through one kernel tap, so each
    # branch is max over taps of relu(m @ W[:, :, tap].T + b).
    def tapped_branch(w_taps_ref, b_ref, n_taps):
        b = b_ref[...]
        v = jnp.maximum(
            jnp.dot(m, w_taps_ref[0], preferred_element_type=jnp.float32) + b, 0.0)
        for k in range(1, n_taps):
            zk = jnp.maximum(
                jnp.dot(m, w_taps_ref[k], preferred_element_type=jnp.float32) + b, 0.0)
            v = jnp.maximum(v, zk)
        return v

    v1 = jnp.maximum(
        jnp.dot(m, w1_ref[...], preferred_element_type=jnp.float32) + b1_ref[...], 0.0)
    v2 = tapped_branch(w2_ref, b2_ref, 4)
    v3 = tapped_branch(w3_ref, b3_ref, 9)

    wo = wo_ref[...]                                      # (48, C)
    out_ref[...] = (
        jnp.dot(v1, wo[0:N_FILT], preferred_element_type=jnp.float32)
        + jnp.dot(v2, wo[N_FILT:2 * N_FILT], preferred_element_type=jnp.float32)
        + jnp.dot(v3, wo[2 * N_FILT:3 * N_FILT], preferred_element_type=jnp.float32)
        + bo_ref[...]
    )


def myqnn_forward(index, params):
    """index: (B, T) int32 token ids. Returns {'pred': (B, n_class)}."""
    B, T = index.shape
    H = HIDDEN
    G = 4 * H
    C = params["out_w"].shape[0]

    # --- glue: net effect of the in-place "reversal" loop (y aliases index) -----
    j = jnp.arange(T)
    idx2 = index[:, jnp.maximum(j, T - 1 - j)]
    x = jnp.take(params["embedding"], idx2, axis=0)          # (B, T, 100)

    # --- hoisted LSTM input projection: one big MXU matmul, biases folded once --
    x_tm = jnp.transpose(x, (1, 0, 2))                        # (T, B, 100)
    u = jnp.einsum("tbd,gd->tbg", x_tm, params["w_ih"],
                   precision=lax.Precision.HIGHEST) \
        + (params["b_ih"] + params["b_hh"])                   # (T, B, 4H)
    u = u.astype(jnp.float32)

    Bp = ((B + BATCH_TILE - 1) // BATCH_TILE) * BATCH_TILE
    u = jnp.pad(u, ((0, 0), (0, Bp - B), (0, 0)))             # sublane-pad batch

    whh_t = jnp.transpose(params["w_hh"])                     # (H, 4H)

    # Conv weights -> per-output-position taps that hit the single input pixel.
    def taps(w, coords):
        return jnp.stack([jnp.transpose(w[:, :, i, k]) for (i, k) in coords], axis=0)

    w1 = jnp.transpose(params["conv1_w"][:, :, 2, 2])                              # (2H, 16)
    w2 = taps(params["conv2_w"], [(i, k) for i in (1, 2) for k in (1, 2)])          # (4, 2H, 16)
    w3 = taps(params["conv3_w"], [(i, k) for i in (0, 1, 2) for k in (0, 1, 2)])    # (9, 2H, 16)
    b1 = params["conv1_b"].reshape(1, N_FILT)
    b2 = params["conv2_b"].reshape(1, N_FILT)
    b3 = params["conv3_b"].reshape(1, N_FILT)
    wo = jnp.transpose(params["out_w"])                       # (48, C)
    bo = params["out_b"].reshape(1, C)

    out = pl.pallas_call(
        myqnn_kernel,
        out_shape=jax.ShapeDtypeStruct((Bp, C), jnp.float32),
        grid_spec=pltpu.PrefetchScalarGridSpec(
            num_scalar_prefetch=0,
            grid=(Bp // BATCH_TILE,),
            in_specs=[
                pl.BlockSpec((T, BATCH_TILE, G), lambda i: (0, i, 0)),
                pl.BlockSpec((H, G), lambda i: (0, 0)),
                pl.BlockSpec((2 * H, N_FILT), lambda i: (0, 0)),
                pl.BlockSpec((1, N_FILT), lambda i: (0, 0)),
                pl.BlockSpec((4, 2 * H, N_FILT), lambda i: (0, 0, 0)),
                pl.BlockSpec((1, N_FILT), lambda i: (0, 0)),
                pl.BlockSpec((9, 2 * H, N_FILT), lambda i: (0, 0, 0)),
                pl.BlockSpec((1, N_FILT), lambda i: (0, 0)),
                pl.BlockSpec((3 * N_FILT, C), lambda i: (0, 0)),
                pl.BlockSpec((1, C), lambda i: (0, 0)),
            ],
            out_specs=pl.BlockSpec((BATCH_TILE, C), lambda i: (i, 0)),
        ),
        compiler_params=pltpu.CompilerParams(
            dimension_semantics=("parallel",)),
    )(u, whh_t, w1, b1, w2, b2, w3, b3, wo, bo)

    return {"pred": out[:B]}


def init_params(key, vocab_size, n_class):
    """Deterministic PyTorch-style init for all myQnn parameters."""
    H = HIDDEN
    ks = jax.random.split(key, 13)

    def uni(k, shape, fan_in):
        b = 1.0 / float(fan_in) ** 0.5
        return jax.random.uniform(k, shape, jnp.float32, -b, b)

    return {
        "embedding": jax.random.normal(ks[0], (vocab_size, EMB_DIM), jnp.float32),
        "w_ih": uni(ks[1], (4 * H, EMB_DIM), H),          # PyTorch LSTM layout (4H, in)
        "w_hh": uni(ks[2], (4 * H, H), H),
        "b_ih": uni(ks[3], (4 * H,), H),
        "b_hh": uni(ks[4], (4 * H,), H),
        "conv1_w": uni(ks[5], (N_FILT, 2 * H, 5, 5), 2 * H * 25),
        "conv1_b": uni(ks[6], (N_FILT,), 2 * H * 25),
        "conv2_w": uni(ks[7], (N_FILT, 2 * H, 4, 4), 2 * H * 16),
        "conv2_b": uni(ks[8], (N_FILT,), 2 * H * 16),
        "conv3_w": uni(ks[9], (N_FILT, 2 * H, 3, 3), 2 * H * 9),
        "conv3_b": uni(ks[10], (N_FILT,), 2 * H * 9),
        "out_w": uni(ks[11], (n_class, 3 * N_FILT), 3 * N_FILT),
        "out_b": uni(ks[12], (n_class,), 3 * N_FILT),
    }


def reference_forward(index, params):
    """Pure-JAX reference mirroring the PyTorch module (intended semantics)."""
    B, T = index.shape
    H = HIDDEN

    j = jnp.arange(T)
    idx2 = index[:, jnp.maximum(j, T - 1 - j)]               # aliased in-place loop
    x = jnp.take(params["embedding"], idx2, axis=0)          # (B, T, 100)

    w_ih_t = jnp.transpose(params["w_ih"])
    w_hh_t = jnp.transpose(params["w_hh"])
    b = params["b_ih"] + params["b_hh"]

    def cell(carry, x_t):
        h, c = carry
        g = (jnp.dot(x_t, w_ih_t, precision=lax.Precision.HIGHEST)
             + jnp.dot(h, w_hh_t, precision=lax.Precision.HIGHEST) + b)
        i_g = _sigmoid(g[:, 0:H])
        f_g = _sigmoid(g[:, H:2 * H])
        g_g = jnp.tanh(g[:, 2 * H:3 * H])
        o_g = _sigmoid(g[:, 3 * H:4 * H])
        c = f_g * c + i_g * g_g
        h = o_g * jnp.tanh(c)
        return (h, c), h

    h0 = jnp.zeros((B, H), jnp.float32)
    (_, _), hs = lax.scan(cell, (h0, h0), jnp.transpose(x, (1, 0, 2)))
    out1 = jnp.transpose(hs, (1, 0, 2))                      # (B, T, H)
    feat = jnp.concatenate([out1, out1], axis=2)             # output2 == output1
    feat = jnp.mean(feat, axis=1)                            # global AvgPool1d over T
    img = feat[:, :, None, None]                             # (B, 2H, 1, 1)

    def branch(w, bias):
        z = lax.conv_general_dilated(
            img, w, window_strides=(1, 1), padding=((2, 2), (2, 2)),
            dimension_numbers=("NCHW", "OIHW", "NCHW"),
            precision=lax.Precision.HIGHEST)
        z = jnp.maximum(z + bias[None, :, None, None], 0.0)
        return jnp.max(z, axis=(2, 3))                       # global MaxPool2d

    v = jnp.concatenate([branch(params["conv1_w"], params["conv1_b"]),
                         branch(params["conv2_w"], params["conv2_b"]),
                         branch(params["conv3_w"], params["conv3_b"])], axis=1)
    return jnp.dot(v, jnp.transpose(params["out_w"]),
                   precision=lax.Precision.HIGHEST) + params["out_b"]


if __name__ == "__main__":
    key = jax.random.PRNGKey(0)
    vocab_size = 50
    n_class = 5
    B, T = 2, 8

    k_param, k_idx = jax.random.split(key)
    params = init_params(k_param, vocab_size, n_class)
    index = jax.random.randint(k_idx, (B, T), 0, vocab_size, dtype=jnp.int32)

    result = myqnn_forward(index, params)
    pred = jax.block_until_ready(result["pred"])

    ref = jax.block_until_ready(reference_forward(index, params))
    assert pred.shape == (B, n_class)
    err = float(jnp.max(jnp.abs(pred - ref)))
    assert jnp.allclose(pred, ref, atol=1e-4, rtol=1e-4), f"mismatch vs reference (max abs err {err})"

    print("KERNEL_OK")
</pallas_src>

<mosaic_0001>
module attributes {stable_mosaic.version = 11 : i64} {
  func.func @myqnn_kernel(%arg0: i32, %arg1: memref<8x8x512xf32, #tpu.memory_space<vmem>>, %arg2: memref<128x512xf32, #tpu.memory_space<vmem>>, %arg3: memref<256x16xf32, #tpu.memory_space<vmem>>, %arg4: memref<1x16xf32, #tpu.memory_space<vmem>>, %arg5: memref<4x256x16xf32, #tpu.memory_space<vmem>>, %arg6: memref<1x16xf32, #tpu.memory_space<vmem>>, %arg7: memref<9x256x16xf32, #tpu.memory_space<vmem>>, %arg8: memref<1x16xf32, #tpu.memory_space<vmem>>, %arg9: memref<48x5xf32, #tpu.memory_space<vmem>>, %arg10: memref<1x5xf32, #tpu.memory_space<vmem>>, %arg11: memref<8x5xf32, #tpu.memory_space<vmem>>) attributes {dimension_semantics = [#tpu.dimension_semantics<parallel>], iteration_bounds = array<i64: 1>, scalar_prefetch = 0 : i64, scratch_operands = 0 : i64, tpu.core_type = #tpu.core_type<tc>, window_params = [{transform_indices = @transform_0, window_bounds = array<i64: 8, 8, 512>}, {pipeline_mode = #tpu.pipeline_mode<synchronous>, transform_indices = @transform_1, window_bounds = array<i64: 128, 512>}, {pipeline_mode = #tpu.pipeline_mode<synchronous>, transform_indices = @transform_2, window_bounds = array<i64: 256, 16>}, {pipeline_mode = #tpu.pipeline_mode<synchronous>, transform_indices = @transform_3, window_bounds = array<i64: 1, 16>}, {pipeline_mode = #tpu.pipeline_mode<synchronous>, transform_indices = @transform_4, window_bounds = array<i64: 4, 256, 16>}, {pipeline_mode = #tpu.pipeline_mode<synchronous>, transform_indices = @transform_5, window_bounds = array<i64: 1, 16>}, {pipeline_mode = #tpu.pipeline_mode<synchronous>, transform_indices = @transform_6, window_bounds = array<i64: 9, 256, 16>}, {pipeline_mode = #tpu.pipeline_mode<synchronous>, transform_indices = @transform_7, window_bounds = array<i64: 1, 16>}, {pipeline_mode = #tpu.pipeline_mode<synchronous>, transform_indices = @transform_8, window_bounds = array<i64: 48, 5>}, {pipeline_mode = #tpu.pipeline_mode<synchronous>, transform_indices = @transform_9, window_bounds = array<i64: 1, 5>}, {transform_indices = @transform_10, window_bounds = array<i64: 8, 5>}]} {
    %c0 = arith.constant 0 : index
    %c0_0 = arith.constant 0 : index
    %0 = vector.load %arg2[%c0, %c0_0] : memref<128x512xf32, #tpu.memory_space<vmem>>, vector<128x512xf32>
    %cst = arith.constant 0.000000e+00 : f32
    %1 = vector.broadcast %cst : f32 to vector<8x128xf32>
    %c0_i32 = arith.constant 0 : i32
    %2 = arith.index_cast %c0_i32 : i32 to index
    %c0_1 = arith.constant 0 : index
    %c0_2 = arith.constant 0 : index
    %3 = vector.load %arg1[%2, %c0_1, %c0_2] : memref<8x8x512xf32, #tpu.memory_space<vmem>>, vector<1x8x512xf32>
    %4 = vector.shape_cast %3 : vector<1x8x512xf32> to vector<8x512xf32>
    %cst_3 = arith.constant dense<0.000000e+00> : vector<8x512xf32>
    %5 = tpu.matmul %1, %0, %cst_3 {dimension_numbers = #tpu.dot_dimension_numbers<[1], [0], [0], [1], [0, 0, 1, 1], [], []>} : vector<8x128xf32>, vector<128x512xf32>, vector<8x512xf32> -> vector<8x512xf32>
    %6 = arith.addf %4, %5 : vector<8x512xf32>
    %7 = vector.extract_strided_slice %6 {offsets = [0, 0], sizes = [8, 128], strides = [1, 1]} : vector<8x512xf32> to vector<8x128xf32>
    %cst_4 = arith.constant 0.000000e+00 : f32
    %8 = vector.broadcast %cst_4 : f32 to vector<8x128xf32>
    %9 = arith.subf %8, %7 : vector<8x128xf32>
    %10 = math.exp %9 : vector<8x128xf32>
    %cst_5 = arith.constant 1.000000e+00 : f32
    %11 = vector.broadcast %cst_5 : f32 to vector<8x128xf32>
    %12 = arith.addf %11, %10 : vector<8x128xf32>
    %cst_6 = arith.constant 1.000000e+00 : f32
    %13 = vector.broadcast %cst_6 : f32 to vector<8x128xf32>
    %14 = arith.divf %13, %12 : vector<8x128xf32>
    %15 = vector.extract_strided_slice %6 {offsets = [0, 128], sizes = [8, 128], strides = [1, 1]} : vector<8x512xf32> to vector<8x128xf32>
    %cst_7 = arith.constant 0.000000e+00 : f32
    %16 = vector.broadcast %cst_7 : f32 to vector<8x128xf32>
    %17 = arith.subf %16, %15 : vector<8x128xf32>
    %18 = math.exp %17 : vector<8x128xf32>
    %cst_8 = arith.constant 1.000000e+00 : f32
    %19 = vector.broadcast %cst_8 : f32 to vector<8x128xf32>
    %20 = arith.addf %19, %18 : vector<8x128xf32>
    %cst_9 = arith.constant 1.000000e+00 : f32
    %21 = vector.broadcast %cst_9 : f32 to vector<8x128xf32>
    %22 = arith.divf %21, %20 : vector<8x128xf32>
    %23 = vector.extract_strided_slice %6 {offsets = [0, 256], sizes = [8, 128], strides = [1, 1]} : vector<8x512xf32> to vector<8x128xf32>
    %24 = math.tanh %23 : vector<8x128xf32>
    %25 = vector.extract_strided_slice %6 {offsets = [0, 384], sizes = [8, 128], strides = [1, 1]} : vector<8x512xf32> to vector<8x128xf32>
    %cst_10 = arith.constant 0.000000e+00 : f32
    %26 = vector.broadcast %cst_10 : f32 to vector<8x128xf32>
    %27 = arith.subf %26, %25 : vector<8x128xf32>
    %28 = math.exp %27 : vector<8x128xf32>
    %cst_11 = arith.constant 1.000000e+00 : f32
    %29 = vector.broadcast %cst_11 : f32 to vector<8x128xf32>
    %30 = arith.addf %29, %28 : vector<8x128xf32>
    %cst_12 = arith.constant 1.000000e+00 : f32
    %31 = vector.broadcast %cst_12 : f32 to vector<8x128xf32>
    %32 = arith.divf %31, %30 : vector<8x128xf32>
    %33 = arith.mulf %22, %1 : vector<8x128xf32>
    %34 = arith.mulf %14, %24 : vector<8x128xf32>
    %35 = arith.addf %33, %34 : vector<8x128xf32>
    %36 = math.tanh %35 : vector<8x128xf32>
    %37 = arith.mulf %32, %36 : vector<8x128xf32>
    %38 = arith.addf %1, %37 : vector<8x128xf32>
    %c1_i32 = arith.constant 1 : i32
    %39 = arith.index_cast %c1_i32 : i32 to index
    %c0_13 = arith.constant 0 : index
    %c0_14 = arith.constant 0 : index
    %40 = vector.load %arg1[%39, %c0_13, %c0_14] : memref<8x8x512xf32, #tpu.memory_space<vmem>>, vector<1x8x512xf32>
    %41 = vector.shape_cast %40 : vector<1x8x512xf32> to vector<8x512xf32>
    %cst_15 = arith.constant dense<0.000000e+00> : vector<8x512xf32>
    %42 = tpu.matmul %37, %0, %cst_15 {dimension_numbers = #tpu.dot_dimension_numbers<[1], [0], [0], [1], [0, 0, 1, 1], [], []>} : vector<8x128xf32>, vector<128x512xf32>, vector<8x512xf32> -> vector<8x512xf32>
    %43 = arith.addf %41, %42 : vector<8x512xf32>
    %44 = vector.extract_strided_slice %43 {offsets = [0, 0], sizes = [8, 128], strides = [1, 1]} : vector<8x512xf32> to vector<8x128xf32>
    %cst_16 = arith.constant 0.000000e+00 : f32
    %45 = vector.broadcast %cst_16 : f32 to vector<8x128xf32>
    %46 = arith.subf %45, %44 : vector<8x128xf32>
    %47 = math.exp %46 : vector<8x128xf32>
    %cst_17 = arith.constant 1.000000e+00 : f32
    %48 = vector.broadcast %cst_17 : f32 to vector<8x128xf32>
    %49 = arith.addf %48, %47 : vector<8x128xf32>
    %cst_18 = arith.constant 1.000000e+00 : f32
    %50 = vector.broadcast %cst_18 : f32 to vector<8x128xf32>
    %51 = arith.divf %50, %49 : vector<8x128xf32>
    %52 = vector.extract_strided_slice %43 {offsets = [0, 128], sizes = [8, 128], strides = [1, 1]} : vector<8x512xf32> to vector<8x128xf32>
    %cst_19 = arith.constant 0.000000e+00 : f32
    %53 = vector.broadcast %cst_19 : f32 to vector<8x128xf32>
    %54 = arith.subf %53, %52 : vector<8x128xf32>
    %55 = math.exp %54 : vector<8x128xf32>
    %cst_20 = arith.constant 1.000000e+00 : f32
    %56 = vector.broadcast %cst_20 : f32 to vector<8x128xf32>
    %57 = arith.addf %56, %55 : vector<8x128xf32>
    %cst_21 = arith.constant 1.000000e+00 : f32
    %58 = vector.broadcast %cst_21 : f32 to vector<8x128xf32>
    %59 = arith.divf %58, %57 : vector<8x128xf32>
    %60 = vector.extract_strided_slice %43 {offsets = [0, 256], sizes = [8, 128], strides = [1, 1]} : vector<8x512xf32> to vector<8x128xf32>
    %61 = math.tanh %60 : vector<8x128xf32>
    %62 = vector.extract_strided_slice %43 {offsets = [0, 384], sizes = [8, 128], strides = [1, 1]} : vector<8x512xf32> to vector<8x128xf32>
    %cst_22 = arith.constant 0.000000e+00 : f32
    %63 = vector.broadcast %cst_22 : f32 to vector<8x128xf32>
    %64 = arith.subf %63, %62 : vector<8x128xf32>
    %65 = math.exp %64 : vector<8x128xf32>
    %cst_23 = arith.constant 1.000000e+00 : f32
    %66 = vector.broadcast %cst_23 : f32 to vector<8x128xf32>
    %67 = arith.addf %66, %65 : vector<8x128xf32>
    %cst_24 = arith.constant 1.000000e+00 : f32
    %68 = vector.broadcast %cst_24 : f32 to vector<8x128xf32>
    %69 = arith.divf %68, %67 : vector<8x128xf32>
    %70 = arith.mulf %59, %35 : vector<8x128xf32>
    %71 = arith.mulf %51, %61 : vector<8x128xf32>
    %72 = arith.addf %70, %71 : vector<8x128xf32>
    %73 = math.tanh %72 : vector<8x128xf32>
    %74 = arith.mulf %69, %73 : vector<8x128xf32>
    %75 = arith.addf %38, %74 : vector<8x128xf32>
    %c2_i32 = arith.constant 2 : i32
    %76 = arith.index_cast %c2_i32 : i32 to index
    %c0_25 = arith.constant 0 : index
    %c0_26 = arith.constant 0 : index
    %77 = vector.load %arg1[%76, %c0_25, %c0_26] : memref<8x8x512xf32, #tpu.memory_space<vmem>>, vector<1x8x512xf32>
    %78 = vector.shape_cast %77 : vector<1x8x512xf32> to vector<8x512xf32>
    %cst_27 = arith.constant dense<0.000000e+00> : vector<8x512xf32>
    %79 = tpu.matmul %74, %0, %cst_27 {dimension_numbers = #tpu.dot_dimension_numbers<[1], [0], [0], [1], [0, 0, 1, 1], [], []>} : vector<8x128xf32>, vector<128x512xf32>, vector<8x512xf32> -> vector<8x512xf32>
    %80 = arith.addf %78, %79 : vector<8x512xf32>
    %81 = vector.extract_strided_slice %80 {offsets = [0, 0], sizes = [8, 128], strides = [1, 1]} : vector<8x512xf32> to vector<8x128xf32>
    %cst_28 = arith.constant 0.000000e+00 : f32
    %82 = vector.broadcast %cst_28 : f32 to vector<8x128xf32>
    %83 = arith.subf %82, %81 : vector<8x128xf32>
    %84 = math.exp %83 : vector<8x128xf32>
    %cst_29 = arith.constant 1.000000e+00 : f32
    %85 = vector.broadcast %cst_29 : f32 to vector<8x128xf32>
    %86 = arith.addf %85, %84 : vector<8x128xf32>
    %cst_30 = arith.constant 1.000000e+00 : f32
    %87 = vector.broadcast %cst_30 : f32 to vector<8x128xf32>
    %88 = arith.divf %87, %86 : vector<8x128xf32>
    %89 = vector.extract_strided_slice %80 {offsets = [0, 128], sizes = [8, 128], strides = [1, 1]} : vector<8x512xf32> to vector<8x128xf32>
    %cst_31 = arith.constant 0.000000e+00 : f32
    %90 = vector.broadcast %cst_31 : f32 to vector<8x128xf32>
    %91 = arith.subf %90, %89 : vector<8x128xf32>
    %92 = math.exp %91 : vector<8x128xf32>
    %cst_32 = arith.constant 1.000000e+00 : f32
    %93 = vector.broadcast %cst_32 : f32 to vector<8x128xf32>
    %94 = arith.addf %93, %92 : vector<8x128xf32>
    %cst_33 = arith.constant 1.000000e+00 : f32
    %95 = vector.broadcast %cst_33 : f32 to vector<8x128xf32>
    %96 = arith.divf %95, %94 : vector<8x128xf32>
    %97 = vector.extract_strided_slice %80 {offsets = [0, 256], sizes = [8, 128], strides = [1, 1]} : vector<8x512xf32> to vector<8x128xf32>
    %98 = math.tanh %97 : vector<8x128xf32>
    %99 = vector.extract_strided_slice %80 {offsets = [0, 384], sizes = [8, 128], strides = [1, 1]} : vector<8x512xf32> to vector<8x128xf32>
    %cst_34 = arith.constant 0.000000e+00 : f32
    %100 = vector.broadcast %cst_34 : f32 to vector<8x128xf32>
    %101 = arith.subf %100, %99 : vector<8x128xf32>
    %102 = math.exp %101 : vector<8x128xf32>
    %cst_35 = arith.constant 1.000000e+00 : f32
    %103 = vector.broadcast %cst_35 : f32 to vector<8x128xf32>
    %104 = arith.addf %103, %102 : vector<8x128xf32>
    %cst_36 = arith.constant 1.000000e+00 : f32
    %105 = vector.broadcast %cst_36 : f32 to vector<8x128xf32>
    %106 = arith.divf %105, %104 : vector<8x128xf32>
    %107 = arith.mulf %96, %72 : vector<8x128xf32>
    %108 = arith.mulf %88, %98 : vector<8x128xf32>
    %109 = arith.addf %107, %108 : vector<8x128xf32>
    %110 = math.tanh %109 : vector<8x128xf32>
    %111 = arith.mulf %106, %110 : vector<8x128xf32>
    %112 = arith.addf %75, %111 : vector<8x128xf32>
    %c3_i32 = arith.constant 3 : i32
    %113 = arith.index_cast %c3_i32 : i32 to index
    %c0_37 = arith.constant 0 : index
    %c0_38 = arith.constant 0 : index
    %114 = vector.load %arg1[%113, %c0_37, %c0_38] : memref<8x8x512xf32, #tpu.memory_space<vmem>>, vector<1x8x512xf32>
    %115 = vector.shape_cast %114 : vector<1x8x512xf32> to vector<8x512xf32>
    %cst_39 = arith.constant dense<0.000000e+00> : vector<8x512xf32>
    %116 = tpu.matmul %111, %0, %cst_39 {dimension_numbers = #tpu.dot_dimension_numbers<[1], [0], [0], [1], [0, 0, 1, 1], [], []>} : vector<8x128xf32>, vector<128x512xf32>, vector<8x512xf32> -> vector<8x512xf32>
    %117 = arith.addf %115, %116 : vector<8x512xf32>
    %118 = vector.extract_strided_slice %117 {offsets = [0, 0], sizes = [8, 128], strides = [1, 1]} : vector<8x512xf32> to vector<8x128xf32>
    %cst_40 = arith.constant 0.000000e+00 : f32
    %119 = vector.broadcast %cst_40 : f32 to vector<8x128xf32>
    %120 = arith.subf %119, %118 : vector<8x128xf32>
    %121 = math.exp %120 : vector<8x128xf32>
    %cst_41 = arith.constant 1.000000e+00 : f32
    %122 = vector.broadcast %cst_41 : f32 to vector<8x128xf32>
    %123 = arith.addf %122, %121 : vector<8x128xf32>
    %cst_42 = arith.constant 1.000000e+00 : f32
    %124 = vector.broadcast %cst_42 : f32 to vector<8x128xf32>
    %125 = arith.divf %124, %123 : vector<8x128xf32>
    %126 = vector.extract_strided_slice %117 {offsets = [0, 128], sizes = [8, 128], strides = [1, 1]} : vector<8x512xf32> to vector<8x128xf32>
    %cst_43 = arith.constant 0.000000e+00 : f32
    %127 = vector.broadcast %cst_43 : f32 to vector<8x128xf32>
    %128 = arith.subf %127, %126 : vector<8x128xf32>
    %129 = math.exp %128 : vector<8x128xf32>
    %cst_44 = arith.constant 1.000000e+00 : f32
    %130 = vector.broadcast %cst_44 : f32 to vector<8x128xf32>
    %131 = arith.addf %130, %129 : vector<8x128xf32>
    %cst_45 = arith.constant 1.000000e+00 : f32
    %132 = vector.broadcast %cst_45 : f32 to vector<8x128xf32>
    %133 = arith.divf %132, %131 : vector<8x128xf32>
    %134 = vector.extract_strided_slice %117 {offsets = [0, 256], sizes = [8, 128], strides = [1, 1]} : vector<8x512xf32> to vector<8x128xf32>
    %135 = math.tanh %134 : vector<8x128xf32>
    %136 = vector.extract_strided_slice %117 {offsets = [0, 384], sizes = [8, 128], strides = [1, 1]} : vector<8x512xf32> to vector<8x128xf32>
    %cst_46 = arith.constant 0.000000e+00 : f32
    %137 = vector.broadcast %cst_46 : f32 to vector<8x128xf32>
    %138 = arith.subf %137, %136 : vector<8x128xf32>
    %139 = math.exp %138 : vector<8x128xf32>
    %cst_47 = arith.constant 1.000000e+00 : f32
    %140 = vector.broadcast %cst_47 : f32 to vector<8x128xf32>
    %141 = arith.addf %140, %139 : vector<8x128xf32>
    %cst_48 = arith.constant 1.000000e+00 : f32
    %142 = vector.broadcast %cst_48 : f32 to vector<8x128xf32>
    %143 = arith.divf %142, %141 : vector<8x128xf32>
    %144 = arith.mulf %133, %109 : vector<8x128xf32>
    %145 = arith.mulf %125, %135 : vector<8x128xf32>
    %146 = arith.addf %144, %145 : vector<8x128xf32>
    %147 = math.tanh %146 : vector<8x128xf32>
    %148 = arith.mulf %143, %147 : vector<8x128xf32>
    %149 = arith.addf %112, %148 : vector<8x128xf32>
    %c4_i32 = arith.constant 4 : i32
    %150 = arith.index_cast %c4_i32 : i32 to index
    %c0_49 = arith.constant 0 : index
    %c0_50 = arith.constant 0 : index
    %151 = vector.load %arg1[%150, %c0_49, %c0_50] : memref<8x8x512xf32, #tpu.memory_space<vmem>>, vector<1x8x512xf32>
    %152 = vector.shape_cast %151 : vector<1x8x512xf32> to vector<8x512xf32>
    %cst_51 = arith.constant dense<0.000000e+00> : vector<8x512xf32>
    %153 = tpu.matmul %148, %0, %cst_51 {dimension_numbers = #tpu.dot_dimension_numbers<[1], [0], [0], [1], [0, 0, 1, 1], [], []>} : vector<8x128xf32>, vector<128x512xf32>, vector<8x512xf32> -> vector<8x512xf32>
    %154 = arith.addf %152, %153 : vector<8x512xf32>
    %155 = vector.extract_strided_slice %154 {offsets = [0, 0], sizes = [8, 128], strides = [1, 1]} : vector<8x512xf32> to vector<8x128xf32>
    %cst_52 = arith.constant 0.000000e+00 : f32
    %156 = vector.broadcast %cst_52 : f32 to vector<8x128xf32>
    %157 = arith.subf %156, %155 : vector<8x128xf32>
    %158 = math.exp %157 : vector<8x128xf32>
    %cst_53 = arith.constant 1.000000e+00 : f32
    %159 = vector.broadcast %cst_53 : f32 to vector<8x128xf32>
    %160 = arith.addf %159, %158 : vector<8x128xf32>
    %cst_54 = arith.constant 1.000000e+00 : f32
    %161 = vector.broadcast %cst_54 : f32 to vector<8x128xf32>
    %162 = arith.divf %161, %160 : vector<8x128xf32>
    %163 = vector.extract_strided_slice %154 {offsets = [0, 128], sizes = [8, 128], strides = [1, 1]} : vector<8x512xf32> to vector<8x128xf32>
    %cst_55 = arith.constant 0.000000e+00 : f32
    %164 = vector.broadcast %cst_55 : f32 to vector<8x128xf32>
    %165 = arith.subf %164, %163 : vector<8x128xf32>
    %166 = math.exp %165 : vector<8x128xf32>
    %cst_56 = arith.constant 1.000000e+00 : f32
    %167 = vector.broadcast %cst_56 : f32 to vector<8x128xf32>
    %168 = arith.addf %167, %166 : vector<8x128xf32>
    %cst_57 = arith.constant 1.000000e+00 : f32
    %169 = vector.broadcast %cst_57 : f32 to vector<8x128xf32>
    %170 = arith.divf %169, %168 : vector<8x128xf32>
    %171 = vector.extract_strided_slice %154 {offsets = [0, 256], sizes = [8, 128], strides = [1, 1]} : vector<8x512xf32> to vector<8x128xf32>
    %172 = math.tanh %171 : vector<8x128xf32>
    %173 = vector.extract_strided_slice %154 {offsets = [0, 384], sizes = [8, 128], strides = [1, 1]} : vector<8x512xf32> to vector<8x128xf32>
    %cst_58 = arith.constant 0.000000e+00 : f32
    %174 = vector.broadcast %cst_58 : f32 to vector<8x128xf32>
    %175 = arith.subf %174, %173 : vector<8x128xf32>
    %176 = math.exp %175 : vector<8x128xf32>
    %cst_59 = arith.constant 1.000000e+00 : f32
    %177 = vector.broadcast %cst_59 : f32 to vector<8x128xf32>
    %178 = arith.addf %177, %176 : vector<8x128xf32>
    %cst_60 = arith.constant 1.000000e+00 : f32
    %179 = vector.broadcast %cst_60 : f32 to vector<8x128xf32>
    %180 = arith.divf %179, %178 : vector<8x128xf32>
    %181 = arith.mulf %170, %146 : vector<8x128xf32>
    %182 = arith.mulf %162, %172 : vector<8x128xf32>
    %183 = arith.addf %181, %182 : vector<8x128xf32>
    %184 = math.tanh %183 : vector<8x128xf32>
    %185 = arith.mulf %180, %184 : vector<8x128xf32>
    %186 = arith.addf %149, %185 : vector<8x128xf32>
    %c5_i32 = arith.constant 5 : i32
    %187 = arith.index_cast %c5_i32 : i32 to index
    %c0_61 = arith.constant 0 : index
    %c0_62 = arith.constant 0 : index
    %188 = vector.load %arg1[%187, %c0_61, %c0_62] : memref<8x8x512xf32, #tpu.memory_space<vmem>>, vector<1x8x512xf32>
    %189 = vector.shape_cast %188 : vector<1x8x512xf32> to vector<8x512xf32>
    %cst_63 = arith.constant dense<0.000000e+00> : vector<8x512xf32>
    %190 = tpu.matmul %185, %0, %cst_63 {dimension_numbers = #tpu.dot_dimension_numbers<[1], [0], [0], [1], [0, 0, 1, 1], [], []>} : vector<8x128xf32>, vector<128x512xf32>, vector<8x512xf32> -> vector<8x512xf32>
    %191 = arith.addf %189, %190 : vector<8x512xf32>
    %192 = vector.extract_strided_slice %191 {offsets = [0, 0], sizes = [8, 128], strides = [1, 1]} : vector<8x512xf32> to vector<8x128xf32>
    %cst_64 = arith.constant 0.000000e+00 : f32
    %193 = vector.broadcast %cst_64 : f32 to vector<8x128xf32>
    %194 = arith.subf %193, %192 : vector<8x128xf32>
    %195 = math.exp %194 : vector<8x128xf32>
    %cst_65 = arith.constant 1.000000e+00 : f32
    %196 = vector.broadcast %cst_65 : f32 to vector<8x128xf32>
    %197 = arith.addf %196, %195 : vector<8x128xf32>
    %cst_66 = arith.constant 1.000000e+00 : f32
    %198 = vector.broadcast %cst_66 : f32 to vector<8x128xf32>
    %199 = arith.divf %198, %197 : vector<8x128xf32>
    %200 = vector.extract_strided_slice %191 {offsets = [0, 128], sizes = [8, 128], strides = [1, 1]} : vector<8x512xf32> to vector<8x128xf32>
    %cst_67 = arith.constant 0.000000e+00 : f32
    %201 = vector.broadcast %cst_67 : f32 to vector<8x128xf32>
    %202 = arith.subf %201, %200 : vector<8x128xf32>
    %203 = math.exp %202 : vector<8x128xf32>
    %cst_68 = arith.constant 1.000000e+00 : f32
    %204 = vector.broadcast %cst_68 : f32 to vector<8x128xf32>
    %205 = arith.addf %204, %203 : vector<8x128xf32>
    %cst_69 = arith.constant 1.000000e+00 : f32
    %206 = vector.broadcast %cst_69 : f32 to vector<8x128xf32>
    %207 = arith.divf %206, %205 : vector<8x128xf32>
    %208 = vector.extract_strided_slice %191 {offsets = [0, 256], sizes = [8, 128], strides = [1, 1]} : vector<8x512xf32> to vector<8x128xf32>
    %209 = math.tanh %208 : vector<8x128xf32>
    %210 = vector.extract_strided_slice %191 {offsets = [0, 384], sizes = [8, 128], strides = [1, 1]} : vector<8x512xf32> to vector<8x128xf32>
    %cst_70 = arith.constant 0.000000e+00 : f32
    %211 = vector.broadcast %cst_70 : f32 to vector<8x128xf32>
    %212 = arith.subf %211, %210 : vector<8x128xf32>
    %213 = math.exp %212 : vector<8x128xf32>
    %cst_71 = arith.constant 1.000000e+00 : f32
    %214 = vector.broadcast %cst_71 : f32 to vector<8x128xf32>
    %215 = arith.addf %214, %213 : vector<8x128xf32>
    %cst_72 = arith.constant 1.000000e+00 : f32
    %216 = vector.broadcast %cst_72 : f32 to vector<8x128xf32>
    %217 = arith.divf %216, %215 : vector<8x128xf32>
    %218 = arith.mulf %207, %183 : vector<8x128xf32>
    %219 = arith.mulf %199, %209 : vector<8x128xf32>
    %220 = arith.addf %218, %219 : vector<8x128xf32>
    %221 = math.tanh %220 : vector<8x128xf32>
    %222 = arith.mulf %217, %221 : vector<8x128xf32>
    %223 = arith.addf %186, %222 : vector<8x128xf32>
    %c6_i32 = arith.constant 6 : i32
    %224 = arith.index_cast %c6_i32 : i32 to index
    %c0_73 = arith.constant 0 : index
    %c0_74 = arith.constant 0 : index
    %225 = vector.load %arg1[%224, %c0_73, %c0_74] : memref<8x8x512xf32, #tpu.memory_space<vmem>>, vector<1x8x512xf32>
    %226 = vector.shape_cast %225 : vector<1x8x512xf32> to vector<8x512xf32>
    %cst_75 = arith.constant dense<0.000000e+00> : vector<8x512xf32>
    %227 = tpu.matmul %222, %0, %cst_75 {dimension_numbers = #tpu.dot_dimension_numbers<[1], [0], [0], [1], [0, 0, 1, 1], [], []>} : vector<8x128xf32>, vector<128x512xf32>, vector<8x512xf32> -> vector<8x512xf32>
    %228 = arith.addf %226, %227 : vector<8x512xf32>
    %229 = vector.extract_strided_slice %228 {offsets = [0, 0], sizes = [8, 128], strides = [1, 1]} : vector<8x512xf32> to vector<8x128xf32>
    %cst_76 = arith.constant 0.000000e+00 : f32
    %230 = vector.broadcast %cst_76 : f32 to vector<8x128xf32>
    %231 = arith.subf %230, %229 : vector<8x128xf32>
    %232 = math.exp %231 : vector<8x128xf32>
    %cst_77 = arith.constant 1.000000e+00 : f32
    %233 = vector.broadcast %cst_77 : f32 to vector<8x128xf32>
    %234 = arith.addf %233, %232 : vector<8x128xf32>
    %cst_78 = arith.constant 1.000000e+00 : f32
    %235 = vector.broadcast %cst_78 : f32 to vector<8x128xf32>
    %236 = arith.divf %235, %234 : vector<8x128xf32>
    %237 = vector.extract_strided_slice %228 {offsets = [0, 128], sizes = [8, 128], strides = [1, 1]} : vector<8x512xf32> to vector<8x128xf32>
    %cst_79 = arith.constant 0.000000e+00 : f32
    %238 = vector.broadcast %cst_79 : f32 to vector<8x128xf32>
    %239 = arith.subf %238, %237 : vector<8x128xf32>
    %240 = math.exp %239 : vector<8x128xf32>
    %cst_80 = arith.constant 1.000000e+00 : f32
    %241 = vector.broadcast %cst_80 : f32 to vector<8x128xf32>
    %242 = arith.addf %241, %240 : vector<8x128xf32>
    %cst_81 = arith.constant 1.000000e+00 : f32
    %243 = vector.broadcast %cst_81 : f32 to vector<8x128xf32>
    %244 = arith.divf %243, %242 : vector<8x128xf32>
    %245 = vector.extract_strided_slice %228 {offsets = [0, 256], sizes = [8, 128], strides = [1, 1]} : vector<8x512xf32> to vector<8x128xf32>
    %246 = math.tanh %245 : vector<8x128xf32>
    %247 = vector.extract_strided_slice %228 {offsets = [0, 384], sizes = [8, 128], strides = [1, 1]} : vector<8x512xf32> to vector<8x128xf32>
    %cst_82 = arith.constant 0.000000e+00 : f32
    %248 = vector.broadcast %cst_82 : f32 to vector<8x128xf32>
    %249 = arith.subf %248, %247 : vector<8x128xf32>
    %250 = math.exp %249 : vector<8x128xf32>
    %cst_83 = arith.constant 1.000000e+00 : f32
    %251 = vector.broadcast %cst_83 : f32 to vector<8x128xf32>
    %252 = arith.addf %251, %250 : vector<8x128xf32>
    %cst_84 = arith.constant 1.000000e+00 : f32
    %253 = vector.broadcast %cst_84 : f32 to vector<8x128xf32>
    %254 = arith.divf %253, %252 : vector<8x128xf32>
    %255 = arith.mulf %244, %220 : vector<8x128xf32>
    %256 = arith.mulf %236, %246 : vector<8x128xf32>
    %257 = arith.addf %255, %256 : vector<8x128xf32>
    %258 = math.tanh %257 : vector<8x128xf32>
    %259 = arith.mulf %254, %258 : vector<8x128xf32>
    %260 = arith.addf %223, %259 : vector<8x128xf32>
    %c7_i32 = arith.constant 7 : i32
    %261 = arith.index_cast %c7_i32 : i32 to index
    %c0_85 = arith.constant 0 : index
    %c0_86 = arith.constant 0 : index
    %262 = vector.load %arg1[%261, %c0_85, %c0_86] : memref<8x8x512xf32, #tpu.memory_space<vmem>>, vector<1x8x512xf32>
    %263 = vector.shape_cast %262 : vector<1x8x512xf32> to vector<8x512xf32>
    %cst_87 = arith.constant dense<0.000000e+00> : vector<8x512xf32>
    %264 = tpu.matmul %259, %0, %cst_87 {dimension_numbers = #tpu.dot_dimension_numbers<[1], [0], [0], [1], [0, 0, 1, 1], [], []>} : vector<8x128xf32>, vector<128x512xf32>, vector<8x512xf32> -> vector<8x512xf32>
    %265 = arith.addf %263, %264 : vector<8x512xf32>
    %266 = vector.extract_strided_slice %265 {offsets = [0, 0], sizes = [8, 128], strides = [1, 1]} : vector<8x512xf32> to vector<8x128xf32>
    %cst_88 = arith.constant 0.000000e+00 : f32
    %267 = vector.broadcast %cst_88 : f32 to vector<8x128xf32>
    %268 = arith.subf %267, %266 : vector<8x128xf32>
    %269 = math.exp %268 : vector<8x128xf32>
    %cst_89 = arith.constant 1.000000e+00 : f32
    %270 = vector.broadcast %cst_89 : f32 to vector<8x128xf32>
    %271 = arith.addf %270, %269 : vector<8x128xf32>
    %cst_90 = arith.constant 1.000000e+00 : f32
    %272 = vector.broadcast %cst_90 : f32 to vector<8x128xf32>
    %273 = arith.divf %272, %271 : vector<8x128xf32>
    %274 = vector.extract_strided_slice %265 {offsets = [0, 128], sizes = [8, 128], strides = [1, 1]} : vector<8x512xf32> to vector<8x128xf32>
    %cst_91 = arith.constant 0.000000e+00 : f32
    %275 = vector.broadcast %cst_91 : f32 to vector<8x128xf32>
    %276 = arith.subf %275, %274 : vector<8x128xf32>
    %277 = math.exp %276 : vector<8x128xf32>
    %cst_92 = arith.constant 1.000000e+00 : f32
    %278 = vector.broadcast %cst_92 : f32 to vector<8x128xf32>
    %279 = arith.addf %278, %277 : vector<8x128xf32>
    %cst_93 = arith.constant 1.000000e+00 : f32
    %280 = vector.broadcast %cst_93 : f32 to vector<8x128xf32>
    %281 = arith.divf %280, %279 : vector<8x128xf32>
    %282 = vector.extract_strided_slice %265 {offsets = [0, 256], sizes = [8, 128], strides = [1, 1]} : vector<8x512xf32> to vector<8x128xf32>
    %283 = math.tanh %282 : vector<8x128xf32>
    %284 = vector.extract_strided_slice %265 {offsets = [0, 384], sizes = [8, 128], strides = [1, 1]} : vector<8x512xf32> to vector<8x128xf32>
    %cst_94 = arith.constant 0.000000e+00 : f32
    %285 = vector.broadcast %cst_94 : f32 to vector<8x128xf32>
    %286 = arith.subf %285, %284 : vector<8x128xf32>
    %287 = math.exp %286 : vector<8x128xf32>
    %cst_95 = arith.constant 1.000000e+00 : f32
    %288 = vector.broadcast %cst_95 : f32 to vector<8x128xf32>
    %289 = arith.addf %288, %287 : vector<8x128xf32>
    %cst_96 = arith.constant 1.000000e+00 : f32
    %290 = vector.broadcast %cst_96 : f32 to vector<8x128xf32>
    %291 = arith.divf %290, %289 : vector<8x128xf32>
    %292 = arith.mulf %281, %257 : vector<8x128xf32>
    %293 = arith.mulf %273, %283 : vector<8x128xf32>
    %294 = arith.addf %292, %293 : vector<8x128xf32>
    %295 = math.tanh %294 : vector<8x128xf32>
    %296 = arith.mulf %291, %295 : vector<8x128xf32>
    %297 = arith.addf %260, %296 : vector<8x128xf32>
    %c8_i32 = arith.constant 8 : i32
    %cst_97 = arith.constant 1.250000e-01 : f32
    %298 = vector.broadcast %cst_97 : f32 to vector<8x128xf32>
    %299 = arith.mulf %297, %298 : vector<8x128xf32>
    %300 = tpu.concatenate %299, %299 in 1 : vector<8x128xf32>, vector<8x128xf32> -> vector<8x256xf32>
    %c0_98 = arith.constant 0 : index
    %c0_99 = arith.constant 0 : index
    %301 = vector.load %arg3[%c0_98, %c0_99] : memref<256x16xf32, #tpu.memory_space<vmem>>, vector<256x16xf32>
    %cst_100 = arith.constant dense<0.000000e+00> : vector<8x16xf32>
    %302 = tpu.matmul %300, %301, %cst_100 {dimension_numbers = #tpu.dot_dimension_numbers<[1], [0], [0], [1], [0, 0, 1, 1], [], []>} : vector<8x256xf32>, vector<256x16xf32>, vector<8x16xf32> -> vector<8x16xf32>
    %c0_101 = arith.constant 0 : index
    %c0_102 = arith.constant 0 : index
    %303 = vector.load %arg4[%c0_101, %c0_102] : memref<1x16xf32, #tpu.memory_space<vmem>>, vector<1x16xf32>
    %304 = vector.broadcast %303 : vector<1x16xf32> to vector<8x16xf32>
    %305 = arith.addf %302, %304 : vector<8x16xf32>
    %cst_103 = arith.constant 0.000000e+00 : f32
    %306 = vector.broadcast %cst_103 : f32 to vector<8x16xf32>
    %307 = arith.maximumf %305, %306 : vector<8x16xf32>
    %c0_104 = arith.constant 0 : index
    %c0_105 = arith.constant 0 : index
    %308 = vector.load %arg6[%c0_104, %c0_105] : memref<1x16xf32, #tpu.memory_space<vmem>>, vector<1x16xf32>
    %c0_106 = arith.constant 0 : index
    %c0_107 = arith.constant 0 : index
    %c0_108 = arith.constant 0 : index
    %309 = vector.load %arg5[%c0_106, %c0_107, %c0_108] : memref<4x256x16xf32, #tpu.memory_space<vmem>>, vector<1x256x16xf32>
    %310 = vector.shape_cast %309 : vector<1x256x16xf32> to vector<256x16xf32>
    %cst_109 = arith.constant dense<0.000000e+00> : vector<8x16xf32>
    %311 = tpu.matmul %300, %310, %cst_109 {dimension_numbers = #tpu.dot_dimension_numbers<[1], [0], [0], [1], [0, 0, 1, 1], [], []>} : vector<8x256xf32>, vector<256x16xf32>, vector<8x16xf32> -> vector<8x16xf32>
    %312 = vector.broadcast %308 : vector<1x16xf32> to vector<8x16xf32>
    %313 = arith.addf %311, %312 : vector<8x16xf32>
    %cst_110 = arith.constant 0.000000e+00 : f32
    %314 = vector.broadcast %cst_110 : f32 to vector<8x16xf32>
    %315 = arith.maximumf %313, %314 : vector<8x16xf32>
    %c1 = arith.constant 1 : index
    %c0_111 = arith.constant 0 : index
    %c0_112 = arith.constant 0 : index
    %316 = vector.load %arg5[%c1, %c0_111, %c0_112] : memref<4x256x16xf32, #tpu.memory_space<vmem>>, vector<1x256x16xf32>
    %317 = vector.shape_cast %316 : vector<1x256x16xf32> to vector<256x16xf32>
    %cst_113 = arith.constant dense<0.000000e+00> : vector<8x16xf32>
    %318 = tpu.matmul %300, %317, %cst_113 {dimension_numbers = #tpu.dot_dimension_numbers<[1], [0], [0], [1], [0, 0, 1, 1], [], []>} : vector<8x256xf32>, vector<256x16xf32>, vector<8x16xf32> -> vector<8x16xf32>
    %319 = vector.broadcast %308 : vector<1x16xf32> to vector<8x16xf32>
    %320 = arith.addf %318, %319 : vector<8x16xf32>
    %cst_114 = arith.constant 0.000000e+00 : f32
    %321 = vector.broadcast %cst_114 : f32 to vector<8x16xf32>
    %322 = arith.maximumf %320, %321 : vector<8x16xf32>
    %323 = arith.maximumf %315, %322 : vector<8x16xf32>
    %c2 = arith.constant 2 : index
    %c0_115 = arith.constant 0 : index
    %c0_116 = arith.constant 0 : index
    %324 = vector.load %arg5[%c2, %c0_115, %c0_116] : memref<4x256x16xf32, #tpu.memory_space<vmem>>, vector<1x256x16xf32>
    %325 = vector.shape_cast %324 : vector<1x256x16xf32> to vector<256x16xf32>
    %cst_117 = arith.constant dense<0.000000e+00> : vector<8x16xf32>
    %326 = tpu.matmul %300, %325, %cst_117 {dimension_numbers = #tpu.dot_dimension_numbers<[1], [0], [0], [1], [0, 0, 1, 1], [], []>} : vector<8x256xf32>, vector<256x16xf32>, vector<8x16xf32> -> vector<8x16xf32>
    %327 = vector.broadcast %308 : vector<1x16xf32> to vector<8x16xf32>
    %328 = arith.addf %326, %327 : vector<8x16xf32>
    %cst_118 = arith.constant 0.000000e+00 : f32
    %329 = vector.broadcast %cst_118 : f32 to vector<8x16xf32>
    %330 = arith.maximumf %328, %329 : vector<8x16xf32>
    %331 = arith.maximumf %323, %330 : vector<8x16xf32>
    %c3 = arith.constant 3 : index
    %c0_119 = arith.constant 0 : index
    %c0_120 = arith.constant 0 : index
    %332 = vector.load %arg5[%c3, %c0_119, %c0_120] : memref<4x256x16xf32, #tpu.memory_space<vmem>>, vector<1x256x16xf32>
    %333 = vector.shape_cast %332 : vector<1x256x16xf32> to vector<256x16xf32>
    %cst_121 = arith.constant dense<0.000000e+00> : vector<8x16xf32>
    %334 = tpu.matmul %300, %333, %cst_121 {dimension_numbers = #tpu.dot_dimension_numbers<[1], [0], [0], [1], [0, 0, 1, 1], [], []>} : vector<8x256xf32>, vector<256x16xf32>, vector<8x16xf32> -> vector<8x16xf32>
    %335 = vector.broadcast %308 : vector<1x16xf32> to vector<8x16xf32>
    %336 = arith.addf %334, %335 : vector<8x16xf32>
    %cst_122 = arith.constant 0.000000e+00 : f32
    %337 = vector.broadcast %cst_122 : f32 to vector<8x16xf32>
    %338 = arith.maximumf %336, %337 : vector<8x16xf32>
    %339 = arith.maximumf %331, %338 : vector<8x16xf32>
    %c0_123 = arith.constant 0 : index
    %c0_124 = arith.constant 0 : index
    %340 = vector.load %arg8[%c0_123, %c0_124] : memref<1x16xf32, #tpu.memory_space<vmem>>, vector<1x16xf32>
    %c0_125 = arith.constant 0 : index
    %c0_126 = arith.constant 0 : index
    %c0_127 = arith.constant 0 : index
    %341 = vector.load %arg7[%c0_125, %c0_126, %c0_127] : memref<9x256x16xf32, #tpu.memory_space<vmem>>, vector<1x256x16xf32>
    %342 = vector.shape_cast %341 : vector<1x256x16xf32> to vector<256x16xf32>
    %cst_128 = arith.constant dense<0.000000e+00> : vector<8x16xf32>
    %343 = tpu.matmul %300, %342, %cst_128 {dimension_numbers = #tpu.dot_dimension_numbers<[1], [0], [0], [1], [0, 0, 1, 1], [], []>} : vector<8x256xf32>, vector<256x16xf32>, vector<8x16xf32> -> vector<8x16xf32>
    %344 = vector.broadcast %340 : vector<1x16xf32> to vector<8x16xf32>
    %345 = arith.addf %343, %344 : vector<8x16xf32>
    %cst_129 = arith.constant 0.000000e+00 : f32
    %346 = vector.broadcast %cst_129 : f32 to vector<8x16xf32>
    %347 = arith.maximumf %345, %346 : vector<8x16xf32>
    %c1_130 = arith.constant 1 : index
    %c0_131 = arith.constant 0 : index
    %c0_132 = arith.constant 0 : index
    %348 = vector.load %arg7[%c1_130, %c0_131, %c0_132] : memref<9x256x16xf32, #tpu.memory_space<vmem>>, vector<1x256x16xf32>
    %349 = vector.shape_cast %348 : vector<1x256x16xf32> to vector<256x16xf32>
    %cst_133 = arith.constant dense<0.000000e+00> : vector<8x16xf32>
    %350 = tpu.matmul %300, %349, %cst_133 {dimension_numbers = #tpu.dot_dimension_numbers<[1], [0], [0], [1], [0, 0, 1, 1], [], []>} : vector<8x256xf32>, vector<256x16xf32>, vector<8x16xf32> -> vector<8x16xf32>
    %351 = vector.broadcast %340 : vector<1x16xf32> to vector<8x16xf32>
    %352 = arith.addf %350, %351 : vector<8x16xf32>
    %cst_134 = arith.constant 0.000000e+00 : f32
    %353 = vector.broadcast %cst_134 : f32 to vector<8x16xf32>
    %354 = arith.maximumf %352, %353 : vector<8x16xf32>
    %355 = arith.maximumf %347, %354 : vector<8x16xf32>
    %c2_135 = arith.constant 2 : index
    %c0_136 = arith.constant 0 : index
    %c0_137 = arith.constant 0 : index
    %356 = vector.load %arg7[%c2_135, %c0_136, %c0_137] : memref<9x256x16xf32, #tpu.memory_space<vmem>>, vector<1x256x16xf32>
    %357 = vector.shape_cast %356 : vector<1x256x16xf32> to vector<256x16xf32>
    %cst_138 = arith.constant dense<0.000000e+00> : vector<8x16xf32>
    %358 = tpu.matmul %300, %357, %cst_138 {dimension_numbers = #tpu.dot_dimension_numbers<[1], [0], [0], [1], [0, 0, 1, 1], [], []>} : vector<8x256xf32>, vector<256x16xf32>, vector<8x16xf32> -> vector<8x16xf32>
    %359 = vector.broadcast %340 : vector<1x16xf32> to vector<8x16xf32>
    %360 = arith.addf %358, %359 : vector<8x16xf32>
    %cst_139 = arith.constant 0.000000e+00 : f32
    %361 = vector.broadcast %cst_139 : f32 to vector<8x16xf32>
    %362 = arith.maximumf %360, %361 : vector<8x16xf32>
    %363 = arith.maximumf %355, %362 : vector<8x16xf32>
    %c3_140 = arith.constant 3 : index
    %c0_141 = arith.constant 0 : index
    %c0_142 = arith.constant 0 : index
    %364 = vector.load %arg7[%c3_140, %c0_141, %c0_142] : memref<9x256x16xf32, #tpu.memory_space<vmem>>, vector<1x256x16xf32>
    %365 = vector.shape_cast %364 : vector<1x256x16xf32> to vector<256x16xf32>
    %cst_143 = arith.constant dense<0.000000e+00> : vector<8x16xf32>
    %366 = tpu.matmul %300, %365, %cst_143 {dimension_numbers = #tpu.dot_dimension_numbers<[1], [0], [0], [1], [0, 0, 1, 1], [], []>} : vector<8x256xf32>, vector<256x16xf32>, vector<8x16xf32> -> vector<8x16xf32>
    %367 = vector.broadcast %340 : vector<1x16xf32> to vector<8x16xf32>
    %368 = arith.addf %366, %367 : vector<8x16xf32>
    %cst_144 = arith.constant 0.000000e+00 : f32
    %369 = vector.broadcast %cst_144 : f32 to vector<8x16xf32>
    %370 = arith.maximumf %368, %369 : vector<8x16xf32>
    %371 = arith.maximumf %363, %370 : vector<8x16xf32>
    %c4 = arith.constant 4 : index
    %c0_145 = arith.constant 0 : index
    %c0_146 = arith.constant 0 : index
    %372 = vector.load %arg7[%c4, %c0_145, %c0_146] : memref<9x256x16xf32, #tpu.memory_space<vmem>>, vector<1x256x16xf32>
    %373 = vector.shape_cast %372 : vector<1x256x16xf32> to vector<256x16xf32>
    %cst_147 = arith.constant dense<0.000000e+00> : vector<8x16xf32>
    %374 = tpu.matmul %300, %373, %cst_147 {dimension_numbers = #tpu.dot_dimension_numbers<[1], [0], [0], [1], [0, 0, 1, 1], [], []>} : vector<8x256xf32>, vector<256x16xf32>, vector<8x16xf32> -> vector<8x16xf32>
    %375 = vector.broadcast %340 : vector<1x16xf32> to vector<8x16xf32>
    %376 = arith.addf %374, %375 : vector<8x16xf32>
    %cst_148 = arith.constant 0.000000e+00 : f32
    %377 = vector.broadcast %cst_148 : f32 to vector<8x16xf32>
    %378 = arith.maximumf %376, %377 : vector<8x16xf32>
    %379 = arith.maximumf %371, %378 : vector<8x16xf32>
    %c5 = arith.constant 5 : index
    %c0_149 = arith.constant 0 : index
    %c0_150 = arith.constant 0 : index
    %380 = vector.load %arg7[%c5, %c0_149, %c0_150] : memref<9x256x16xf32, #tpu.memory_space<vmem>>, vector<1x256x16xf32>
    %381 = vector.shape_cast %380 : vector<1x256x16xf32> to vector<256x16xf32>
    %cst_151 = arith.constant dense<0.000000e+00> : vector<8x16xf32>
    %382 = tpu.matmul %300, %381, %cst_151 {dimension_numbers = #tpu.dot_dimension_numbers<[1], [0], [0], [1], [0, 0, 1, 1], [], []>} : vector<8x256xf32>, vector<256x16xf32>, vector<8x16xf32> -> vector<8x16xf32>
    %383 = vector.broadcast %340 : vector<1x16xf32> to vector<8x16xf32>
    %384 = arith.addf %382, %383 : vector<8x16xf32>
    %cst_152 = arith.constant 0.000000e+00 : f32
    %385 = vector.broadcast %cst_152 : f32 to vector<8x16xf32>
    %386 = arith.maximumf %384, %385 : vector<8x16xf32>
    %387 = arith.maximumf %379, %386 : vector<8x16xf32>
    %c6 = arith.constant 6 : index
    %c0_153 = arith.constant 0 : index
    %c0_154 = arith.constant 0 : index
    %388 = vector.load %arg7[%c6, %c0_153, %c0_154] : memref<9x256x16xf32, #tpu.memory_space<vmem>>, vector<1x256x16xf32>
    %389 = vector.shape_cast %388 : vector<1x256x16xf32> to vector<256x16xf32>
    %cst_155 = arith.constant dense<0.000000e+00> : vector<8x16xf32>
    %390 = tpu.matmul %300, %389, %cst_155 {dimension_numbers = #tpu.dot_dimension_numbers<[1], [0], [0], [1], [0, 0, 1, 1], [], []>} : vector<8x256xf32>, vector<256x16xf32>, vector<8x16xf32> -> vector<8x16xf32>
    %391 = vector.broadcast %340 : vector<1x16xf32> to vector<8x16xf32>
    %392 = arith.addf %390, %391 : vector<8x16xf32>
    %cst_156 = arith.constant 0.000000e+00 : f32
    %393 = vector.broadcast %cst_156 : f32 to vector<8x16xf32>
    %394 = arith.maximumf %392, %393 : vector<8x16xf32>
    %395 = arith.maximumf %387, %394 : vector<8x16xf32>
    %c7 = arith.constant 7 : index
    %c0_157 = arith.constant 0 : index
    %c0_158 = arith.constant 0 : index
    %396 = vector.load %arg7[%c7, %c0_157, %c0_158] : memref<9x256x16xf32, #tpu.memory_space<vmem>>, vector<1x256x16xf32>
    %397 = vector.shape_cast %396 : vector<1x256x16xf32> to vector<256x16xf32>
    %cst_159 = arith.constant dense<0.000000e+00> : vector<8x16xf32>
    %398 = tpu.matmul %300, %397, %cst_159 {dimension_numbers = #tpu.dot_dimension_numbers<[1], [0], [0], [1], [0, 0, 1, 1], [], []>} : vector<8x256xf32>, vector<256x16xf32>, vector<8x16xf32> -> vector<8x16xf32>
    %399 = vector.broadcast %340 : vector<1x16xf32> to vector<8x16xf32>
    %400 = arith.addf %398, %399 : vector<8x16xf32>
    %cst_160 = arith.constant 0.000000e+00 : f32
    %401 = vector.broadcast %cst_160 : f32 to vector<8x16xf32>
    %402 = arith.maximumf %400, %401 : vector<8x16xf32>
    %403 = arith.maximumf %395, %402 : vector<8x16xf32>
    %c8 = arith.constant 8 : index
    %c0_161 = arith.constant 0 : index
    %c0_162 = arith.constant 0 : index
    %404 = vector.load %arg7[%c8, %c0_161, %c0_162] : memref<9x256x16xf32, #tpu.memory_space<vmem>>, vector<1x256x16xf32>
    %405 = vector.shape_cast %404 : vector<1x256x16xf32> to vector<256x16xf32>
    %cst_163 = arith.constant dense<0.000000e+00> : vector<8x16xf32>
    %406 = tpu.matmul %300, %405, %cst_163 {dimension_numbers = #tpu.dot_dimension_numbers<[1], [0], [0], [1], [0, 0, 1, 1], [], []>} : vector<8x256xf32>, vector<256x16xf32>, vector<8x16xf32> -> vector<8x16xf32>
    %407 = vector.broadcast %340 : vector<1x16xf32> to vector<8x16xf32>
    %408 = arith.addf %406, %407 : vector<8x16xf32>
    %cst_164 = arith.constant 0.000000e+00 : f32
    %409 = vector.broadcast %cst_164 : f32 to vector<8x16xf32>
    %410 = arith.maximumf %408, %409 : vector<8x16xf32>
    %411 = arith.maximumf %403, %410 : vector<8x16xf32>
    %c0_165 = arith.constant 0 : index
    %c0_166 = arith.constant 0 : index
    %412 = vector.load %arg9[%c0_165, %c0_166] : memref<48x5xf32, #tpu.memory_space<vmem>>, vector<48x5xf32>
    %413 = vector.extract_strided_slice %412 {offsets = [0, 0], sizes = [16, 5], strides = [1, 1]} : vector<48x5xf32> to vector<16x5xf32>
    %cst_167 = arith.constant dense<0.000000e+00> : vector<8x5xf32>
    %414 = tpu.matmul %307, %413, %cst_167 {dimension_numbers = #tpu.dot_dimension_numbers<[1], [0], [0], [1], [0, 0, 1, 1], [], []>} : vector<8x16xf32>, vector<16x5xf32>, vector<8x5xf32> -> vector<8x5xf32>
    %415 = vector.extract_strided_slice %412 {offsets = [16, 0], sizes = [16, 5], strides = [1, 1]} : vector<48x5xf32> to vector<16x5xf32>
    %cst_168 = arith.constant dense<0.000000e+00> : vector<8x5xf32>
    %416 = tpu.matmul %339, %415, %cst_168 {dimension_numbers = #tpu.dot_dimension_numbers<[1], [0], [0], [1], [0, 0, 1, 1], [], []>} : vector<8x16xf32>, vector<16x5xf32>, vector<8x5xf32> -> vector<8x5xf32>
    %417 = arith.addf %414, %416 : vector<8x5xf32>
    %418 = vector.extract_strided_slice %412 {offsets = [32, 0], sizes = [16, 5], strides = [1, 1]} : vector<48x5xf32> to vector<16x5xf32>
    %cst_169 = arith.constant dense<0.000000e+00> : vector<8x5xf32>
    %419 = tpu.matmul %411, %418, %cst_169 {dimension_numbers = #tpu.dot_dimension_numbers<[1], [0], [0], [1], [0, 0, 1, 1], [], []>} : vector<8x16xf32>, vector<16x5xf32>, vector<8x5xf32> -> vector<8x5xf32>
    %420 = arith.addf %417, %419 : vector<8x5xf32>
    %c0_170 = arith.constant 0 : index
    %c0_171 = arith.constant 0 : index
    %421 = vector.load %arg10[%c0_170, %c0_171] : memref<1x5xf32, #tpu.memory_space<vmem>>, vector<1x5xf32>
    %422 = vector.broadcast %421 : vector<1x5xf32> to vector<8x5xf32>
    %423 = arith.addf %420, %422 : vector<8x5xf32>
    %c0_172 = arith.constant 0 : index
    %c0_173 = arith.constant 0 : index
    %424 = vector.load %arg11[%c0_172, %c0_173] : memref<8x5xf32, #tpu.memory_space<vmem>>, vector<8x5xf32>
    tpu.vector_store %arg11[%c0_172, %c0_173], %423 {strides = array<i32>} : memref<8x5xf32, #tpu.memory_space<vmem>>, vector<8x5xf32>,
    return
  }
  func.func @transform_0(%arg0: i32) -> (i32, i32, i32) {
    %c0_i32 = arith.constant 0 : i32
    %c0_i32_0 = arith.constant 0 : i32
    %c0_i32_1 = arith.constant 0 : i32
    return %c0_i32, %arg0, %c0_i32_0 : i32, i32, i32
  }
  func.func @transform_1(%arg0: i32) -> (i32, i32) {
    %c0_i32 = arith.constant 0 : i32
    %c0_i32_0 = arith.constant 0 : i32
    %c0_i32_1 = arith.constant 0 : i32
    return %c0_i32, %c0_i32_0 : i32, i32
  }
  func.func @transform_2(%arg0: i32) -> (i32, i32) {
    %c0_i32 = arith.constant 0 : i32
    %c0_i32_0 = arith.constant 0 : i32
    %c0_i32_1 = arith.constant 0 : i32
    return %c0_i32, %c0_i32_0 : i32, i32
  }
  func.func @transform_3(%arg0: i32) -> (i32, i32) {
    %c0_i32 = arith.constant 0 : i32
    %c0_i32_0 = arith.constant 0 : i32
    %c0_i32_1 = arith.constant 0 : i32
    return %c0_i32, %c0_i32_0 : i32, i32
  }
  func.func @transform_4(%arg0: i32) -> (i32, i32, i32) {
    %c0_i32 = arith.constant 0 : i32
    %c0_i32_0 = arith.constant 0 : i32
    %c0_i32_1 = arith.constant 0 : i32
    %c0_i32_2 = arith.constant 0 : i32
    return %c0_i32, %c0_i32_0, %c0_i32_1 : i32, i32, i32
  }
  func.func @transform_5(%arg0: i32) -> (i32, i32) {
    %c0_i32 = arith.constant 0 : i32
    %c0_i32_0 = arith.constant 0 : i32
    %c0_i32_1 = arith.constant 0 : i32
    return %c0_i32, %c0_i32_0 : i32, i32
  }
  func.func @transform_6(%arg0: i32) -> (i32, i32, i32) {
    %c0_i32 = arith.constant 0 : i32
    %c0_i32_0 = arith.constant 0 : i32
    %c0_i32_1 = arith.constant 0 : i32
    %c0_i32_2 = arith.constant 0 : i32
    return %c0_i32, %c0_i32_0, %c0_i32_1 : i32, i32, i32
  }
  func.func @transform_7(%arg0: i32) -> (i32, i32) {
    %c0_i32 = arith.constant 0 : i32
    %c0_i32_0 = arith.constant 0 : i32
    %c0_i32_1 = arith.constant 0 : i32
    return %c0_i32, %c0_i32_0 : i32, i32
  }
  func.func @transform_8(%arg0: i32) -> (i32, i32) {
    %c0_i32 = arith.constant 0 : i32
    %c0_i32_0 = arith.constant 0 : i32
    %c0_i32_1 = arith.constant 0 : i32
    return %c0_i32, %c0_i32_0 : i32, i32
  }
  func.func @transform_9(%arg0: i32) -> (i32, i32) {
    %c0_i32 = arith.constant 0 : i32
    %c0_i32_0 = arith.constant 0 : i32
    %c0_i32_1 = arith.constant 0 : i32
    return %c0_i32, %c0_i32_0 : i32, i32
  }
  func.func @transform_10(%arg0: i32) -> (i32, i32) {
    %c0_i32 = arith.constant 0 : i32
    %c0_i32_0 = arith.constant 0 : i32
    return %arg0, %c0_i32 : i32, i32
  }
}

</mosaic_0001>

<llo_original>
// kernel: tpu_custom_call.1
$region0: #{tpu_custom_call.1}
  #allocation0 [shape = 'u32[]', space=smem, size = 0x4, offset = 0x4, fixed_abs, tag = 'smem constant byte address 0x4 - core index']
  #allocation1 [shape = 'u32[144,128]{1,0:T(1,128)}', space=vmem, size = 0x12000, scoped, tag = 'internal scratch']
  %s0 = inlined_call_operand.vmem [shape: f32[8,8,512], index: 0, kind: input, shape index: {}]
  %s1 = inlined_call_operand.vmem [shape: f32[128,512], index: 1, kind: input, shape index: {}]
  %s2 = inlined_call_operand.vmem [shape: f32[256,16], index: 2, kind: input, shape index: {}]
  %s3 = inlined_call_operand.vmem [shape: f32[1,16], index: 3, kind: input, shape index: {}]
  %s4 = inlined_call_operand.vmem [shape: f32[4,256,16], index: 4, kind: input, shape index: {}]
  %s5 = inlined_call_operand.vmem [shape: f32[1,16], index: 5, kind: input, shape index: {}]
  %s6 = inlined_call_operand.vmem [shape: f32[9,256,16], index: 6, kind: input, shape index: {}]
  %s7 = inlined_call_operand.vmem [shape: f32[1,16], index: 7, kind: input, shape index: {}]
  %s8 = inlined_call_operand.vmem [shape: f32[48,5], index: 8, kind: input, shape index: {}]
  %s9 = inlined_call_operand.vmem [shape: f32[1,5], index: 9, kind: input, shape index: {}]
  %s10 = inlined_call_operand.hbm [shape: f32[8,5], index: 10, kind: output, shape index: {}]
  %s11 = sld [smem:[#allocation0]]
  $region50: #{tpu_custom_call.1} parent=0
    _
  %s13 = ssub.s32 1, %s11
  %s14 = scalar_select 0, %s13, %s11
  $region1: #{tpu_custom_call.1} parent=0
    #allocation2 [shape = 'u8[4096]{0}', space=vmem, size = 0x1000, scoped, tag = 'output window, operand 0, single buffered']
    #allocation3 [shape = 's32[1]{0}', space=sflag, size = 0x4, scoped, tag = 'scoped memory for tpu_custom_call.1']
    %15 = vsyncpa [#allocation3], 0
    // Predicated region
    $region2: #{tpu_custom_call.1} parent=1 // pred_check
      _
    $region3: #{tpu_custom_call.1} parent=1 // pred_check_branch
      %17 = sbr.rel (0) target = $region5
    $region4: #{tpu_custom_call.1} parent=1 // pred_region
      _
    $region5: #{tpu_custom_call.1} parent=1 // pred_fallthru
      _
    // Predicated region
    $region6: #{tpu_custom_call.1} parent=1 // pred_check
      _
    $region7: #{tpu_custom_call.1} parent=1 // pred_check_branch
      %19 = sbr.rel (0) target = $region9
    $region8: #{tpu_custom_call.1} parent=1 // pred_region
      _
    $region9: #{tpu_custom_call.1} parent=1 // pred_fallthru
      _
    // Predicated region
    $region10: #{tpu_custom_call.1} parent=1 // pred_check
      _
    $region11: #{tpu_custom_call.1} parent=1 // pred_check_branch
      %21 = sbr.rel (0) target = $region13
    $region12: #{tpu_custom_call.1} parent=1 // pred_region
      _
    $region13: #{tpu_custom_call.1} parent=1 // pred_fallthru
      _
    // Predicated region
    $region14: #{tpu_custom_call.1} parent=1 // pred_check
      _
    $region15: #{tpu_custom_call.1} parent=1 // pred_check_branch
      %23 = sbr.rel (0) target = $region17
    $region16: #{tpu_custom_call.1} parent=1 // pred_region
      _
    $region17: #{tpu_custom_call.1} parent=1 // pred_fallthru
      _
    // Predicated region
    $region18: #{tpu_custom_call.1} parent=1 // pred_check
      _
    $region19: #{tpu_custom_call.1} parent=1 // pred_check_branch
      %25 = sbr.rel (0) target = $region21
    $region20: #{tpu_custom_call.1} parent=1 // pred_region
      _
    $region21: #{tpu_custom_call.1} parent=1 // pred_fallthru
      _
    // Predicated region
    $region22: #{tpu_custom_call.1} parent=1 // pred_check
      _
    $region23: #{tpu_custom_call.1} parent=1 // pred_check_branch
      %27 = sbr.rel (0) target = $region25
    $region24: #{tpu_custom_call.1} parent=1 // pred_region
      _
    $region25: #{tpu_custom_call.1} parent=1 // pred_fallthru
      _
    // Predicated region
    $region26: #{tpu_custom_call.1} parent=1 // pred_check
      _
    $region27: #{tpu_custom_call.1} parent=1 // pred_check_branch
      %29 = sbr.rel (0) target = $region29
    $region28: #{tpu_custom_call.1} parent=1 // pred_region
      _
    $region29: #{tpu_custom_call.1} parent=1 // pred_fallthru
      _
    // Predicated region
    $region30: #{tpu_custom_call.1} parent=1 // pred_check
      _
    $region31: #{tpu_custom_call.1} parent=1 // pred_check_branch
      %31 = sbr.rel (0) target = $region33
    $region32: #{tpu_custom_call.1} parent=1 // pred_region
      _
    $region33: #{tpu_custom_call.1} parent=1 // pred_fallthru
      _
    // Predicated region
    $region34: #{tpu_custom_call.1} parent=1 // pred_check
      _
    $region35: #{tpu_custom_call.1} parent=1 // pred_check_branch
      %33 = sbr.rel (0) target = $region37
    $region36: #{tpu_custom_call.1} parent=1 // pred_region
      _
    $region37: #{tpu_custom_call.1} parent=1 // pred_fallthru
      _
    // Predicated region
    $region38: #{tpu_custom_call.1} parent=1 // pred_check
      _
    $region39: #{tpu_custom_call.1} parent=1 // pred_check_branch
      %35 = sbr.rel (0) target = $region41
    $region40: #{tpu_custom_call.1} parent=1 // pred_region
      _
    $region41: #{tpu_custom_call.1} parent=1 // pred_fallthru
      _
    %v36 = vld [vmem:[%s1] sm:$0xff]
    %v37 = vld [vmem:[%s1 + $0x8] sm:$0xff]
    %v38 = vld [vmem:[%s1 + $0x10] sm:$0xff]
    %v39 = vld [vmem:[%s1 + $0x18] sm:$0xff]
    %v40 = vld [vmem:[%s1 + $0x20] sm:$0xff]
    %v41 = vld [vmem:[%s1 + $0x28] sm:$0xff]
    %v42 = vld [vmem:[%s1 + $0x30] sm:$0xff]
    %v43 = vld [vmem:[%s1 + $0x38] sm:$0xff]
    %v44 = vld [vmem:[%s1 + $0x40] sm:$0xff]
    %v45 = vld [vmem:[%s1 + $0x48] sm:$0xff]
    %v46 = vld [vmem:[%s1 + $0x50] sm:$0xff]
    %v47 = vld [vmem:[%s1 + $0x58] sm:$0xff]
    %v48 = vld [vmem:[%s1 + $0x60] sm:$0xff]
    %v49 = vld [vmem:[%s1 + $0x68] sm:$0xff]
    %v50 = vld [vmem:[%s1 + $0x70] sm:$0xff]
    %v51 = vld [vmem:[%s1 + $0x78] sm:$0xff]
    %v52 = vld [vmem:[%s1 + $0x80] sm:$0xff]
    %v53 = vld [vmem:[%s1 + $0x88] sm:$0xff]
    %v54 = vld [vmem:[%s1 + $0x90] sm:$0xff]
    %v55 = vld [vmem:[%s1 + $0x98] sm:$0xff]
    %v56 = vld [vmem:[%s1 + $0xa0] sm:$0xff]
    %v57 = vld [vmem:[%s1 + $0xa8] sm:$0xff]
    %v58 = vld [vmem:[%s1 + $0xb0] sm:$0xff]
    %v59 = vld [vmem:[%s1 + $0xb8] sm:$0xff]
    %v60 = vld [vmem:[%s1 + $0xc0] sm:$0xff]
    %v61 = vld [vmem:[%s1 + $0xc8] sm:$0xff]
    %v62 = vld [vmem:[%s1 + $0xd0] sm:$0xff]
    %v63 = vld [vmem:[%s1 + $0xd8] sm:$0xff]
    %v64 = vld [vmem:[%s1 + $0xe0] sm:$0xff]
    %v65 = vld [vmem:[%s1 + $0xe8] sm:$0xff]
    %v66 = vld [vmem:[%s1 + $0xf0] sm:$0xff]
    %v67 = vld [vmem:[%s1 + $0xf8] sm:$0xff]
    %v68 = vld [vmem:[%s1 + $0x100] sm:$0xff]
    %v69 = vld [vmem:[%s1 + $0x108] sm:$0xff]
    %v70 = vld [vmem:[%s1 + $0x110] sm:$0xff]
    %v71 = vld [vmem:[%s1 + $0x118] sm:$0xff]
    %v72 = vld [vmem:[%s1 + $0x120] sm:$0xff]
    %v73 = vld [vmem:[%s1 + $0x128] sm:$0xff]
    %v74 = vld [vmem:[%s1 + $0x130] sm:$0xff]
    %v75 = vld [vmem:[%s1 + $0x138] sm:$0xff]
    %v76 = vld [vmem:[%s1 + $0x140] sm:$0xff]
    %v77 = vld [vmem:[%s1 + $0x148] sm:$0xff]
    %v78 = vld [vmem:[%s1 + $0x150] sm:$0xff]
    %v79 = vld [vmem:[%s1 + $0x158] sm:$0xff]
    %v80 = vld [vmem:[%s1 + $0x160] sm:$0xff]
    %v81 = vld [vmem:[%s1 + $0x168] sm:$0xff]
    %v82 = vld [vmem:[%s1 + $0x170] sm:$0xff]
    %v83 = vld [vmem:[%s1 + $0x178] sm:$0xff]
    %v84 = vld [vmem:[%s1 + $0x180] sm:$0xff]
    %v85 = vld [vmem:[%s1 + $0x188] sm:$0xff]
    %v86 = vld [vmem:[%s1 + $0x190] sm:$0xff]
    %v87 = vld [vmem:[%s1 + $0x198] sm:$0xff]
    %v88 = vld [vmem:[%s1 + $0x1a0] sm:$0xff]
    %v89 = vld [vmem:[%s1 + $0x1a8] sm:$0xff]
    %v90 = vld [vmem:[%s1 + $0x1b0] sm:$0xff]
    %v91 = vld [vmem:[%s1 + $0x1b8] sm:$0xff]
    %v92 = vld [vmem:[%s1 + $0x1c0] sm:$0xff]
    %v93 = vld [vmem:[%s1 + $0x1c8] sm:$0xff]
    %v94 = vld [vmem:[%s1 + $0x1d0] sm:$0xff]
    %v95 = vld [vmem:[%s1 + $0x1d8] sm:$0xff]
    %v96 = vld [vmem:[%s1 + $0x1e0] sm:$0xff]
    %v97 = vld [vmem:[%s1 + $0x1e8] sm:$0xff]
    %v98 = vld [vmem:[%s1 + $0x1f0] sm:$0xff]
    %v99 = vld [vmem:[%s1 + $0x1f8] sm:$0xff]
    %v100 = vld [vmem:[%s0] sm:$0xff]
    %v101 = vld [vmem:[%s0 + $0x8] sm:$0xff]
    %v102 = vld [vmem:[%s0 + $0x10] sm:$0xff]
    %v103 = vld [vmem:[%s0 + $0x18] sm:$0xff]
    %104 = vmatprep.subr.mxu0 %v97
    %105 = vmatpush1.msra.mxu0 %v96
    %106 = vmatprep.subr.mxu0 %v93
    %107 = vmatpush1.msra.mxu0 %v92
    %108 = vmatprep.subr.mxu0 %v89
    %109 = vmatpush1.msra.mxu0 %v88
    %110 = vmatprep.subr.mxu0 %v85
    %111 = vmatpush1.msra.mxu0 %v84
    %112 = vmatprep.subr.mxu0 %v81
    %113 = vmatpush1.msra.mxu0 %v80
    %114 = vmatprep.subr.mxu0 %v77
    %115 = vmatpush1.msra.mxu0 %v76
    %116 = vmatprep.subr.mxu0 %v73
    %117 = vmatpush1.msra.mxu0 %v72
    %118 = vmatprep.subr.mxu0 %v69
    %119 = vmatpush1.msra.mxu0 %v68
    %120 = vmatprep.subr.mxu0 %v65
    %121 = vmatpush1.msra.mxu0 %v64
    %122 = vmatprep.subr.mxu0 %v61
    %123 = vmatpush1.msra.mxu0 %v60
    %124 = vmatprep.subr.mxu0 %v57
    %125 = vmatpush1.msra.mxu0 %v56
    %126 = vmatprep.subr.mxu0 %v53
    %127 = vmatpush1.msra.mxu0 %v52
    %128 = vmatprep.subr.mxu0 %v49
    %129 = vmatpush1.msra.mxu0 %v48
    %130 = vmatprep.subr.mxu0 %v45
    %131 = vmatpush1.msra.mxu0 %v44
    %132 = vmatprep.subr.mxu0 %v41
    %133 = vmatpush1.msra.mxu0 %v40
    %134 = vmatprep.subr.mxu0 %v37
    %135 = vmatpush1.msra.mxu0 %v36
    %136 = vmatprep.subr.mxu0 0.0
    %137 = vmatpush2.msra.mxu0 0.0
    %138 = vmatprep.subr.mxu0 0.0
    %139 = vmatpush2.msra.mxu0 0.0
    %140 = vmatprep.subr.mxu0 0.0
    %141 = vmatpush2.msra.mxu0 0.0
    %142 = vmatprep.subr.mxu0 0.0
    %143 = vmatpush2.msra.mxu0 0.0
    %144 = vmatprep.subr.mxu0 0.0
    %145 = vmatpush2.msra.mxu0 0.0
    %146 = vmatprep.subr.mxu0 0.0
    %147 = vmatpush2.msra.mxu0 0.0
    %148 = vmatprep.subr.mxu0 0.0
    %149 = vmatpush2.msra.mxu0 0.0
    %150 = vmatprep.subr.mxu0 0.0
    %151 = vmatpush2.msra.mxu0 0.0
    %152 = vmatprep.subr.mxu0 0.0
    %153 = vmatpush2.msra.mxu0 0.0
    %154 = vmatprep.subr.mxu0 0.0
    %155 = vmatpush2.msra.mxu0 0.0
    %156 = vmatprep.subr.mxu0 0.0
    %157 = vmatpush2.msra.mxu0 0.0
    %158 = vmatprep.subr.mxu0 0.0
    %159 = vmatpush2.msra.mxu0 0.0
    %160 = vmatprep.subr.mxu0 0.0
    %161 = vmatpush2.msra.mxu0 0.0
    %162 = vmatprep.subr.mxu0 0.0
    %163 = vmatpush2.msra.mxu0 0.0
    %164 = vmatprep.subr.mxu0 0.0
    %165 = vmatpush2.msra.mxu0 0.0
    %166 = vmatprep.subr.mxu0 0.0
    %167 = vmatpush2.msra.mxu0 0.0
    %168 = vmatprep.mubr.f32.mxu0 0.0
    %169 = vmatmul.mubr.f32.gmra.mxu0 0.0
    %v170 = vpop.f32.mrf.mxu0
    %v171 = vadd.f32 0.0, %v170
    %v172 = vpop.f32.mrf.mxu0
    %v173 = vadd.f32 0.0, %v172
    %174 = vdwg.mxu0
    %175 = vmatprep.subr.mxu0 %v99
    %176 = vmatpush1.msra.mxu0 %v98
    %177 = vmatprep.subr.mxu0 %v95
    %178 = vmatpush1.msra.mxu0 %v94
    %179 = vmatprep.subr.mxu0 %v91
    %180 = vmatpush1.msra.mxu0 %v90
    %181 = vmatprep.subr.mxu0 %v87
    %182 = vmatpush1.msra.mxu0 %v86
    %183 = vmatprep.subr.mxu0 %v83
    %184 = vmatpush1.msra.mxu0 %v82
    %185 = vmatprep.subr.mxu0 %v79
    %186 = vmatpush1.msra.mxu0 %v78
    %187 = vmatprep.subr.mxu0 %v75
    %188 = vmatpush1.msra.mxu0 %v74
    %189 = vmatprep.subr.mxu0 %v71
    %190 = vmatpush1.msra.mxu0 %v70
    %191 = vmatprep.subr.mxu0 %v67
    %192 = vmatpush1.msra.mxu0 %v66
    %193 = vmatprep.subr.mxu0 %v63
    %194 = vmatpush1.msra.mxu0 %v62
    %195 = vmatprep.subr.mxu0 %v59
    %196 = vmatpush1.msra.mxu0 %v58
    %197 = vmatprep.subr.mxu0 %v55
    %198 = vmatpush1.msra.mxu0 %v54
    %199 = vmatprep.subr.mxu0 %v51
    %200 = vmatpush1.msra.mxu0 %v50
    %201 = vmatprep.subr.mxu0 %v47
    %202 = vmatpush1.msra.mxu0 %v46
    %203 = vmatprep.subr.mxu0 %v43
    %204 = vmatpush1.msra.mxu0 %v42
    %205 = vmatprep.subr.mxu0 %v39
    %206 = vmatpush1.msra.mxu0 %v38
    %207 = vmatprep.subr.mxu0 0.0
    %208 = vmatpush2.msra.mxu0 0.0
    %209 = vmatprep.subr.mxu0 0.0
    %210 = vmatpush2.msra.mxu0 0.0
    %211 = vmatprep.subr.mxu0 0.0
    %212 = vmatpush2.msra.mxu0 0.0
    %213 = vmatprep.subr.mxu0 0.0
    %214 = vmatpush2.msra.mxu0 0.0
    %215 = vmatprep.subr.mxu0 0.0
    %216 = vmatpush2.msra.mxu0 0.0
    %217 = vmatprep.subr.mxu0 0.0
    %218 = vmatpush2.msra.mxu0 0.0
    %219 = vmatprep.subr.mxu0 0.0
    %220 = vmatpush2.msra.mxu0 0.0
    %221 = vmatprep.subr.mxu0 0.0
    %222 = vmatpush2.msra.mxu0 0.0
    %223 = vmatprep.subr.mxu0 0.0
    %224 = vmatpush2.msra.mxu0 0.0
    %225 = vmatprep.subr.mxu0 0.0
    %226 = vmatpush2.msra.mxu0 0.0
    %227 = vmatprep.subr.mxu0 0.0
    %228 = vmatpush2.msra.mxu0 0.0
    %229 = vmatprep.subr.mxu0 0.0
    %230 = vmatpush2.msra.mxu0 0.0
    %231 = vmatprep.subr.mxu0 0.0
    %232 = vmatpush2.msra.mxu0 0.0
    %233 = vmatprep.subr.mxu0 0.0
    %234 = vmatpush2.msra.mxu0 0.0
    %235 = vmatprep.subr.mxu0 0.0
    %236 = vmatpush2.msra.mxu0 0.0
    %237 = vmatprep.subr.mxu0 0.0
    %238 = vmatpush2.msra.mxu0 0.0
    %239 = vmatprep.mubr.f32.mxu0 0.0
    %240 = vmatmul.mubr.f32.gmra.mxu0 0.0
    %v241 = vpop.f32.mrf.mxu0
    %v242 = vadd.f32 0.0, %v241
    %v243 = vpop.f32.mrf.mxu0
    %v244 = vadd.f32 0.0, %v243
    %245 = vdwg.mxu0
    %v246 = vadd.f32 %v100, %v171
    %v247 = vadd.f32 %v101, %v173
    %v248 = vadd.f32 %v102, %v242
    %v249 = vadd.f32 %v103, %v244
    %v250 = vsub.f32 0.0, %v246
    %v251 = vmul.f32 %v250, 1.442695
    %v252 = vpow.pop %v251
    %v253 = vadd.f32 %v252, 1.0
    %v254 = vrcp.pop %v253
    %v255 = vmul.f32 1.0, %v254
    %v256 = vsub.f32 0.0, %v247
    %v257 = vmul.f32 %v256, 1.442695
    %v258 = vpow.pop %v257
    %v259 = vadd.f32 %v258, 1.0
    %v260 = vrcp.pop %v259
    %v261 = vmul.f32 1.0, %v260
    %v262 = vtanh.pop %v248
    %v263 = vsub.f32 0.0, %v249
    %v264 = vmul.f32 %v263, 1.442695
    %v265 = vpow.pop %v264
    %v266 = vadd.f32 %v265, 1.0
    %v267 = vrcp.pop %v266
    %v268 = vmul.f32 1.0, %v267
    %v269 = vmul.f32 %v261, 0.0
    %v270 = vmul.f32 %v255, %v262
    %v271 = vadd.f32 %v269, %v270
    %v272 = vtanh.pop %v271
    %v273 = vmul.f32 %v268, %v272
    %v274 = vadd.f32 %v273, 0.0
    %s275 = scalar_lea.vmem %s0, 32
    %v276 = vld [vmem:[%s275] sm:$0xff]
    %v277 = vld [vmem:[%s275 + $0x8] sm:$0xff]
    %v278 = vld [vmem:[%s275 + $0x10] sm:$0xff]
    %v279 = vld [vmem:[%s275 + $0x18] sm:$0xff]
    %280 = vmatprep.subr.mxu0 %v97
    %281 = vmatpush1.msra.mxu0 %v96
    %282 = vmatprep.subr.mxu0 %v93
    %283 = vmatpush1.msra.mxu0 %v92
    %284 = vmatprep.subr.mxu0 %v89
    %285 = vmatpush1.msra.mxu0 %v88
    %286 = vmatprep.subr.mxu0 %v85
    %287 = vmatpush1.msra.mxu0 %v84
    %288 = vmatprep.subr.mxu0 %v81
    %289 = vmatpush1.msra.mxu0 %v80
    %290 = vmatprep.subr.mxu0 %v77
    %291 = vmatpush1.msra.mxu0 %v76
    %292 = vmatprep.subr.mxu0 %v73
    %293 = vmatpush1.msra.mxu0 %v72
    %294 = vmatprep.subr.mxu0 %v69
    %295 = vmatpush1.msra.mxu0 %v68
    %296 = vmatprep.subr.mxu0 %v65
    %297 = vmatpush1.msra.mxu0 %v64
    %298 = vmatprep.subr.mxu0 %v61
    %299 = vmatpush1.msra.mxu0 %v60
    %300 = vmatprep.subr.mxu0 %v57
    %301 = vmatpush1.msra.mxu0 %v56
    %302 = vmatprep.subr.mxu0 %v53
    %303 = vmatpush1.msra.mxu0 %v52
    %304 = vmatprep.subr.mxu0 %v49
    %305 = vmatpush1.msra.mxu0 %v48
    %306 = vmatprep.subr.mxu0 %v45
    %307 = vmatpush1.msra.mxu0 %v44
    %308 = vmatprep.subr.mxu0 %v41
    %309 = vmatpush1.msra.mxu0 %v40
    %310 = vmatprep.subr.mxu0 %v37
    %311 = vmatpush1.msra.mxu0 %v36
    %312 = vmatprep.subr.mxu0 0.0
    %313 = vmatpush2.msra.mxu0 0.0
    %314 = vmatprep.subr.mxu0 0.0
    %315 = vmatpush2.msra.mxu0 0.0
    %316 = vmatprep.subr.mxu0 0.0
    %317 = vmatpush2.msra.mxu0 0.0
    %318 = vmatprep.subr.mxu0 0.0
    %319 = vmatpush2.msra.mxu0 0.0
    %320 = vmatprep.subr.mxu0 0.0
    %321 = vmatpush2.msra.mxu0 0.0
    %322 = vmatprep.subr.mxu0 0.0
    %323 = vmatpush2.msra.mxu0 0.0
    %324 = vmatprep.subr.mxu0 0.0
    %325 = vmatpush2.msra.mxu0 0.0
    %326 = vmatprep.subr.mxu0 0.0
    %327 = vmatpush2.msra.mxu0 0.0
    %328 = vmatprep.subr.mxu0 0.0
    %329 = vmatpush2.msra.mxu0 0.0
    %330 = vmatprep.subr.mxu0 0.0
    %331 = vmatpush2.msra.mxu0 0.0
    %332 = vmatprep.subr.mxu0 0.0
    %333 = vmatpush2.msra.mxu0 0.0
    %334 = vmatprep.subr.mxu0 0.0
    %335 = vmatpush2.msra.mxu0 0.0
    %336 = vmatprep.subr.mxu0 0.0
    %337 = vmatpush2.msra.mxu0 0.0
    %338 = vmatprep.subr.mxu0 0.0
    %339 = vmatpush2.msra.mxu0 0.0
    %340 = vmatprep.subr.mxu0 0.0
    %341 = vmatpush2.msra.mxu0 0.0
    %342 = vmatprep.subr.mxu0 0.0
    %343 = vmatpush2.msra.mxu0 0.0
    %344 = vmatprep.mubr.f32.mxu0 0.0
    %345 = vmatmul.mubr.f32.gmra.mxu0 %v273
    %v346 = vpop.f32.mrf.mxu0
    %v347 = vadd.f32 0.0, %v346
    %v348 = vpop.f32.mrf.mxu0
    %v349 = vadd.f32 0.0, %v348
    %350 = vdwg.mxu0
    %351 = vmatprep.subr.mxu0 %v99
    %352 = vmatpush1.msra.mxu0 %v98
    %353 = vmatprep.subr.mxu0 %v95
    %354 = vmatpush1.msra.mxu0 %v94
    %355 = vmatprep.subr.mxu0 %v91
    %356 = vmatpush1.msra.mxu0 %v90
    %357 = vmatprep.subr.mxu0 %v87
    %358 = vmatpush1.msra.mxu0 %v86
    %359 = vmatprep.subr.mxu0 %v83
    %360 = vmatpush1.msra.mxu0 %v82
    %361 = vmatprep.subr.mxu0 %v79
    %362 = vmatpush1.msra.mxu0 %v78
    %363 = vmatprep.subr.mxu0 %v75
    %364 = vmatpush1.msra.mxu0 %v74
    %365 = vmatprep.subr.mxu0 %v71
    %366 = vmatpush1.msra.mxu0 %v70
    %367 = vmatprep.subr.mxu0 %v67
    %368 = vmatpush1.msra.mxu0 %v66
    %369 = vmatprep.subr.mxu0 %v63
    %370 = vmatpush1.msra.mxu0 %v62
    %371 = vmatprep.subr.mxu0 %v59
    %372 = vmatpush1.msra.mxu0 %v58
    %373 = vmatprep.subr.mxu0 %v55
    %374 = vmatpush1.msra.mxu0 %v54
    %375 = vmatprep.subr.mxu0 %v51
    %376 = vmatpush1.msra.mxu0 %v50
    %377 = vmatprep.subr.mxu0 %v47
    %378 = vmatpush1.msra.mxu0 %v46
    %379 = vmatprep.subr.mxu0 %v43
    %380 = vmatpush1.msra.mxu0 %v42
    %381 = vmatprep.subr.mxu0 %v39
    %382 = vmatpush1.msra.mxu0 %v38
    %383 = vmatprep.subr.mxu0 0.0
    %384 = vmatpush2.msra.mxu0 0.0
    %385 = vmatprep.subr.mxu0 0.0
    %386 = vmatpush2.msra.mxu0 0.0
    %387 = vmatprep.subr.mxu0 0.0
    %388 = vmatpush2.msra.mxu0 0.0
    %389 = vmatprep.subr.mxu0 0.0
    %390 = vmatpush2.msra.mxu0 0.0
    %391 = vmatprep.subr.mxu0 0.0
    %392 = vmatpush2.msra.mxu0 0.0
    %393 = vmatprep.subr.mxu0 0.0
    %394 = vmatpush2.msra.mxu0 0.0
    %395 = vmatprep.subr.mxu0 0.0
    %396 = vmatpush2.msra.mxu0 0.0
    %397 = vmatprep.subr.mxu0 0.0
    %398 = vmatpush2.msra.mxu0 0.0
    %399 = vmatprep.subr.mxu0 0.0
    %400 = vmatpush2.msra.mxu0 0.0
    %401 = vmatprep.subr.mxu0 0.0
    %402 = vmatpush2.msra.mxu0 0.0
    %403 = vmatprep.subr.mxu0 0.0
    %404 = vmatpush2.msra.mxu0 0.0
    %405 = vmatprep.subr.mxu0 0.0
    %406 = vmatpush2.msra.mxu0 0.0
    %407 = vmatprep.subr.mxu0 0.0
    %408 = vmatpush2.msra.mxu0 0.0
    %409 = vmatprep.subr.mxu0 0.0
    %410 = vmatpush2.msra.mxu0 0.0
    %411 = vmatprep.subr.mxu0 0.0
    %412 = vmatpush2.msra.mxu0 0.0
    %413 = vmatprep.subr.mxu0 0.0
    %414 = vmatpush2.msra.mxu0 0.0
    %415 = vmatprep.mubr.f32.mxu0 0.0
    %416 = vmatmul.mubr.f32.gmra.mxu0 %v273
    %v417 = vpop.f32.mrf.mxu0
    %v418 = vadd.f32 0.0, %v417
    %v419 = vpop.f32.mrf.mxu0
    %v420 = vadd.f32 0.0, %v419
    %421 = vdwg.mxu0
    %v422 = vadd.f32 %v276, %v347
    %v423 = vadd.f32 %v277, %v349
    %v424 = vadd.f32 %v278, %v418
    %v425 = vadd.f32 %v279, %v420
    %v426 = vsub.f32 0.0, %v422
    %v427 = vmul.f32 %v426, 1.442695
    %v428 = vpow.pop %v427
    %v429 = vadd.f32 %v428, 1.0
    %v430 = vrcp.pop %v429
    %v431 = vmul.f32 1.0, %v430
    %v432 = vsub.f32 0.0, %v423
    %v433 = vmul.f32 %v432, 1.442695
    %v434 = vpow.pop %v433
    %v435 = vadd.f32 %v434, 1.0
    %v436 = vrcp.pop %v435
    %v437 = vmul.f32 1.0, %v436
    %v438 = vtanh.pop %v424
    %v439 = vsub.f32 0.0, %v425
    %v440 = vmul.f32 %v439, 1.442695
    %v441 = vpow.pop %v440
    %v442 = vadd.f32 %v441, 1.0
    %v443 = vrcp.pop %v442
    %v444 = vmul.f32 1.0, %v443
    %v445 = vmul.f32 %v437, %v271
    %v446 = vmul.f32 %v431, %v438
    %v447 = vadd.f32 %v445, %v446
    %v448 = vtanh.pop %v447
    %v449 = vmul.f32 %v444, %v448
    %v450 = vadd.f32 %v274, %v449
    %s451 = scalar_lea.vmem %s0, 64
    %v452 = vld [vmem:[%s451] sm:$0xff]
    %v453 = vld [vmem:[%s451 + $0x8] sm:$0xff]
    %v454 = vld [vmem:[%s451 + $0x10] sm:$0xff]
    %v455 = vld [vmem:[%s451 + $0x18] sm:$0xff]
    %456 = vmatprep.subr.mxu0 %v97
    %457 = vmatpush1.msra.mxu0 %v96
    %458 = vmatprep.subr.mxu0 %v93
    %459 = vmatpush1.msra.mxu0 %v92
    %460 = vmatprep.subr.mxu0 %v89
    %461 = vmatpush1.msra.mxu0 %v88
    %462 = vmatprep.subr.mxu0 %v85
    %463 = vmatpush1.msra.mxu0 %v84
    %464 = vmatprep.subr.mxu0 %v81
    %465 = vmatpush1.msra.mxu0 %v80
    %466 = vmatprep.subr.mxu0 %v77
    %467 = vmatpush1.msra.mxu0 %v76
    %468 = vmatprep.subr.mxu0 %v73
    %469 = vmatpush1.msra.mxu0 %v72
    %470 = vmatprep.subr.mxu0 %v69
    %471 = vmatpush1.msra.mxu0 %v68
    %472 = vmatprep.subr.mxu0 %v65
    %473 = vmatpush1.msra.mxu0 %v64
    %474 = vmatprep.subr.mxu0 %v61
    %475 = vmatpush1.msra.mxu0 %v60
    %476 = vmatprep.subr.mxu0 %v57
    %477 = vmatpush1.msra.mxu0 %v56
    %478 = vmatprep.subr.mxu0 %v53
    %479 = vmatpush1.msra.mxu0 %v52
    %480 = vmatprep.subr.mxu0 %v49
    %481 = vmatpush1.msra.mxu0 %v48
    %482 = vmatprep.subr.mxu0 %v45
    %483 = vmatpush1.msra.mxu0 %v44
    %484 = vmatprep.subr.mxu0 %v41
    %485 = vmatpush1.msra.mxu0 %v40
    %486 = vmatprep.subr.mxu0 %v37
    %487 = vmatpush1.msra.mxu0 %v36
    %488 = vmatprep.subr.mxu0 0.0
    %489 = vmatpush2.msra.mxu0 0.0
    %490 = vmatprep.subr.mxu0 0.0
    %491 = vmatpush2.msra.mxu0 0.0
    %492 = vmatprep.subr.mxu0 0.0
    %493 = vmatpush2.msra.mxu0 0.0
    %494 = vmatprep.subr.mxu0 0.0
    %495 = vmatpush2.msra.mxu0 0.0
    %496 = vmatprep.subr.mxu0 0.0
    %497 = vmatpush2.msra.mxu0 0.0
    %498 = vmatprep.subr.mxu0 0.0
    %499 = vmatpush2.msra.mxu0 0.0
    %500 = vmatprep.subr.mxu0 0.0
    %501 = vmatpush2.msra.mxu0 0.0
    %502 = vmatprep.subr.mxu0 0.0
    %503 = vmatpush2.msra.mxu0 0.0
    %504 = vmatprep.subr.mxu0 0.0
    %505 = vmatpush2.msra.mxu0 0.0
    %506 = vmatprep.subr.mxu0 0.0
    %507 = vmatpush2.msra.mxu0 0.0
    %508 = vmatprep.subr.mxu0 0.0
    %509 = vmatpush2.msra.mxu0 0.0
    %510 = vmatprep.subr.mxu0 0.0
    %511 = vmatpush2.msra.mxu0 0.0
    %512 = vmatprep.subr.mxu0 0.0
    %513 = vmatpush2.msra.mxu0 0.0
    %514 = vmatprep.subr.mxu0 0.0
    %515 = vmatpush2.msra.mxu0 0.0
    %516 = vmatprep.subr.mxu0 0.0
    %517 = vmatpush2.msra.mxu0 0.0
    %518 = vmatprep.subr.mxu0 0.0
    %519 = vmatpush2.msra.mxu0 0.0
    %520 = vmatprep.mubr.f32.mxu0 0.0
    %521 = vmatmul.mubr.f32.gmra.mxu0 %v449
    %v522 = vpop.f32.mrf.mxu0
    %v523 = vadd.f32 0.0, %v522
    %v524 = vpop.f32.mrf.mxu0
    %v525 = vadd.f32 0.0, %v524
    %526 = vdwg.mxu0
    %527 = vmatprep.subr.mxu0 %v99
    %528 = vmatpush1.msra.mxu0 %v98
    %529 = vmatprep.subr.mxu0 %v95
    %530 = vmatpush1.msra.mxu0 %v94
    %531 = vmatprep.subr.mxu0 %v91
    %532 = vmatpush1.msra.mxu0 %v90
    %533 = vmatprep.subr.mxu0 %v87
    %534 = vmatpush1.msra.mxu0 %v86
    %535 = vmatprep.subr.mxu0 %v83
    %536 = vmatpush1.msra.mxu0 %v82
    %537 = vmatprep.subr.mxu0 %v79
    %538 = vmatpush1.msra.mxu0 %v78
    %539 = vmatprep.subr.mxu0 %v75
    %540 = vmatpush1.msra.mxu0 %v74
    %541 = vmatprep.subr.mxu0 %v71
    %542 = vmatpush1.msra.mxu0 %v70
    %543 = vmatprep.subr.mxu0 %v67
    %544 = vmatpush1.msra.mxu0 %v66
    %545 = vmatprep.subr.mxu0 %v63
    %546 = vmatpush1.msra.mxu0 %v62
    %547 = vmatprep.subr.mxu0 %v59
    %548 = vmatpush1.msra.mxu0 %v58
    %549 = vmatprep.subr.mxu0 %v55
    %550 = vmatpush1.msra.mxu0 %v54
    %551 = vmatprep.subr.mxu0 %v51
    %552 = vmatpush1.msra.mxu0 %v50
    %553 = vmatprep.subr.mxu0 %v47
    %554 = vmatpush1.msra.mxu0 %v46
    %555 = vmatprep.subr.mxu0 %v43
    %556 = vmatpush1.msra.mxu0 %v42
    %557 = vmatprep.subr.mxu0 %v39
    %558 = vmatpush1.msra.mxu0 %v38
    %559 = vmatprep.subr.mxu0 0.0
    %560 = vmatpush2.msra.mxu0 0.0
    %561 = vmatprep.subr.mxu0 0.0
    %562 = vmatpush2.msra.mxu0 0.0
    %563 = vmatprep.subr.mxu0 0.0
    %564 = vmatpush2.msra.mxu0 0.0
    %565 = vmatprep.subr.mxu0 0.0
    %566 = vmatpush2.msra.mxu0 0.0
    %567 = vmatprep.subr.mxu0 0.0
    %568 = vmatpush2.msra.mxu0 0.0
    %569 = vmatprep.subr.mxu0 0.0
    %570 = vmatpush2.msra.mxu0 0.0
    %571 = vmatprep.subr.mxu0 0.0
    %572 = vmatpush2.msra.mxu0 0.0
    %573 = vmatprep.subr.mxu0 0.0
    %574 = vmatpush2.msra.mxu0 0.0
    %575 = vmatprep.subr.mxu0 0.0
    %576 = vmatpush2.msra.mxu0 0.0
    %577 = vmatprep.subr.mxu0 0.0
    %578 = vmatpush2.msra.mxu0 0.0
    %579 = vmatprep.subr.mxu0 0.0
    %580 = vmatpush2.msra.mxu0 0.0
    %581 = vmatprep.subr.mxu0 0.0
    %582 = vmatpush2.msra.mxu0 0.0
    %583 = vmatprep.subr.mxu0 0.0
    %584 = vmatpush2.msra.mxu0 0.0
    %585 = vmatprep.subr.mxu0 0.0
    %586 = vmatpush2.msra.mxu0 0.0
    %587 = vmatprep.subr.mxu0 0.0
    %588 = vmatpush2.msra.mxu0 0.0
    %589 = vmatprep.subr.mxu0 0.0
    %590 = vmatpush2.msra.mxu0 0.0
    %591 = vmatprep.mubr.f32.mxu0 0.0
    %592 = vmatmul.mubr.f32.gmra.mxu0 %v449
    %v593 = vpop.f32.mrf.mxu0
    %v594 = vadd.f32 0.0, %v593
    %v595 = vpop.f32.mrf.mxu0
    %v596 = vadd.f32 0.0, %v595
    %597 = vdwg.mxu0
    %v598 = vadd.f32 %v452, %v523
    %v599 = vadd.f32 %v453, %v525
    %v600 = vadd.f32 %v454, %v594
    %v601 = vadd.f32 %v455, %v596
    %v602 = vsub.f32 0.0, %v598
    %v603 = vmul.f32 %v602, 1.442695
    %v604 = vpow.pop %v603
    %v605 = vadd.f32 %v604, 1.0
    %v606 = vrcp.pop %v605
    %v607 = vmul.f32 1.0, %v606
    %v608 = vsub.f32 0.0, %v599
    %v609 = vmul.f32 %v608, 1.442695
    %v610 = vpow.pop %v609
    %v611 = vadd.f32 %v610, 1.0
    %v612 = vrcp.pop %v611
    %v613 = vmul.f32 1.0, %v612
    %v614 = vtanh.pop %v600
    %v615 = vsub.f32 0.0, %v601
    %v616 = vmul.f32 %v615, 1.442695
    %v617 = vpow.pop %v616
    %v618 = vadd.f32 %v617, 1.0
    %v619 = vrcp.pop %v618
    %v620 = vmul.f32 1.0, %v619
    %v621 = vmul.f32 %v613, %v447
    %v622 = vmul.f32 %v607, %v614
    %v623 = vadd.f32 %v621, %v622
    %v624 = vtanh.pop %v623
    %v625 = vmul.f32 %v620, %v624
    %v626 = vadd.f32 %v450, %v625
    %s627 = scalar_lea.vmem %s0, 96
    %v628 = vld [vmem:[%s627] sm:$0xff]
    %v629 = vld [vmem:[%s627 + $0x8] sm:$0xff]
    %v630 = vld [vmem:[%s627 + $0x10] sm:$0xff]
    %v631 = vld [vmem:[%s627 + $0x18] sm:$0xff]
    %632 = vmatprep.subr.mxu0 %v97
    %633 = vmatpush1.msra.mxu0 %v96
    %634 = vmatprep.subr.mxu0 %v93
    %635 = vmatpush1.msra.mxu0 %v92
    %636 = vmatprep.subr.mxu0 %v89
    %637 = vmatpush1.msra.mxu0 %v88
    %638 = vmatprep.subr.mxu0 %v85
    %639 = vmatpush1.msra.mxu0 %v84
    %640 = vmatprep.subr.mxu0 %v81
    %641 = vmatpush1.msra.mxu0 %v80
    %642 = vmatprep.subr.mxu0 %v77
    %643 = vmatpush1.msra.mxu0 %v76
    %644 = vmatprep.subr.mxu0 %v73
    %645 = vmatpush1.msra.mxu0 %v72
    %646 = vmatprep.subr.mxu0 %v69
    %647 = vmatpush1.msra.mxu0 %v68
    %648 = vmatprep.subr.mxu0 %v65
    %649 = vmatpush1.msra.mxu0 %v64
    %650 = vmatprep.subr.mxu0 %v61
    %651 = vmatpush1.msra.mxu0 %v60
    %652 = vmatprep.subr.mxu0 %v57
    %653 = vmatpush1.msra.mxu0 %v56
    %654 = vmatprep.subr.mxu0 %v53
    %655 = vmatpush1.msra.mxu0 %v52
    %656 = vmatprep.subr.mxu0 %v49
    %657 = vmatpush1.msra.mxu0 %v48
    %658 = vmatprep.subr.mxu0 %v45
    %659 = vmatpush1.msra.mxu0 %v44
    %660 = vmatprep.subr.mxu0 %v41
    %661 = vmatpush1.msra.mxu0 %v40
    %662 = vmatprep.subr.mxu0 %v37
    %663 = vmatpush1.msra.mxu0 %v36
    %664 = vmatprep.subr.mxu0 0.0
    %665 = vmatpush2.msra.mxu0 0.0
    %666 = vmatprep.subr.mxu0 0.0
    %667 = vmatpush2.msra.mxu0 0.0
    %668 = vmatprep.subr.mxu0 0.0
    %669 = vmatpush2.msra.mxu0 0.0
    %670 = vmatprep.subr.mxu0 0.0
    %671 = vmatpush2.msra.mxu0 0.0
    %672 = vmatprep.subr.mxu0 0.0
    %673 = vmatpush2.msra.mxu0 0.0
    %674 = vmatprep.subr.mxu0 0.0
    %675 = vmatpush2.msra.mxu0 0.0
    %676 = vmatprep.subr.mxu0 0.0
    %677 = vmatpush2.msra.mxu0 0.0
    %678 = vmatprep.subr.mxu0 0.0
    %679 = vmatpush2.msra.mxu0 0.0
    %680 = vmatprep.subr.mxu0 0.0
    %681 = vmatpush2.msra.mxu0 0.0
    %682 = vmatprep.subr.mxu0 0.0
    %683 = vmatpush2.msra.mxu0 0.0
    %684 = vmatprep.subr.mxu0 0.0
    %685 = vmatpush2.msra.mxu0 0.0
    %686 = vmatprep.subr.mxu0 0.0
    %687 = vmatpush2.msra.mxu0 0.0
    %688 = vmatprep.subr.mxu0 0.0
    %689 = vmatpush2.msra.mxu0 0.0
    %690 = vmatprep.subr.mxu0 0.0
    %691 = vmatpush2.msra.mxu0 0.0
    %692 = vmatprep.subr.mxu0 0.0
    %693 = vmatpush2.msra.mxu0 0.0
    %694 = vmatprep.subr.mxu0 0.0
    %695 = vmatpush2.msra.mxu0 0.0
    %696 = vmatprep.mubr.f32.mxu0 0.0
    %697 = vmatmul.mubr.f32.gmra.mxu0 %v625
    %v698 = vpop.f32.mrf.mxu0
    %v699 = vadd.f32 0.0, %v698
    %v700 = vpop.f32.mrf.mxu0
    %v701 = vadd.f32 0.0, %v700
    %702 = vdwg.mxu0
    %703 = vmatprep.subr.mxu0 %v99
    %704 = vmatpush1.msra.mxu0 %v98
    %705 = vmatprep.subr.mxu0 %v95
    %706 = vmatpush1.msra.mxu0 %v94
    %707 = vmatprep.subr.mxu0 %v91
    %708 = vmatpush1.msra.mxu0 %v90
    %709 = vmatprep.subr.mxu0 %v87
    %710 = vmatpush1.msra.mxu0 %v86
    %711 = vmatprep.subr.mxu0 %v83
    %712 = vmatpush1.msra.mxu0 %v82
    %713 = vmatprep.subr.mxu0 %v79
    %714 = vmatpush1.msra.mxu0 %v78
    %715 = vmatprep.subr.mxu0 %v75
    %716 = vmatpush1.msra.mxu0 %v74
    %717 = vmatprep.subr.mxu0 %v71
    %718 = vmatpush1.msra.mxu0 %v70
    %719 = vmatprep.subr.mxu0 %v67
    %720 = vmatpush1.msra.mxu0 %v66
    %721 = vmatprep.subr.mxu0 %v63
    %722 = vmatpush1.msra.mxu0 %v62
    %723 = vmatprep.subr.mxu0 %v59
    %724 = vmatpush1.msra.mxu0 %v58
    %725 = vmatprep.subr.mxu0 %v55
    %726 = vmatpush1.msra.mxu0 %v54
    %727 = vmatprep.subr.mxu0 %v51
    %728 = vmatpush1.msra.mxu0 %v50
    %729 = vmatprep.subr.mxu0 %v47
    %730 = vmatpush1.msra.mxu0 %v46
    %731 = vmatprep.subr.mxu0 %v43
    %732 = vmatpush1.msra.mxu0 %v42
    %733 = vmatprep.subr.mxu0 %v39
    %734 = vmatpush1.msra.mxu0 %v38
    %735 = vmatprep.subr.mxu0 0.0
    %736 = vmatpush2.msra.mxu0 0.0
    %737 = vmatprep.subr.mxu0 0.0
    %738 = vmatpush2.msra.mxu0 0.0
    %739 = vmatprep.subr.mxu0 0.0
    %740 = vmatpush2.msra.mxu0 0.0
    %741 = vmatprep.subr.mxu0 0.0
    %742 = vmatpush2.msra.mxu0 0.0
    %743 = vmatprep.subr.mxu0 0.0
    %744 = vmatpush2.msra.mxu0 0.0
    %745 = vmatprep.subr.mxu0 0.0
    %746 = vmatpush2.msra.mxu0 0.0
    %747 = vmatprep.subr.mxu0 0.0
    %748 = vmatpush2.msra.mxu0 0.0
    %749 = vmatprep.subr.mxu0 0.0
    %750 = vmatpush2.msra.mxu0 0.0
    %751 = vmatprep.subr.mxu0 0.0
    %752 = vmatpush2.msra.mxu0 0.0
    %753 = vmatprep.subr.mxu0 0.0
    %754 = vmatpush2.msra.mxu0 0.0
    %755 = vmatprep.subr.mxu0 0.0
    %756 = vmatpush2.msra.mxu0 0.0
    %757 = vmatprep.subr.mxu0 0.0
    %758 = vmatpush2.msra.mxu0 0.0
    %759 = vmatprep.subr.mxu0 0.0
    %760 = vmatpush2.msra.mxu0 0.0
    %761 = vmatprep.subr.mxu0 0.0
    %762 = vmatpush2.msra.mxu0 0.0
    %763 = vmatprep.subr.mxu0 0.0
    %764 = vmatpush2.msra.mxu0 0.0
    %765 = vmatprep.subr.mxu0 0.0
    %766 = vmatpush2.msra.mxu0 0.0
    %767 = vmatprep.mubr.f32.mxu0 0.0
    %768 = vmatmul.mubr.f32.gmra.mxu0 %v625
    %v769 = vpop.f32.mrf.mxu0
    %v770 = vadd.f32 0.0, %v769
    %v771 = vpop.f32.mrf.mxu0
    %v772 = vadd.f32 0.0, %v771
    %773 = vdwg.mxu0
    %v774 = vadd.f32 %v628, %v699
    %v775 = vadd.f32 %v629, %v701
    %v776 = vadd.f32 %v630, %v770
    %v777 = vadd.f32 %v631, %v772
    %v778 = vsub.f32 0.0, %v774
    %v779 = vmul.f32 %v778, 1.442695
    %v780 = vpow.pop %v779
    %v781 = vadd.f32 %v780, 1.0
    %v782 = vrcp.pop %v781
    %v783 = vmul.f32 1.0, %v782
    %v784 = vsub.f32 0.0, %v775
    %v785 = vmul.f32 %v784, 1.442695
    %v786 = vpow.pop %v785
    %v787 = vadd.f32 %v786, 1.0
    %v788 = vrcp.pop %v787
    %v789 = vmul.f32 1.0, %v788
    %v790 = vtanh.pop %v776
    %v791 = vsub.f32 0.0, %v777
    %v792 = vmul.f32 %v791, 1.442695
    %v793 = vpow.pop %v792
    %v794 = vadd.f32 %v793, 1.0
    %v795 = vrcp.pop %v794
    %v796 = vmul.f32 1.0, %v795
    %v797 = vmul.f32 %v789, %v623
    %v798 = vmul.f32 %v783, %v790
    %v799 = vadd.f32 %v797, %v798
    %v800 = vtanh.pop %v799
    %v801 = vmul.f32 %v796, %v800
    %v802 = vadd.f32 %v626, %v801
    %s803 = scalar_lea.vmem %s0, 128
    %v804 = vld [vmem:[%s803] sm:$0xff]
    %v805 = vld [vmem:[%s803 + $0x8] sm:$0xff]
    %v806 = vld [vmem:[%s803 + $0x10] sm:$0xff]
    %v807 = vld [vmem:[%s803 + $0x18] sm:$0xff]
    %808 = vmatprep.subr.mxu0 %v97
    %809 = vmatpush1.msra.mxu0 %v96
    %810 = vmatprep.subr.mxu0 %v93
    %811 = vmatpush1.msra.mxu0 %v92
    %812 = vmatprep.subr.mxu0 %v89
    %813 = vmatpush1.msra.mxu0 %v88
    %814 = vmatprep.subr.mxu0 %v85
    %815 = vmatpush1.msra.mxu0 %v84
    %816 = vmatprep.subr.mxu0 %v81
    %817 = vmatpush1.msra.mxu0 %v80
    %818 = vmatprep.subr.mxu0 %v77
    %819 = vmatpush1.msra.mxu0 %v76
    %820 = vmatprep.subr.mxu0 %v73
    %821 = vmatpush1.msra.mxu0 %v72
    %822 = vmatprep.subr.mxu0 %v69
    %823 = vmatpush1.msra.mxu0 %v68
    %824 = vmatprep.subr.mxu0 %v65
    %825 = vmatpush1.msra.mxu0 %v64
    %826 = vmatprep.subr.mxu0 %v61
    %827 = vmatpush1.msra.mxu0 %v60
    %828 = vmatprep.subr.mxu0 %v57
    %829 = vmatpush1.msra.mxu0 %v56
    %830 = vmatprep.subr.mxu0 %v53
    %831 = vmatpush1.msra.mxu0 %v52
    %832 = vmatprep.subr.mxu0 %v49
    %833 = vmatpush1.msra.mxu0 %v48
    %834 = vmatprep.subr.mxu0 %v45
    %835 = vmatpush1.msra.mxu0 %v44
    %836 = vmatprep.subr.mxu0 %v41
    %837 = vmatpush1.msra.mxu0 %v40
    %838 = vmatprep.subr.mxu0 %v37
    %839 = vmatpush1.msra.mxu0 %v36
    %840 = vmatprep.subr.mxu0 0.0
    %841 = vmatpush2.msra.mxu0 0.0
    %842 = vmatprep.subr.mxu0 0.0
    %843 = vmatpush2.msra.mxu0 0.0
    %844 = vmatprep.subr.mxu0 0.0
    %845 = vmatpush2.msra.mxu0 0.0
    %846 = vmatprep.subr.mxu0 0.0
    %847 = vmatpush2.msra.mxu0 0.0
    %848 = vmatprep.subr.mxu0 0.0
    %849 = vmatpush2.msra.mxu0 0.0
    %850 = vmatprep.subr.mxu0 0.0
    %851 = vmatpush2.msra.mxu0 0.0
    %852 = vmatprep.subr.mxu0 0.0
    %853 = vmatpush2.msra.mxu0 0.0
    %854 = vmatprep.subr.mxu0 0.0
    %855 = vmatpush2.msra.mxu0 0.0
    %856 = vmatprep.subr.mxu0 0.0
    %857 = vmatpush2.msra.mxu0 0.0
    %858 = vmatprep.subr.mxu0 0.0
    %859 = vmatpush2.msra.mxu0 0.0
    %860 = vmatprep.subr.mxu0 0.0
    %861 = vmatpush2.msra.mxu0 0.0
    %862 = vmatprep.subr.mxu0 0.0
    %863 = vmatpush2.msra.mxu0 0.0
    %864 = vmatprep.subr.mxu0 0.0
    %865 = vmatpush2.msra.mxu0 0.0
    %866 = vmatprep.subr.mxu0 0.0
    %867 = vmatpush2.msra.mxu0 0.0
    %868 = vmatprep.subr.mxu0 0.0
    %869 = vmatpush2.msra.mxu0 0.0
    %870 = vmatprep.subr.mxu0 0.0
    %871 = vmatpush2.msra.mxu0 0.0
    %872 = vmatprep.mubr.f32.mxu0 0.0
    %873 = vmatmul.mubr.f32.gmra.mxu0 %v801
    %v874 = vpop.f32.mrf.mxu0
    %v875 = vadd.f32 0.0, %v874
    %v876 = vpop.f32.mrf.mxu0
    %v877 = vadd.f32 0.0, %v876
    %878 = vdwg.mxu0
    %879 = vmatprep.subr.mxu0 %v99
    %880 = vmatpush1.msra.mxu0 %v98
    %881 = vmatprep.subr.mxu0 %v95
    %882 = vmatpush1.msra.mxu0 %v94
    %883 = vmatprep.subr.mxu0 %v91
    %884 = vmatpush1.msra.mxu0 %v90
    %885 = vmatprep.subr.mxu0 %v87
    %886 = vmatpush1.msra.mxu0 %v86
    %887 = vmatprep.subr.mxu0 %v83
    %888 = vmatpush1.msra.mxu0 %v82
    %889 = vmatprep.subr.mxu0 %v79
    %890 = vmatpush1.msra.mxu0 %v78
    %891 = vmatprep.subr.mxu0 %v75
    %892 = vmatpush1.msra.mxu0 %v74
    %893 = vmatprep.subr.mxu0 %v71
    %894 = vmatpush1.msra.mxu0 %v70
    %895 = vmatprep.subr.mxu0 %v67
    %896 = vmatpush1.msra.mxu0 %v66
    %897 = vmatprep.subr.mxu0 %v63
    %898 = vmatpush1.msra.mxu0 %v62
    %899 = vmatprep.subr.mxu0 %v59
    %900 = vmatpush1.msra.mxu0 %v58
    %901 = vmatprep.subr.mxu0 %v55
    %902 = vmatpush1.msra.mxu0 %v54
    %903 = vmatprep.subr.mxu0 %v51
    %904 = vmatpush1.msra.mxu0 %v50
    %905 = vmatprep.subr.mxu0 %v47
    %906 = vmatpush1.msra.mxu0 %v46
    %907 = vmatprep.subr.mxu0 %v43
    %908 = vmatpush1.msra.mxu0 %v42
    %909 = vmatprep.subr.mxu0 %v39
    %910 = vmatpush1.msra.mxu0 %v38
    %911 = vmatprep.subr.mxu0 0.0
    %912 = vmatpush2.msra.mxu0 0.0
    %913 = vmatprep.subr.mxu0 0.0
    %914 = vmatpush2.msra.mxu0 0.0
    %915 = vmatprep.subr.mxu0 0.0
    %916 = vmatpush2.msra.mxu0 0.0
    %917 = vmatprep.subr.mxu0 0.0
    %918 = vmatpush2.msra.mxu0 0.0
    %919 = vmatprep.subr.mxu0 0.0
    %920 = vmatpush2.msra.mxu0 0.0
    %921 = vmatprep.subr.mxu0 0.0
    %922 = vmatpush2.msra.mxu0 0.0
    %923 = vmatprep.subr.mxu0 0.0
    %924 = vmatpush2.msra.mxu0 0.0
    %925 = vmatprep.subr.mxu0 0.0
    %926 = vmatpush2.msra.mxu0 0.0
    %927 = vmatprep.subr.mxu0 0.0
    %928 = vmatpush2.msra.mxu0 0.0
    %929 = vmatprep.subr.mxu0 0.0
    %930 = vmatpush2.msra.mxu0 0.0
    %931 = vmatprep.subr.mxu0 0.0
    %932 = vmatpush2.msra.mxu0 0.0
    %933 = vmatprep.subr.mxu0 0.0
    %934 = vmatpush2.msra.mxu0 0.0
    %935 = vmatprep.subr.mxu0 0.0
    %936 = vmatpush2.msra.mxu0 0.0
    %937 = vmatprep.subr.mxu0 0.0
    %938 = vmatpush2.msra.mxu0 0.0
    %939 = vmatprep.subr.mxu0 0.0
    %940 = vmatpush2.msra.mxu0 0.0
    %941 = vmatprep.subr.mxu0 0.0
    %942 = vmatpush2.msra.mxu0 0.0
    %943 = vmatprep.mubr.f32.mxu0 0.0
    %944 = vmatmul.mubr.f32.gmra.mxu0 %v801
    %v945 = vpop.f32.mrf.mxu0
    %v946 = vadd.f32 0.0, %v945
    %v947 = vpop.f32.mrf.mxu0
    %v948 = vadd.f32 0.0, %v947
    %949 = vdwg.mxu0
    %v950 = vadd.f32 %v804, %v875
    %v951 = vadd.f32 %v805, %v877
    %v952 = vadd.f32 %v806, %v946
    %v953 = vadd.f32 %v807, %v948
    %v954 = vsub.f32 0.0, %v950
    %v955 = vmul.f32 %v954, 1.442695
    %v956 = vpow.pop %v955
    %v957 = vadd.f32 %v956, 1.0
    %v958 = vrcp.pop %v957
    %v959 = vmul.f32 1.0, %v958
    %v960 = vsub.f32 0.0, %v951
    %v961 = vmul.f32 %v960, 1.442695
    %v962 = vpow.pop %v961
    %v963 = vadd.f32 %v962, 1.0
    %v964 = vrcp.pop %v963
    %v965 = vmul.f32 1.0, %v964
    %v966 = vtanh.pop %v952
    %v967 = vsub.f32 0.0, %v953
    %v968 = vmul.f32 %v967, 1.442695
    %v969 = vpow.pop %v968
    %v970 = vadd.f32 %v969, 1.0
    %v971 = vrcp.pop %v970
    %v972 = vmul.f32 1.0, %v971
    %v973 = vmul.f32 %v965, %v799
    %v974 = vmul.f32 %v959, %v966
    %v975 = vadd.f32 %v973, %v974
    %v976 = vtanh.pop %v975
    %v977 = vmul.f32 %v972, %v976
    %v978 = vadd.f32 %v802, %v977
    %s979 = scalar_lea.vmem %s0, 160
    %v980 = vld [vmem:[%s979] sm:$0xff]
    %v981 = vld [vmem:[%s979 + $0x8] sm:$0xff]
    %v982 = vld [vmem:[%s979 + $0x10] sm:$0xff]
    %v983 = vld [vmem:[%s979 + $0x18] sm:$0xff]
    %984 = vmatprep.subr.mxu0 %v97
    %985 = vmatpush1.msra.mxu0 %v96
    %986 = vmatprep.subr.mxu0 %v93
    %987 = vmatpush1.msra.mxu0 %v92
    %988 = vmatprep.subr.mxu0 %v89
    %989 = vmatpush1.msra.mxu0 %v88
    %990 = vmatprep.subr.mxu0 %v85
    %991 = vmatpush1.msra.mxu0 %v84
    %992 = vmatprep.subr.mxu0 %v81
    %993 = vmatpush1.msra.mxu0 %v80
    %994 = vmatprep.subr.mxu0 %v77
    %995 = vmatpush1.msra.mxu0 %v76
    %996 = vmatprep.subr.mxu0 %v73
    %997 = vmatpush1.msra.mxu0 %v72
    %998 = vmatprep.subr.mxu0 %v69
    %999 = vmatpush1.msra.mxu0 %v68
    %1000 = vmatprep.subr.mxu0 %v65
    %1001 = vmatpush1.msra.mxu0 %v64
    %1002 = vmatprep.subr.mxu0 %v61
    %1003 = vmatpush1.msra.mxu0 %v60
    %1004 = vmatprep.subr.mxu0 %v57
    %1005 = vmatpush1.msra.mxu0 %v56
    %1006 = vmatprep.subr.mxu0 %v53
    %1007 = vmatpush1.msra.mxu0 %v52
    %1008 = vmatprep.subr.mxu0 %v49
    %1009 = vmatpush1.msra.mxu0 %v48
    %1010 = vmatprep.subr.mxu0 %v45
    %1011 = vmatpush1.msra.mxu0 %v44
    %1012 = vmatprep.subr.mxu0 %v41
    %1013 = vmatpush1.msra.mxu0 %v40
    %1014 = vmatprep.subr.mxu0 %v37
    %1015 = vmatpush1.msra.mxu0 %v36
    %1016 = vmatprep.subr.mxu0 0.0
    %1017 = vmatpush2.msra.mxu0 0.0
    %1018 = vmatprep.subr.mxu0 0.0
    %1019 = vmatpush2.msra.mxu0 0.0
    %1020 = vmatprep.subr.mxu0 0.0
    %1021 = vmatpush2.msra.mxu0 0.0
    %1022 = vmatprep.subr.mxu0 0.0
    %1023 = vmatpush2.msra.mxu0 0.0
    %1024 = vmatprep.subr.mxu0 0.0
    %1025 = vmatpush2.msra.mxu0 0.0
    %1026 = vmatprep.subr.mxu0 0.0
    %1027 = vmatpush2.msra.mxu0 0.0
    %1028 = vmatprep.subr.mxu0 0.0
    %1029 = vmatpush2.msra.mxu0 0.0
    %1030 = vmatprep.subr.mxu0 0.0
    %1031 = vmatpush2.msra.mxu0 0.0
    %1032 = vmatprep.subr.mxu0 0.0
    %1033 = vmatpush2.msra.mxu0 0.0
    %1034 = vmatprep.subr.mxu0 0.0
    %1035 = vmatpush2.msra.mxu0 0.0
    %1036 = vmatprep.subr.mxu0 0.0
    %1037 = vmatpush2.msra.mxu0 0.0
    %1038 = vmatprep.subr.mxu0 0.0
    %1039 = vmatpush2.msra.mxu0 0.0
    %1040 = vmatprep.subr.mxu0 0.0
    %1041 = vmatpush2.msra.mxu0 0.0
    %1042 = vmatprep.subr.mxu0 0.0
    %1043 = vmatpush2.msra.mxu0 0.0
    %1044 = vmatprep.subr.mxu0 0.0
    %1045 = vmatpush2.msra.mxu0 0.0
    %1046 = vmatprep.subr.mxu0 0.0
    %1047 = vmatpush2.msra.mxu0 0.0
    %1048 = vmatprep.mubr.f32.mxu0 0.0
    %1049 = vmatmul.mubr.f32.gmra.mxu0 %v977
    %v1050 = vpop.f32.mrf.mxu0
    %v1051 = vadd.f32 0.0, %v1050
    %v1052 = vpop.f32.mrf.mxu0
    %v1053 = vadd.f32 0.0, %v1052
    %1054 = vdwg.mxu0
    %1055 = vmatprep.subr.mxu0 %v99
    %1056 = vmatpush1.msra.mxu0 %v98
    %1057 = vmatprep.subr.mxu0 %v95
    %1058 = vmatpush1.msra.mxu0 %v94
    %1059 = vmatprep.subr.mxu0 %v91
    %1060 = vmatpush1.msra.mxu0 %v90
    %1061 = vmatprep.subr.mxu0 %v87
    %1062 = vmatpush1.msra.mxu0 %v86
    %1063 = vmatprep.subr.mxu0 %v83
    %1064 = vmatpush1.msra.mxu0 %v82
    %1065 = vmatprep.subr.mxu0 %v79
    %1066 = vmatpush1.msra.mxu0 %v78
    %1067 = vmatprep.subr.mxu0 %v75
    %1068 = vmatpush1.msra.mxu0 %v74
    %1069 = vmatprep.subr.mxu0 %v71
    %1070 = vmatpush1.msra.mxu0 %v70
    %1071 = vmatprep.subr.mxu0 %v67
    %1072 = vmatpush1.msra.mxu0 %v66
    %1073 = vmatprep.subr.mxu0 %v63
    %1074 = vmatpush1.msra.mxu0 %v62
    %1075 = vmatprep.subr.mxu0 %v59
    %1076 = vmatpush1.msra.mxu0 %v58
    %1077 = vmatprep.subr.mxu0 %v55
    %1078 = vmatpush1.msra.mxu0 %v54
    %1079 = vmatprep.subr.mxu0 %v51
    %1080 = vmatpush1.msra.mxu0 %v50
    %1081 = vmatprep.subr.mxu0 %v47
    %1082 = vmatpush1.msra.mxu0 %v46
    %1083 = vmatprep.subr.mxu0 %v43
    %1084 = vmatpush1.msra.mxu0 %v42
    %1085 = vmatprep.subr.mxu0 %v39
    %1086 = vmatpush1.msra.mxu0 %v38
    %1087 = vmatprep.subr.mxu0 0.0
    %1088 = vmatpush2.msra.mxu0 0.0
    %1089 = vmatprep.subr.mxu0 0.0
    %1090 = vmatpush2.msra.mxu0 0.0
    %1091 = vmatprep.subr.mxu0 0.0
    %1092 = vmatpush2.msra.mxu0 0.0
    %1093 = vmatprep.subr.mxu0 0.0
    %1094 = vmatpush2.msra.mxu0 0.0
    %1095 = vmatprep.subr.mxu0 0.0
    %1096 = vmatpush2.msra.mxu0 0.0
    %1097 = vmatprep.subr.mxu0 0.0
    %1098 = vmatpush2.msra.mxu0 0.0
    %1099 = vmatprep.subr.mxu0 0.0
    %1100 = vmatpush2.msra.mxu0 0.0
    %1101 = vmatprep.subr.mxu0 0.0
    %1102 = vmatpush2.msra.mxu0 0.0
    %1103 = vmatprep.subr.mxu0 0.0
    %1104 = vmatpush2.msra.mxu0 0.0
    %1105 = vmatprep.subr.mxu0 0.0
    %1106 = vmatpush2.msra.mxu0 0.0
    %1107 = vmatprep.subr.mxu0 0.0
    %1108 = vmatpush2.msra.mxu0 0.0
    %1109 = vmatprep.subr.mxu0 0.0
    %1110 = vmatpush2.msra.mxu0 0.0
    %1111 = vmatprep.subr.mxu0 0.0
    %1112 = vmatpush2.msra.mxu0 0.0
    %1113 = vmatprep.subr.mxu0 0.0
    %1114 = vmatpush2.msra.mxu0 0.0
    %1115 = vmatprep.subr.mxu0 0.0
    %1116 = vmatpush2.msra.mxu0 0.0
    %1117 = vmatprep.subr.mxu0 0.0
    %1118 = vmatpush2.msra.mxu0 0.0
    %1119 = vmatprep.mubr.f32.mxu0 0.0
    %1120 = vmatmul.mubr.f32.gmra.mxu0 %v977
    %v1121 = vpop.f32.mrf.mxu0
    %v1122 = vadd.f32 0.0, %v1121
    %v1123 = vpop.f32.mrf.mxu0
    %v1124 = vadd.f32 0.0, %v1123
    %1125 = vdwg.mxu0
    %v1126 = vadd.f32 %v980, %v1051
    %v1127 = vadd.f32 %v981, %v1053
    %v1128 = vadd.f32 %v982, %v1122
    %v1129 = vadd.f32 %v983, %v1124
    %v1130 = vsub.f32 0.0, %v1126
    %v1131 = vmul.f32 %v1130, 1.442695
    %v1132 = vpow.pop %v1131
    %v1133 = vadd.f32 %v1132, 1.0
    %v1134 = vrcp.pop %v1133
    %v1135 = vmul.f32 1.0, %v1134
    %v1136 = vsub.f32 0.0, %v1127
    %v1137 = vmul.f32 %v1136, 1.442695
    %v1138 = vpow.pop %v1137
    %v1139 = vadd.f32 %v1138, 1.0
    %v1140 = vrcp.pop %v1139
    %v1141 = vmul.f32 1.0, %v1140
    %v1142 = vtanh.pop %v1128
    %v1143 = vsub.f32 0.0, %v1129
    %v1144 = vmul.f32 %v1143, 1.442695
    %v1145 = vpow.pop %v1144
    %v1146 = vadd.f32 %v1145, 1.0
    %v1147 = vrcp.pop %v1146
    %v1148 = vmul.f32 1.0, %v1147
    %v1149 = vmul.f32 %v1141, %v975
    %v1150 = vmul.f32 %v1135, %v1142
    %v1151 = vadd.f32 %v1149, %v1150
    %v1152 = vtanh.pop %v1151
    %v1153 = vmul.f32 %v1148, %v1152
    %v1154 = vadd.f32 %v978, %v1153
    %s1155 = scalar_lea.vmem %s0, 192
    %v1156 = vld [vmem:[%s1155] sm:$0xff]
    %v1157 = vld [vmem:[%s1155 + $0x8] sm:$0xff]
    %v1158 = vld [vmem:[%s1155 + $0x10] sm:$0xff]
    %v1159 = vld [vmem:[%s1155 + $0x18] sm:$0xff]
    %1160 = vmatprep.subr.mxu0 %v97
    %1161 = vmatpush1.msra.mxu0 %v96
    %1162 = vmatprep.subr.mxu0 %v93
    %1163 = vmatpush1.msra.mxu0 %v92
    %1164 = vmatprep.subr.mxu0 %v89
    %1165 = vmatpush1.msra.mxu0 %v88
    %1166 = vmatprep.subr.mxu0 %v85
    %1167 = vmatpush1.msra.mxu0 %v84
    %1168 = vmatprep.subr.mxu0 %v81
    %1169 = vmatpush1.msra.mxu0 %v80
    %1170 = vmatprep.subr.mxu0 %v77
    %1171 = vmatpush1.msra.mxu0 %v76
    %1172 = vmatprep.subr.mxu0 %v73
    %1173 = vmatpush1.msra.mxu0 %v72
    %1174 = vmatprep.subr.mxu0 %v69
    %1175 = vmatpush1.msra.mxu0 %v68
    %1176 = vmatprep.subr.mxu0 %v65
    %1177 = vmatpush1.msra.mxu0 %v64
    %1178 = vmatprep.subr.mxu0 %v61
    %1179 = vmatpush1.msra.mxu0 %v60
    %1180 = vmatprep.subr.mxu0 %v57
    %1181 = vmatpush1.msra.mxu0 %v56
    %1182 = vmatprep.subr.mxu0 %v53
    %1183 = vmatpush1.msra.mxu0 %v52
    %1184 = vmatprep.subr.mxu0 %v49
    %1185 = vmatpush1.msra.mxu0 %v48
    %1186 = vmatprep.subr.mxu0 %v45
    %1187 = vmatpush1.msra.mxu0 %v44
    %1188 = vmatprep.subr.mxu0 %v41
    %1189 = vmatpush1.msra.mxu0 %v40
    %1190 = vmatprep.subr.mxu0 %v37
    %1191 = vmatpush1.msra.mxu0 %v36
    %1192 = vmatprep.subr.mxu0 0.0
    %1193 = vmatpush2.msra.mxu0 0.0
    %1194 = vmatprep.subr.mxu0 0.0
    %1195 = vmatpush2.msra.mxu0 0.0
    %1196 = vmatprep.subr.mxu0 0.0
    %1197 = vmatpush2.msra.mxu0 0.0
    %1198 = vmatprep.subr.mxu0 0.0
    %1199 = vmatpush2.msra.mxu0 0.0
    %1200 = vmatprep.subr.mxu0 0.0
    %1201 = vmatpush2.msra.mxu0 0.0
    %1202 = vmatprep.subr.mxu0 0.0
    %1203 = vmatpush2.msra.mxu0 0.0
    %1204 = vmatprep.subr.mxu0 0.0
    %1205 = vmatpush2.msra.mxu0 0.0
    %1206 = vmatprep.subr.mxu0 0.0
    %1207 = vmatpush2.msra.mxu0 0.0
    %1208 = vmatprep.subr.mxu0 0.0
    %1209 = vmatpush2.msra.mxu0 0.0
    %1210 = vmatprep.subr.mxu0 0.0
    %1211 = vmatpush2.msra.mxu0 0.0
    %1212 = vmatprep.subr.mxu0 0.0
    %1213 = vmatpush2.msra.mxu0 0.0
    %1214 = vmatprep.subr.mxu0 0.0
    %1215 = vmatpush2.msra.mxu0 0.0
    %1216 = vmatprep.subr.mxu0 0.0
    %1217 = vmatpush2.msra.mxu0 0.0
    %1218 = vmatprep.subr.mxu0 0.0
    %1219 = vmatpush2.msra.mxu0 0.0
    %1220 = vmatprep.subr.mxu0 0.0
    %1221 = vmatpush2.msra.mxu0 0.0
    %1222 = vmatprep.subr.mxu0 0.0
    %1223 = vmatpush2.msra.mxu0 0.0
    %1224 = vmatprep.mubr.f32.mxu0 0.0
    %1225 = vmatmul.mubr.f32.gmra.mxu0 %v1153
    %v1226 = vpop.f32.mrf.mxu0
    %v1227 = vadd.f32 0.0, %v1226
    %v1228 = vpop.f32.mrf.mxu0
    %v1229 = vadd.f32 0.0, %v1228
    %1230 = vdwg.mxu0
    %1231 = vmatprep.subr.mxu0 %v99
    %1232 = vmatpush1.msra.mxu0 %v98
    %1233 = vmatprep.subr.mxu0 %v95
    %1234 = vmatpush1.msra.mxu0 %v94
    %1235 = vmatprep.subr.mxu0 %v91
    %1236 = vmatpush1.msra.mxu0 %v90
    %1237 = vmatprep.subr.mxu0 %v87
    %1238 = vmatpush1.msra.mxu0 %v86
    %1239 = vmatprep.subr.mxu0 %v83
    %1240 = vmatpush1.msra.mxu0 %v82
    %1241 = vmatprep.subr.mxu0 %v79
    %1242 = vmatpush1.msra.mxu0 %v78
    %1243 = vmatprep.subr.mxu0 %v75
    %1244 = vmatpush1.msra.mxu0 %v74
    %1245 = vmatprep.subr.mxu0 %v71
    %1246 = vmatpush1.msra.mxu0 %v70
    %1247 = vmatprep.subr.mxu0 %v67
    %1248 = vmatpush1.msra.mxu0 %v66
    %1249 = vmatprep.subr.mxu0 %v63
    %1250 = vmatpush1.msra.mxu0 %v62
    %1251 = vmatprep.subr.mxu0 %v59
    %1252 = vmatpush1.msra.mxu0 %v58
    %1253 = vmatprep.subr.mxu0 %v55
    %1254 = vmatpush1.msra.mxu0 %v54
    %1255 = vmatprep.subr.mxu0 %v51
    %1256 = vmatpush1.msra.mxu0 %v50
    %1257 = vmatprep.subr.mxu0 %v47
    %1258 = vmatpush1.msra.mxu0 %v46
    %1259 = vmatprep.subr.mxu0 %v43
    %1260 = vmatpush1.msra.mxu0 %v42
    %1261 = vmatprep.subr.mxu0 %v39
    %1262 = vmatpush1.msra.mxu0 %v38
    %1263 = vmatprep.subr.mxu0 0.0
    %1264 = vmatpush2.msra.mxu0 0.0
    %1265 = vmatprep.subr.mxu0 0.0
    %1266 = vmatpush2.msra.mxu0 0.0
    %1267 = vmatprep.subr.mxu0 0.0
    %1268 = vmatpush2.msra.mxu0 0.0
    %1269 = vmatprep.subr.mxu0 0.0
    %1270 = vmatpush2.msra.mxu0 0.0
    %1271 = vmatprep.subr.mxu0 0.0
    %1272 = vmatpush2.msra.mxu0 0.0
    %1273 = vmatprep.subr.mxu0 0.0
    %1274 = vmatpush2.msra.mxu0 0.0
    %1275 = vmatprep.subr.mxu0 0.0
    %1276 = vmatpush2.msra.mxu0 0.0
    %1277 = vmatprep.subr.mxu0 0.0
    %1278 = vmatpush2.msra.mxu0 0.0
    %1279 = vmatprep.subr.mxu0 0.0
    %1280 = vmatpush2.msra.mxu0 0.0
    %1281 = vmatprep.subr.mxu0 0.0
    %1282 = vmatpush2.msra.mxu0 0.0
    %1283 = vmatprep.subr.mxu0 0.0
    %1284 = vmatpush2.msra.mxu0 0.0
    %1285 = vmatprep.subr.mxu0 0.0
    %1286 = vmatpush2.msra.mxu0 0.0
    %1287 = vmatprep.subr.mxu0 0.0
    %1288 = vmatpush2.msra.mxu0 0.0
    %1289 = vmatprep.subr.mxu0 0.0
    %1290 = vmatpush2.msra.mxu0 0.0
    %1291 = vmatprep.subr.mxu0 0.0
    %1292 = vmatpush2.msra.mxu0 0.0
    %1293 = vmatprep.subr.mxu0 0.0
    %1294 = vmatpush2.msra.mxu0 0.0
    %1295 = vmatprep.mubr.f32.mxu0 0.0
    %1296 = vmatmul.mubr.f32.gmra.mxu0 %v1153
    %v1297 = vpop.f32.mrf.mxu0
    %v1298 = vadd.f32 0.0, %v1297
    %v1299 = vpop.f32.mrf.mxu0
    %v1300 = vadd.f32 0.0, %v1299
    %1301 = vdwg.mxu0
    %v1302 = vadd.f32 %v1156, %v1227
    %v1303 = vadd.f32 %v1157, %v1229
    %v1304 = vadd.f32 %v1158, %v1298
    %v1305 = vadd.f32 %v1159, %v1300
    %v1306 = vsub.f32 0.0, %v1302
    %v1307 = vmul.f32 %v1306, 1.442695
    %v1308 = vpow.pop %v1307
    %v1309 = vadd.f32 %v1308, 1.0
    %v1310 = vrcp.pop %v1309
    %v1311 = vmul.f32 1.0, %v1310
    %v1312 = vsub.f32 0.0, %v1303
    %v1313 = vmul.f32 %v1312, 1.442695
    %v1314 = vpow.pop %v1313
    %v1315 = vadd.f32 %v1314, 1.0
    %v1316 = vrcp.pop %v1315
    %v1317 = vmul.f32 1.0, %v1316
    %v1318 = vtanh.pop %v1304
    %v1319 = vsub.f32 0.0, %v1305
    %v1320 = vmul.f32 %v1319, 1.442695
    %v1321 = vpow.pop %v1320
    %v1322 = vadd.f32 %v1321, 1.0
    %v1323 = vrcp.pop %v1322
    %v1324 = vmul.f32 1.0, %v1323
    %v1325 = vmul.f32 %v1317, %v1151
    %v1326 = vmul.f32 %v1311, %v1318
    %v1327 = vadd.f32 %v1325, %v1326
    %v1328 = vtanh.pop %v1327
    %v1329 = vmul.f32 %v1324, %v1328
    %v1330 = vadd.f32 %v1154, %v1329
    %s1331 = scalar_lea.vmem %s0, 224
    %v1332 = vld [vmem:[%s1331] sm:$0xff]
    %v1333 = vld [vmem:[%s1331 + $0x8] sm:$0xff]
    %v1334 = vld [vmem:[%s1331 + $0x10] sm:$0xff]
    %v1335 = vld [vmem:[%s1331 + $0x18] sm:$0xff]
    %1336 = vmatprep.subr.mxu0 %v97
    %1337 = vmatpush1.msra.mxu0 %v96
    %1338 = vmatprep.subr.mxu0 %v93
    %1339 = vmatpush1.msra.mxu0 %v92
    %1340 = vmatprep.subr.mxu0 %v89
    %1341 = vmatpush1.msra.mxu0 %v88
    %1342 = vmatprep.subr.mxu0 %v85
    %1343 = vmatpush1.msra.mxu0 %v84
    %1344 = vmatprep.subr.mxu0 %v81
    %1345 = vmatpush1.msra.mxu0 %v80
    %1346 = vmatprep.subr.mxu0 %v77
    %1347 = vmatpush1.msra.mxu0 %v76
    %1348 = vmatprep.subr.mxu0 %v73
    %1349 = vmatpush1.msra.mxu0 %v72
    %1350 = vmatprep.subr.mxu0 %v69
    %1351 = vmatpush1.msra.mxu0 %v68
    %1352 = vmatprep.subr.mxu0 %v65
    %1353 = vmatpush1.msra.mxu0 %v64
    %1354 = vmatprep.subr.mxu0 %v61
    %1355 = vmatpush1.msra.mxu0 %v60
    %1356 = vmatprep.subr.mxu0 %v57
    %1357 = vmatpush1.msra.mxu0 %v56
    %1358 = vmatprep.subr.mxu0 %v53
    %1359 = vmatpush1.msra.mxu0 %v52
    %1360 = vmatprep.subr.mxu0 %v49
    %1361 = vmatpush1.msra.mxu0 %v48
    %1362 = vmatprep.subr.mxu0 %v45
    %1363 = vmatpush1.msra.mxu0 %v44
    %1364 = vmatprep.subr.mxu0 %v41
    %1365 = vmatpush1.msra.mxu0 %v40
    %1366 = vmatprep.subr.mxu0 %v37
    %1367 = vmatpush1.msra.mxu0 %v36
    %1368 = vmatprep.subr.mxu0 0.0
    %1369 = vmatpush2.msra.mxu0 0.0
    %1370 = vmatprep.subr.mxu0 0.0
    %1371 = vmatpush2.msra.mxu0 0.0
    %1372 = vmatprep.subr.mxu0 0.0
    %1373 = vmatpush2.msra.mxu0 0.0
    %1374 = vmatprep.subr.mxu0 0.0
    %1375 = vmatpush2.msra.mxu0 0.0
    %1376 = vmatprep.subr.mxu0 0.0
    %1377 = vmatpush2.msra.mxu0 0.0
    %1378 = vmatprep.subr.mxu0 0.0
    %1379 = vmatpush2.msra.mxu0 0.0
    %1380 = vmatprep.subr.mxu0 0.0
    %1381 = vmatpush2.msra.mxu0 0.0
    %1382 = vmatprep.subr.mxu0 0.0
    %1383 = vmatpush2.msra.mxu0 0.0
    %1384 = vmatprep.subr.mxu0 0.0
    %1385 = vmatpush2.msra.mxu0 0.0
    %1386 = vmatprep.subr.mxu0 0.0
    %1387 = vmatpush2.msra.mxu0 0.0
    %1388 = vmatprep.subr.mxu0 0.0
    %1389 = vmatpush2.msra.mxu0 0.0
    %1390 = vmatprep.subr.mxu0 0.0
    %1391 = vmatpush2.msra.mxu0 0.0
    %1392 = vmatprep.subr.mxu0 0.0
    %1393 = vmatpush2.msra.mxu0 0.0
    %1394 = vmatprep.subr.mxu0 0.0
    %1395 = vmatpush2.msra.mxu0 0.0
    %1396 = vmatprep.subr.mxu0 0.0
    %1397 = vmatpush2.msra.mxu0 0.0
    %1398 = vmatprep.subr.mxu0 0.0
    %1399 = vmatpush2.msra.mxu0 0.0
    %1400 = vmatprep.mubr.f32.mxu0 0.0
    %1401 = vmatmul.mubr.f32.gmra.mxu0 %v1329
    %v1402 = vpop.f32.mrf.mxu0
    %v1403 = vadd.f32 0.0, %v1402
    %v1404 = vpop.f32.mrf.mxu0
    %v1405 = vadd.f32 0.0, %v1404
    %1406 = vdwg.mxu0
    %1407 = vmatprep.subr.mxu0 %v99
    %1408 = vmatpush1.msra.mxu0 %v98
    %1409 = vmatprep.subr.mxu0 %v95
    %1410 = vmatpush1.msra.mxu0 %v94
    %1411 = vmatprep.subr.mxu0 %v91
    %1412 = vmatpush1.msra.mxu0 %v90
    %1413 = vmatprep.subr.mxu0 %v87
    %1414 = vmatpush1.msra.mxu0 %v86
    %1415 = vmatprep.subr.mxu0 %v83
    %1416 = vmatpush1.msra.mxu0 %v82
    %1417 = vmatprep.subr.mxu0 %v79
    %1418 = vmatpush1.msra.mxu0 %v78
    %1419 = vmatprep.subr.mxu0 %v75
    %1420 = vmatpush1.msra.mxu0 %v74
    %1421 = vmatprep.subr.mxu0 %v71
    %1422 = vmatpush1.msra.mxu0 %v70
    %1423 = vmatprep.subr.mxu0 %v67
    %1424 = vmatpush1.msra.mxu0 %v66
    %1425 = vmatprep.subr.mxu0 %v63
    %1426 = vmatpush1.msra.mxu0 %v62
    %1427 = vmatprep.subr.mxu0 %v59
    %1428 = vmatpush1.msra.mxu0 %v58
    %1429 = vmatprep.subr.mxu0 %v55
    %1430 = vmatpush1.msra.mxu0 %v54
    %1431 = vmatprep.subr.mxu0 %v51
    %1432 = vmatpush1.msra.mxu0 %v50
    %1433 = vmatprep.subr.mxu0 %v47
    %1434 = vmatpush1.msra.mxu0 %v46
    %1435 = vmatprep.subr.mxu0 %v43
    %1436 = vmatpush1.msra.mxu0 %v42
    %1437 = vmatprep.subr.mxu0 %v39
    %1438 = vmatpush1.msra.mxu0 %v38
    %1439 = vmatprep.subr.mxu0 0.0
    %1440 = vmatpush2.msra.mxu0 0.0
    %1441 = vmatprep.subr.mxu0 0.0
    %1442 = vmatpush2.msra.mxu0 0.0
    %1443 = vmatprep.subr.mxu0 0.0
    %1444 = vmatpush2.msra.mxu0 0.0
    %1445 = vmatprep.subr.mxu0 0.0
    %1446 = vmatpush2.msra.mxu0 0.0
    %1447 = vmatprep.subr.mxu0 0.0
    %1448 = vmatpush2.msra.mxu0 0.0
    %1449 = vmatprep.subr.mxu0 0.0
    %1450 = vmatpush2.msra.mxu0 0.0
    %1451 = vmatprep.subr.mxu0 0.0
    %1452 = vmatpush2.msra.mxu0 0.0
    %1453 = vmatprep.subr.mxu0 0.0
    %1454 = vmatpush2.msra.mxu0 0.0
    %1455 = vmatprep.subr.mxu0 0.0
    %1456 = vmatpush2.msra.mxu0 0.0
    %1457 = vmatprep.subr.mxu0 0.0
    %1458 = vmatpush2.msra.mxu0 0.0
    %1459 = vmatprep.subr.mxu0 0.0
    %1460 = vmatpush2.msra.mxu0 0.0
    %1461 = vmatprep.subr.mxu0 0.0
    %1462 = vmatpush2.msra.mxu0 0.0
    %1463 = vmatprep.subr.mxu0 0.0
    %1464 = vmatpush2.msra.mxu0 0.0
    %1465 = vmatprep.subr.mxu0 0.0
    %1466 = vmatpush2.msra.mxu0 0.0
    %1467 = vmatprep.subr.mxu0 0.0
    %1468 = vmatpush2.msra.mxu0 0.0
    %1469 = vmatprep.subr.mxu0 0.0
    %1470 = vmatpush2.msra.mxu0 0.0
    %1471 = vmatprep.mubr.f32.mxu0 0.0
    %1472 = vmatmul.mubr.f32.gmra.mxu0 %v1329
    %v1473 = vpop.f32.mrf.mxu0
    %v1474 = vadd.f32 0.0, %v1473
    %v1475 = vpop.f32.mrf.mxu0
    %v1476 = vadd.f32 0.0, %v1475
    %1477 = vdwg.mxu0
    %v1478 = vadd.f32 %v1332, %v1403
    %v1479 = vadd.f32 %v1333, %v1405
    %v1480 = vadd.f32 %v1334, %v1474
    %v1481 = vadd.f32 %v1335, %v1476
    %v1482 = vsub.f32 0.0, %v1478
    %v1483 = vmul.f32 %v1482, 1.442695
    %v1484 = vpow.pop %v1483
    %v1485 = vadd.f32 %v1484, 1.0
    %v1486 = vrcp.pop %v1485
    %v1487 = vmul.f32 1.0, %v1486
    %v1488 = vsub.f32 0.0, %v1479
    %v1489 = vmul.f32 %v1488, 1.442695
    %v1490 = vpow.pop %v1489
    %v1491 = vadd.f32 %v1490, 1.0
    %v1492 = vrcp.pop %v1491
    %v1493 = vmul.f32 1.0, %v1492
    %v1494 = vtanh.pop %v1480
    %v1495 = vsub.f32 0.0, %v1481
    %v1496 = vmul.f32 %v1495, 1.442695
    %v1497 = vpow.pop %v1496
    %v1498 = vadd.f32 %v1497, 1.0
    %v1499 = vrcp.pop %v1498
    %v1500 = vmul.f32 1.0, %v1499
    %v1501 = vmul.f32 %v1493, %v1327
    %v1502 = vmul.f32 %v1487, %v1494
    %v1503 = vadd.f32 %v1501, %v1502
    %v1504 = vtanh.pop %v1503
    %v1505 = vmul.f32 %v1500, %v1504
    %v1506 = vadd.f32 %v1330, %v1505
    %v1507 = vmul.f32 %v1506, 0.125
    %v1508 = vld [vmem:[%s2] sm:$0xff]
    %v1509 = vld [vmem:[%s2 + $0x8] sm:$0xff]
    %v1510 = vld [vmem:[%s2 + $0x10] sm:$0xff]
    %v1511 = vld [vmem:[%s2 + $0x18] sm:$0xff]
    %v1512 = vld [vmem:[%s2 + $0x20] sm:$0xff]
    %v1513 = vld [vmem:[%s2 + $0x28] sm:$0xff]
    %v1514 = vld [vmem:[%s2 + $0x30] sm:$0xff]
    %v1515 = vld [vmem:[%s2 + $0x38] sm:$0xff]
    %v1516 = vld [vmem:[%s2 + $0x40] sm:$0xff]
    %v1517 = vld [vmem:[%s2 + $0x48] sm:$0xff]
    %v1518 = vld [vmem:[%s2 + $0x50] sm:$0xff]
    %v1519 = vld [vmem:[%s2 + $0x58] sm:$0xff]
    %v1520 = vld [vmem:[%s2 + $0x60] sm:$0xff]
    %v1521 = vld [vmem:[%s2 + $0x68] sm:$0xff]
    %v1522 = vld [vmem:[%s2 + $0x70] sm:$0xff]
    %v1523 = vld [vmem:[%s2 + $0x78] sm:$0xff]
    %v1524 = vld [vmem:[%s2 + $0x80] sm:$0xff]
    %v1525 = vld [vmem:[%s2 + $0x88] sm:$0xff]
    %v1526 = vld [vmem:[%s2 + $0x90] sm:$0xff]
    %v1527 = vld [vmem:[%s2 + $0x98] sm:$0xff]
    %v1528 = vld [vmem:[%s2 + $0xa0] sm:$0xff]
    %v1529 = vld [vmem:[%s2 + $0xa8] sm:$0xff]
    %v1530 = vld [vmem:[%s2 + $0xb0] sm:$0xff]
    %v1531 = vld [vmem:[%s2 + $0xb8] sm:$0xff]
    %v1532 = vld [vmem:[%s2 + $0xc0] sm:$0xff]
    %v1533 = vld [vmem:[%s2 + $0xc8] sm:$0xff]
    %v1534 = vld [vmem:[%s2 + $0xd0] sm:$0xff]
    %v1535 = vld [vmem:[%s2 + $0xd8] sm:$0xff]
    %v1536 = vld [vmem:[%s2 + $0xe0] sm:$0xff]
    %v1537 = vld [vmem:[%s2 + $0xe8] sm:$0xff]
    %v1538 = vld [vmem:[%s2 + $0xf0] sm:$0xff]
    %v1539 = vld [vmem:[%s2 + $0xf8] sm:$0xff]
    %v1540 = vld [vmem:[%s3] sm:$0x1]
    %v1542 = vlaneseq
    %v1543 = vshrl.u32 %v1542, 7
    %v1544 = vsub.s32 0, %v1543
    %v1545 = vrot.slane %v1540, %v1544
    %1547 = vmatprep.subr.mxu0 0.0
    %1548 = vmatpush1.msra.mxu0 %v1523
    %1549 = vmatprep.subr.mxu0 0.0
    %1550 = vmatpush1.msra.mxu0 %v1522
    %1551 = vmatprep.subr.mxu0 0.0
    %1552 = vmatpush1.msra.mxu0 %v1521
    %1553 = vmatprep.subr.mxu0 0.0
    %1554 = vmatpush1.msra.mxu0 %v1520
    %1555 = vmatprep.subr.mxu0 0.0
    %1556 = vmatpush1.msra.mxu0 %v1519
    %1557 = vmatprep.subr.mxu0 0.0
    %1558 = vmatpush1.msra.mxu0 %v1518
    %1559 = vmatprep.subr.mxu0 0.0
    %1560 = vmatpush1.msra.mxu0 %v1517
    %1561 = vmatprep.subr.mxu0 0.0
    %1562 = vmatpush1.msra.mxu0 %v1516
    %1563 = vmatprep.subr.mxu0 0.0
    %1564 = vmatpush1.msra.mxu0 %v1515
    %1565 = vmatprep.subr.mxu0 0.0
    %1566 = vmatpush1.msra.mxu0 %v1514
    %1567 = vmatprep.subr.mxu0 0.0
    %1568 = vmatpush1.msra.mxu0 %v1513
    %1569 = vmatprep.subr.mxu0 0.0
    %1570 = vmatpush1.msra.mxu0 %v1512
    %1571 = vmatprep.subr.mxu0 0.0
    %1572 = vmatpush1.msra.mxu0 %v1511
    %1573 = vmatprep.subr.mxu0 0.0
    %1574 = vmatpush1.msra.mxu0 %v1510
    %1575 = vmatprep.subr.mxu0 0.0
    %1576 = vmatpush1.msra.mxu0 %v1509
    %1577 = vmatprep.subr.mxu0 0.0
    %1578 = vmatpush1.msra.mxu0 %v1508
    %1579 = vmatprep.subr.mxu0 0.0
    %1580 = vmatpush2.msra.mxu0 %v1539
    %1581 = vmatprep.subr.mxu0 0.0
    %1582 = vmatpush2.msra.mxu0 %v1538
    %1583 = vmatprep.subr.mxu0 0.0
    %1584 = vmatpush2.msra.mxu0 %v1537
    %1585 = vmatprep.subr.mxu0 0.0
    %1586 = vmatpush2.msra.mxu0 %v1536
    %1587 = vmatprep.subr.mxu0 0.0
    %1588 = vmatpush2.msra.mxu0 %v1535
    %1589 = vmatprep.subr.mxu0 0.0
    %1590 = vmatpush2.msra.mxu0 %v1534
    %1591 = vmatprep.subr.mxu0 0.0
    %1592 = vmatpush2.msra.mxu0 %v1533
    %1593 = vmatprep.subr.mxu0 0.0
    %1594 = vmatpush2.msra.mxu0 %v1532
    %1595 = vmatprep.subr.mxu0 0.0
    %1596 = vmatpush2.msra.mxu0 %v1531
    %1597 = vmatprep.subr.mxu0 0.0
    %1598 = vmatpush2.msra.mxu0 %v1530
    %1599 = vmatprep.subr.mxu0 0.0
    %1600 = vmatpush2.msra.mxu0 %v1529
    %1601 = vmatprep.subr.mxu0 0.0
    %1602 = vmatpush2.msra.mxu0 %v1528
    %1603 = vmatprep.subr.mxu0 0.0
    %1604 = vmatpush2.msra.mxu0 %v1527
    %1605 = vmatprep.subr.mxu0 0.0
    %1606 = vmatpush2.msra.mxu0 %v1526
    %1607 = vmatprep.subr.mxu0 0.0
    %1608 = vmatpush2.msra.mxu0 %v1525
    %1609 = vmatprep.subr.mxu0 0.0
    %1610 = vmatpush2.msra.mxu0 %v1524
    %1611 = vmatprep.mubr.f32.mxu0 %v1507
    %1612 = vmatmul.mubr.f32.gmra.mxu0 %v1507
    %v1613 = vpop.f32.mrf.mxu0
    %v1614 = vadd.f32 %v1545, %v1613
    %v1615 = vpop.f32.mrf.mxu0
    %1616 = vdwg.mxu0
    %v1617 = vmax.f32 %v1614, 0.0
    %v1618 = vld [vmem:[%s5] sm:$0x1]
    %v1619 = vld [vmem:[%s4] sm:$0xff]
    %v1620 = vld [vmem:[%s4 + $0x8] sm:$0xff]
    %v1621 = vld [vmem:[%s4 + $0x10] sm:$0xff]
    %v1622 = vld [vmem:[%s4 + $0x18] sm:$0xff]
    %v1623 = vld [vmem:[%s4 + $0x20] sm:$0xff]
    %v1624 = vld [vmem:[%s4 + $0x28] sm:$0xff]
    %v1625 = vld [vmem:[%s4 + $0x30] sm:$0xff]
    %v1626 = vld [vmem:[%s4 + $0x38] sm:$0xff]
    %v1627 = vld [vmem:[%s4 + $0x40] sm:$0xff]
    %v1628 = vld [vmem:[%s4 + $0x48] sm:$0xff]
    %v1629 = vld [vmem:[%s4 + $0x50] sm:$0xff]
    %v1630 = vld [vmem:[%s4 + $0x58] sm:$0xff]
    %v1631 = vld [vmem:[%s4 + $0x60] sm:$0xff]
    %v1632 = vld [vmem:[%s4 + $0x68] sm:$0xff]
    %v1633 = vld [vmem:[%s4 + $0x70] sm:$0xff]
    %v1634 = vld [vmem:[%s4 + $0x78] sm:$0xff]
    %v1635 = vld [vmem:[%s4 + $0x80] sm:$0xff]
    %v1636 = vld [vmem:[%s4 + $0x88] sm:$0xff]
    %v1637 = vld [vmem:[%s4 + $0x90] sm:$0xff]
    %v1638 = vld [vmem:[%s4 + $0x98] sm:$0xff]
    %v1639 = vld [vmem:[%s4 + $0xa0] sm:$0xff]
    %v1640 = vld [vmem:[%s4 + $0xa8] sm:$0xff]
    %v1641 = vld [vmem:[%s4 + $0xb0] sm:$0xff]
    %v1642 = vld [vmem:[%s4 + $0xb8] sm:$0xff]
    %v1643 = vld [vmem:[%s4 + $0xc0] sm:$0xff]
    %v1644 = vld [vmem:[%s4 + $0xc8] sm:$0xff]
    %v1645 = vld [vmem:[%s4 + $0xd0] sm:$0xff]
    %v1646 = vld [vmem:[%s4 + $0xd8] sm:$0xff]
    %v1647 = vld [vmem:[%s4 + $0xe0] sm:$0xff]
    %v1648 = vld [vmem:[%s4 + $0xe8] sm:$0xff]
    %v1649 = vld [vmem:[%s4 + $0xf0] sm:$0xff]
    %v1650 = vld [vmem:[%s4 + $0xf8] sm:$0xff]
    %v1652 = vlaneseq
    %v1653 = vshrl.u32 %v1652, 7
    %v1654 = vsub.s32 0, %v1653
    %v1655 = vrot.slane %v1618, %v1654
    %1657 = vmatprep.subr.mxu0 0.0
    %1658 = vmatpush1.msra.mxu0 %v1634
    %1659 = vmatprep.subr.mxu0 0.0
    %1660 = vmatpush1.msra.mxu0 %v1633
    %1661 = vmatprep.subr.mxu0 0.0
    %1662 = vmatpush1.msra.mxu0 %v1632
    %1663 = vmatprep.subr.mxu0 0.0
    %1664 = vmatpush1.msra.mxu0 %v1631
    %1665 = vmatprep.subr.mxu0 0.0
    %1666 = vmatpush1.msra.mxu0 %v1630
    %1667 = vmatprep.subr.mxu0 0.0
    %1668 = vmatpush1.msra.mxu0 %v1629
    %1669 = vmatprep.subr.mxu0 0.0
    %1670 = vmatpush1.msra.mxu0 %v1628
    %1671 = vmatprep.subr.mxu0 0.0
    %1672 = vmatpush1.msra.mxu0 %v1627
    %1673 = vmatprep.subr.mxu0 0.0
    %1674 = vmatpush1.msra.mxu0 %v1626
    %1675 = vmatprep.subr.mxu0 0.0
    %1676 = vmatpush1.msra.mxu0 %v1625
    %1677 = vmatprep.subr.mxu0 0.0
    %1678 = vmatpush1.msra.mxu0 %v1624
    %1679 = vmatprep.subr.mxu0 0.0
    %1680 = vmatpush1.msra.mxu0 %v1623
    %1681 = vmatprep.subr.mxu0 0.0
    %1682 = vmatpush1.msra.mxu0 %v1622
    %1683 = vmatprep.subr.mxu0 0.0
    %1684 = vmatpush1.msra.mxu0 %v1621
    %1685 = vmatprep.subr.mxu0 0.0
    %1686 = vmatpush1.msra.mxu0 %v1620
    %1687 = vmatprep.subr.mxu0 0.0
    %1688 = vmatpush1.msra.mxu0 %v1619
    %1689 = vmatprep.subr.mxu0 0.0
    %1690 = vmatpush2.msra.mxu0 %v1650
    %1691 = vmatprep.subr.mxu0 0.0
    %1692 = vmatpush2.msra.mxu0 %v1649
    %1693 = vmatprep.subr.mxu0 0.0
    %1694 = vmatpush2.msra.mxu0 %v1648
    %1695 = vmatprep.subr.mxu0 0.0
    %1696 = vmatpush2.msra.mxu0 %v1647
    %1697 = vmatprep.subr.mxu0 0.0
    %1698 = vmatpush2.msra.mxu0 %v1646
    %1699 = vmatprep.subr.mxu0 0.0
    %1700 = vmatpush2.msra.mxu0 %v1645
    %1701 = vmatprep.subr.mxu0 0.0
    %1702 = vmatpush2.msra.mxu0 %v1644
    %1703 = vmatprep.subr.mxu0 0.0
    %1704 = vmatpush2.msra.mxu0 %v1643
    %1705 = vmatprep.subr.mxu0 0.0
    %1706 = vmatpush2.msra.mxu0 %v1642
    %1707 = vmatprep.subr.mxu0 0.0
    %1708 = vmatpush2.msra.mxu0 %v1641
    %1709 = vmatprep.subr.mxu0 0.0
    %1710 = vmatpush2.msra.mxu0 %v1640
    %1711 = vmatprep.subr.mxu0 0.0
    %1712 = vmatpush2.msra.mxu0 %v1639
    %1713 = vmatprep.subr.mxu0 0.0
    %1714 = vmatpush2.msra.mxu0 %v1638
    %1715 = vmatprep.subr.mxu0 0.0
    %1716 = vmatpush2.msra.mxu0 %v1637
    %1717 = vmatprep.subr.mxu0 0.0
    %1718 = vmatpush2.msra.mxu0 %v1636
    %1719 = vmatprep.subr.mxu0 0.0
    %1720 = vmatpush2.msra.mxu0 %v1635
    %1721 = vmatprep.mubr.f32.mxu0 %v1507
    %1722 = vmatmul.mubr.f32.gmra.mxu0 %v1507
    %v1723 = vpop.f32.mrf.mxu0
    %v1724 = vadd.f32 %v1655, %v1723
    %v1725 = vpop.f32.mrf.mxu0
    %1726 = vdwg.mxu0
    %v1727 = vmax.f32 %v1724, 0.0
    %s1728 = scalar_lea.vmem %s4, 256
    %v1729 = vld [vmem:[%s1728] sm:$0xff]
    %v1730 = vld [vmem:[%s1728 + $0x8] sm:$0xff]
    %v1731 = vld [vmem:[%s1728 + $0x10] sm:$0xff]
    %v1732 = vld [vmem:[%s1728 + $0x18] sm:$0xff]
    %v1733 = vld [vmem:[%s1728 + $0x20] sm:$0xff]
    %v1734 = vld [vmem:[%s1728 + $0x28] sm:$0xff]
    %v1735 = vld [vmem:[%s1728 + $0x30] sm:$0xff]
    %v1736 = vld [vmem:[%s1728 + $0x38] sm:$0xff]
    %v1737 = vld [vmem:[%s1728 + $0x40] sm:$0xff]
    %v1738 = vld [vmem:[%s1728 + $0x48] sm:$0xff]
    %v1739 = vld [vmem:[%s1728 + $0x50] sm:$0xff]
    %v1740 = vld [vmem:[%s1728 + $0x58] sm:$0xff]
    %v1741 = vld [vmem:[%s1728 + $0x60] sm:$0xff]
    %v1742 = vld [vmem:[%s1728 + $0x68] sm:$0xff]
    %v1743 = vld [vmem:[%s1728 + $0x70] sm:$0xff]
    %v1744 = vld [vmem:[%s1728 + $0x78] sm:$0xff]
    %v1745 = vld [vmem:[%s1728 + $0x80] sm:$0xff]
    %v1746 = vld [vmem:[%s1728 + $0x88] sm:$0xff]
    %v1747 = vld [vmem:[%s1728 + $0x90] sm:$0xff]
    %v1748 = vld [vmem:[%s1728 + $0x98] sm:$0xff]
    %v1749 = vld [vmem:[%s1728 + $0xa0] sm:$0xff]
    %v1750 = vld [vmem:[%s1728 + $0xa8] sm:$0xff]
    %v1751 = vld [vmem:[%s1728 + $0xb0] sm:$0xff]
    %v1752 = vld [vmem:[%s1728 + $0xb8] sm:$0xff]
    %v1753 = vld [vmem:[%s1728 + $0xc0] sm:$0xff]
    %v1754 = vld [vmem:[%s1728 + $0xc8] sm:$0xff]
    %v1755 = vld [vmem:[%s1728 + $0xd0] sm:$0xff]
    %v1756 = vld [vmem:[%s1728 + $0xd8] sm:$0xff]
    %v1757 = vld [vmem:[%s1728 + $0xe0] sm:$0xff]
    %v1758 = vld [vmem:[%s1728 + $0xe8] sm:$0xff]
    %v1759 = vld [vmem:[%s1728 + $0xf0] sm:$0xff]
    %v1760 = vld [vmem:[%s1728 + $0xf8] sm:$0xff]
    %1761 = vmatprep.subr.mxu0 0.0
    %1762 = vmatpush1.msra.mxu0 %v1744
    %1763 = vmatprep.subr.mxu0 0.0
    %1764 = vmatpush1.msra.mxu0 %v1743
    %1765 = vmatprep.subr.mxu0 0.0
    %1766 = vmatpush1.msra.mxu0 %v1742
    %1767 = vmatprep.subr.mxu0 0.0
    %1768 = vmatpush1.msra.mxu0 %v1741
    %1769 = vmatprep.subr.mxu0 0.0
    %1770 = vmatpush1.msra.mxu0 %v1740
    %1771 = vmatprep.subr.mxu0 0.0
    %1772 = vmatpush1.msra.mxu0 %v1739
    %1773 = vmatprep.subr.mxu0 0.0
    %1774 = vmatpush1.msra.mxu0 %v1738
    %1775 = vmatprep.subr.mxu0 0.0
    %1776 = vmatpush1.msra.mxu0 %v1737
    %1777 = vmatprep.subr.mxu0 0.0
    %1778 = vmatpush1.msra.mxu0 %v1736
    %1779 = vmatprep.subr.mxu0 0.0
    %1780 = vmatpush1.msra.mxu0 %v1735
    %1781 = vmatprep.subr.mxu0 0.0
    %1782 = vmatpush1.msra.mxu0 %v1734
    %1783 = vmatprep.subr.mxu0 0.0
    %1784 = vmatpush1.msra.mxu0 %v1733
    %1785 = vmatprep.subr.mxu0 0.0
    %1786 = vmatpush1.msra.mxu0 %v1732
    %1787 = vmatprep.subr.mxu0 0.0
    %1788 = vmatpush1.msra.mxu0 %v1731
    %1789 = vmatprep.subr.mxu0 0.0
    %1790 = vmatpush1.msra.mxu0 %v1730
    %1791 = vmatprep.subr.mxu0 0.0
    %1792 = vmatpush1.msra.mxu0 %v1729
    %1793 = vmatprep.subr.mxu0 0.0
    %1794 = vmatpush2.msra.mxu0 %v1760
    %1795 = vmatprep.subr.mxu0 0.0
    %1796 = vmatpush2.msra.mxu0 %v1759
    %1797 = vmatprep.subr.mxu0 0.0
    %1798 = vmatpush2.msra.mxu0 %v1758
    %1799 = vmatprep.subr.mxu0 0.0
    %1800 = vmatpush2.msra.mxu0 %v1757
    %1801 = vmatprep.subr.mxu0 0.0
    %1802 = vmatpush2.msra.mxu0 %v1756
    %1803 = vmatprep.subr.mxu0 0.0
    %1804 = vmatpush2.msra.mxu0 %v1755
    %1805 = vmatprep.subr.mxu0 0.0
    %1806 = vmatpush2.msra.mxu0 %v1754
    %1807 = vmatprep.subr.mxu0 0.0
    %1808 = vmatpush2.msra.mxu0 %v1753
    %1809 = vmatprep.subr.mxu0 0.0
    %1810 = vmatpush2.msra.mxu0 %v1752
    %1811 = vmatprep.subr.mxu0 0.0
    %1812 = vmatpush2.msra.mxu0 %v1751
    %1813 = vmatprep.subr.mxu0 0.0
    %1814 = vmatpush2.msra.mxu0 %v1750
    %1815 = vmatprep.subr.mxu0 0.0
    %1816 = vmatpush2.msra.mxu0 %v1749
    %1817 = vmatprep.subr.mxu0 0.0
    %1818 = vmatpush2.msra.mxu0 %v1748
    %1819 = vmatprep.subr.mxu0 0.0
    %1820 = vmatpush2.msra.mxu0 %v1747
    %1821 = vmatprep.subr.mxu0 0.0
    %1822 = vmatpush2.msra.mxu0 %v1746
    %1823 = vmatprep.subr.mxu0 0.0
    %1824 = vmatpush2.msra.mxu0 %v1745
    %1825 = vmatprep.mubr.f32.mxu0 %v1507
    %1826 = vmatmul.mubr.f32.gmra.mxu0 %v1507
    %v1827 = vpop.f32.mrf.mxu0
    %v1828 = vadd.f32 %v1655, %v1827
    %v1829 = vpop.f32.mrf.mxu0
    %1830 = vdwg.mxu0
    %v1831 = vmax.f32 %v1828, 0.0
    %v1832 = vmax.f32 %v1727, %v1831
    %s1833 = scalar_lea.vmem %s4, 512
    %v1834 = vld [vmem:[%s1833] sm:$0xff]
    %v1835 = vld [vmem:[%s1833 + $0x8] sm:$0xff]
    %v1836 = vld [vmem:[%s1833 + $0x10] sm:$0xff]
    %v1837 = vld [vmem:[%s1833 + $0x18] sm:$0xff]
    %v1838 = vld [vmem:[%s1833 + $0x20] sm:$0xff]
    %v1839 = vld [vmem:[%s1833 + $0x28] sm:$0xff]
    %v1840 = vld [vmem:[%s1833 + $0x30] sm:$0xff]
    %v1841 = vld [vmem:[%s1833 + $0x38] sm:$0xff]
    %v1842 = vld [vmem:[%s1833 + $0x40] sm:$0xff]
    %v1843 = vld [vmem:[%s1833 + $0x48] sm:$0xff]
    %v1844 = vld [vmem:[%s1833 + $0x50] sm:$0xff]
    %v1845 = vld [vmem:[%s1833 + $0x58] sm:$0xff]
    %v1846 = vld [vmem:[%s1833 + $0x60] sm:$0xff]
    %v1847 = vld [vmem:[%s1833 + $0x68] sm:$0xff]
    %v1848 = vld [vmem:[%s1833 + $0x70] sm:$0xff]
    %v1849 = vld [vmem:[%s1833 + $0x78] sm:$0xff]
    %v1850 = vld [vmem:[%s1833 + $0x80] sm:$0xff]
    %v1851 = vld [vmem:[%s1833 + $0x88] sm:$0xff]
    %v1852 = vld [vmem:[%s1833 + $0x90] sm:$0xff]
    %v1853 = vld [vmem:[%s1833 + $0x98] sm:$0xff]
    %v1854 = vld [vmem:[%s1833 + $0xa0] sm:$0xff]
    %v1855 = vld [vmem:[%s1833 + $0xa8] sm:$0xff]
    %v1856 = vld [vmem:[%s1833 + $0xb0] sm:$0xff]
    %v1857 = vld [vmem:[%s1833 + $0xb8] sm:$0xff]
    %v1858 = vld [vmem:[%s1833 + $0xc0] sm:$0xff]
    %v1859 = vld [vmem:[%s1833 + $0xc8] sm:$0xff]
    %v1860 = vld [vmem:[%s1833 + $0xd0] sm:$0xff]
    %v1861 = vld [vmem:[%s1833 + $0xd8] sm:$0xff]
    %v1862 = vld [vmem:[%s1833 + $0xe0] sm:$0xff]
    %v1863 = vld [vmem:[%s1833 + $0xe8] sm:$0xff]
    %v1864 = vld [vmem:[%s1833 + $0xf0] sm:$0xff]
    %v1865 = vld [vmem:[%s1833 + $0xf8] sm:$0xff]
    %1866 = vmatprep.subr.mxu0 0.0
    %1867 = vmatpush1.msra.mxu0 %v1849
    %1868 = vmatprep.subr.mxu0 0.0
    %1869 = vmatpush1.msra.mxu0 %v1848
    %1870 = vmatprep.subr.mxu0 0.0
    %1871 = vmatpush1.msra.mxu0 %v1847
    %1872 = vmatprep.subr.mxu0 0.0
    %1873 = vmatpush1.msra.mxu0 %v1846
    %1874 = vmatprep.subr.mxu0 0.0
    %1875 = vmatpush1.msra.mxu0 %v1845
    %1876 = vmatprep.subr.mxu0 0.0
    %1877 = vmatpush1.msra.mxu0 %v1844
    %1878 = vmatprep.subr.mxu0 0.0
    %1879 = vmatpush1.msra.mxu0 %v1843
    %1880 = vmatprep.subr.mxu0 0.0
    %1881 = vmatpush1.msra.mxu0 %v1842
    %1882 = vmatprep.subr.mxu0 0.0
    %1883 = vmatpush1.msra.mxu0 %v1841
    %1884 = vmatprep.subr.mxu0 0.0
    %1885 = vmatpush1.msra.mxu0 %v1840
    %1886 = vmatprep.subr.mxu0 0.0
    %1887 = vmatpush1.msra.mxu0 %v1839
    %1888 = vmatprep.subr.mxu0 0.0
    %1889 = vmatpush1.msra.mxu0 %v1838
    %1890 = vmatprep.subr.mxu0 0.0
    %1891 = vmatpush1.msra.mxu0 %v1837
    %1892 = vmatprep.subr.mxu0 0.0
    %1893 = vmatpush1.msra.mxu0 %v1836
    %1894 = vmatprep.subr.mxu0 0.0
    %1895 = vmatpush1.msra.mxu0 %v1835
    %1896 = vmatprep.subr.mxu0 0.0
    %1897 = vmatpush1.msra.mxu0 %v1834
    %1898 = vmatprep.subr.mxu0 0.0
    %1899 = vmatpush2.msra.mxu0 %v1865
    %1900 = vmatprep.subr.mxu0 0.0
    %1901 = vmatpush2.msra.mxu0 %v1864
    %1902 = vmatprep.subr.mxu0 0.0
    %1903 = vmatpush2.msra.mxu0 %v1863
    %1904 = vmatprep.subr.mxu0 0.0
    %1905 = vmatpush2.msra.mxu0 %v1862
    %1906 = vmatprep.subr.mxu0 0.0
    %1907 = vmatpush2.msra.mxu0 %v1861
    %1908 = vmatprep.subr.mxu0 0.0
    %1909 = vmatpush2.msra.mxu0 %v1860
    %1910 = vmatprep.subr.mxu0 0.0
    %1911 = vmatpush2.msra.mxu0 %v1859
    %1912 = vmatprep.subr.mxu0 0.0
    %1913 = vmatpush2.msra.mxu0 %v1858
    %1914 = vmatprep.subr.mxu0 0.0
    %1915 = vmatpush2.msra.mxu0 %v1857
    %1916 = vmatprep.subr.mxu0 0.0
    %1917 = vmatpush2.msra.mxu0 %v1856
    %1918 = vmatprep.subr.mxu0 0.0
    %1919 = vmatpush2.msra.mxu0 %v1855
    %1920 = vmatprep.subr.mxu0 0.0
    %1921 = vmatpush2.msra.mxu0 %v1854
    %1922 = vmatprep.subr.mxu0 0.0
    %1923 = vmatpush2.msra.mxu0 %v1853
    %1924 = vmatprep.subr.mxu0 0.0
    %1925 = vmatpush2.msra.mxu0 %v1852
    %1926 = vmatprep.subr.mxu0 0.0
    %1927 = vmatpush2.msra.mxu0 %v1851
    %1928 = vmatprep.subr.mxu0 0.0
    %1929 = vmatpush2.msra.mxu0 %v1850
    %1930 = vmatprep.mubr.f32.mxu0 %v1507
    %1931 = vmatmul.mubr.f32.gmra.mxu0 %v1507
    %v1932 = vpop.f32.mrf.mxu0
    %v1933 = vadd.f32 %v1655, %v1932
    %v1934 = vpop.f32.mrf.mxu0
    %1935 = vdwg.mxu0
    %v1936 = vmax.f32 %v1933, 0.0
    %v1937 = vmax.f32 %v1832, %v1936
    %s1938 = scalar_lea.vmem %s4, 768
    %v1939 = vld [vmem:[%s1938] sm:$0xff]
    %v1940 = vld [vmem:[%s1938 + $0x8] sm:$0xff]
    %v1941 = vld [vmem:[%s1938 + $0x10] sm:$0xff]
    %v1942 = vld [vmem:[%s1938 + $0x18] sm:$0xff]
    %v1943 = vld [vmem:[%s1938 + $0x20] sm:$0xff]
    %v1944 = vld [vmem:[%s1938 + $0x28] sm:$0xff]
    %v1945 = vld [vmem:[%s1938 + $0x30] sm:$0xff]
    %v1946 = vld [vmem:[%s1938 + $0x38] sm:$0xff]
    %v1947 = vld [vmem:[%s1938 + $0x40] sm:$0xff]
    %v1948 = vld [vmem:[%s1938 + $0x48] sm:$0xff]
    %v1949 = vld [vmem:[%s1938 + $0x50] sm:$0xff]
    %v1950 = vld [vmem:[%s1938 + $0x58] sm:$0xff]
    %v1951 = vld [vmem:[%s1938 + $0x60] sm:$0xff]
    %v1952 = vld [vmem:[%s1938 + $0x68] sm:$0xff]
    %v1953 = vld [vmem:[%s1938 + $0x70] sm:$0xff]
    %v1954 = vld [vmem:[%s1938 + $0x78] sm:$0xff]
    %v1955 = vld [vmem:[%s1938 + $0x80] sm:$0xff]
    %v1956 = vld [vmem:[%s1938 + $0x88] sm:$0xff]
    %v1957 = vld [vmem:[%s1938 + $0x90] sm:$0xff]
    %v1958 = vld [vmem:[%s1938 + $0x98] sm:$0xff]
    %v1959 = vld [vmem:[%s1938 + $0xa0] sm:$0xff]
    %v1960 = vld [vmem:[%s1938 + $0xa8] sm:$0xff]
    %v1961 = vld [vmem:[%s1938 + $0xb0] sm:$0xff]
    %v1962 = vld [vmem:[%s1938 + $0xb8] sm:$0xff]
    %v1963 = vld [vmem:[%s1938 + $0xc0] sm:$0xff]
    %v1964 = vld [vmem:[%s1938 + $0xc8] sm:$0xff]
    %v1965 = vld [vmem:[%s1938 + $0xd0] sm:$0xff]
    %v1966 = vld [vmem:[%s1938 + $0xd8] sm:$0xff]
    %v1967 = vld [vmem:[%s1938 + $0xe0] sm:$0xff]
    %v1968 = vld [vmem:[%s1938 + $0xe8] sm:$0xff]
    %v1969 = vld [vmem:[%s1938 + $0xf0] sm:$0xff]
    %v1970 = vld [vmem:[%s1938 + $0xf8] sm:$0xff]
    %1971 = vmatprep.subr.mxu0 0.0
    %1972 = vmatpush1.msra.mxu0 %v1954
    %1973 = vmatprep.subr.mxu0 0.0
    %1974 = vmatpush1.msra.mxu0 %v1953
    %1975 = vmatprep.subr.mxu0 0.0
    %1976 = vmatpush1.msra.mxu0 %v1952
    %1977 = vmatprep.subr.mxu0 0.0
    %1978 = vmatpush1.msra.mxu0 %v1951
    %1979 = vmatprep.subr.mxu0 0.0
    %1980 = vmatpush1.msra.mxu0 %v1950
    %1981 = vmatprep.subr.mxu0 0.0
    %1982 = vmatpush1.msra.mxu0 %v1949
    %1983 = vmatprep.subr.mxu0 0.0
    %1984 = vmatpush1.msra.mxu0 %v1948
    %1985 = vmatprep.subr.mxu0 0.0
    %1986 = vmatpush1.msra.mxu0 %v1947
    %1987 = vmatprep.subr.mxu0 0.0
    %1988 = vmatpush1.msra.mxu0 %v1946
    %1989 = vmatprep.subr.mxu0 0.0
    %1990 = vmatpush1.msra.mxu0 %v1945
    %1991 = vmatprep.subr.mxu0 0.0
    %1992 = vmatpush1.msra.mxu0 %v1944
    %1993 = vmatprep.subr.mxu0 0.0
    %1994 = vmatpush1.msra.mxu0 %v1943
    %1995 = vmatprep.subr.mxu0 0.0
    %1996 = vmatpush1.msra.mxu0 %v1942
    %1997 = vmatprep.subr.mxu0 0.0
    %1998 = vmatpush1.msra.mxu0 %v1941
    %1999 = vmatprep.subr.mxu0 0.0
    %2000 = vmatpush1.msra.mxu0 %v1940
    %2001 = vmatprep.subr.mxu0 0.0
    %2002 = vmatpush1.msra.mxu0 %v1939
    %2003 = vmatprep.subr.mxu0 0.0
    %2004 = vmatpush2.msra.mxu0 %v1970
    %2005 = vmatprep.subr.mxu0 0.0
    %2006 = vmatpush2.msra.mxu0 %v1969
    %2007 = vmatprep.subr.mxu0 0.0
    %2008 = vmatpush2.msra.mxu0 %v1968
    %2009 = vmatprep.subr.mxu0 0.0
    %2010 = vmatpush2.msra.mxu0 %v1967
    %2011 = vmatprep.subr.mxu0 0.0
    %2012 = vmatpush2.msra.mxu0 %v1966
    %2013 = vmatprep.subr.mxu0 0.0
    %2014 = vmatpush2.msra.mxu0 %v1965
    %2015 = vmatprep.subr.mxu0 0.0
    %2016 = vmatpush2.msra.mxu0 %v1964
    %2017 = vmatprep.subr.mxu0 0.0
    %2018 = vmatpush2.msra.mxu0 %v1963
    %2019 = vmatprep.subr.mxu0 0.0
    %2020 = vmatpush2.msra.mxu0 %v1962
    %2021 = vmatprep.subr.mxu0 0.0
    %2022 = vmatpush2.msra.mxu0 %v1961
    %2023 = vmatprep.subr.mxu0 0.0
    %2024 = vmatpush2.msra.mxu0 %v1960
    %2025 = vmatprep.subr.mxu0 0.0
    %2026 = vmatpush2.msra.mxu0 %v1959
    %2027 = vmatprep.subr.mxu0 0.0
    %2028 = vmatpush2.msra.mxu0 %v1958
    %2029 = vmatprep.subr.mxu0 0.0
    %2030 = vmatpush2.msra.mxu0 %v1957
    %2031 = vmatprep.subr.mxu0 0.0
    %2032 = vmatpush2.msra.mxu0 %v1956
    %2033 = vmatprep.subr.mxu0 0.0
    %2034 = vmatpush2.msra.mxu0 %v1955
    %2035 = vmatprep.mubr.f32.mxu0 %v1507
    %2036 = vmatmul.mubr.f32.gmra.mxu0 %v1507
    %v2037 = vpop.f32.mrf.mxu0
    %v2038 = vadd.f32 %v1655, %v2037
    %v2039 = vpop.f32.mrf.mxu0
    %2040 = vdwg.mxu0
    %v2041 = vmax.f32 %v2038, 0.0
    %v2042 = vmax.f32 %v1937, %v2041
    %v2043 = vld [vmem:[%s7] sm:$0x1]
    %v2044 = vld [vmem:[%s6] sm:$0xff]
    %v2045 = vld [vmem:[%s6 + $0x8] sm:$0xff]
    %v2046 = vld [vmem:[%s6 + $0x10] sm:$0xff]
    %v2047 = vld [vmem:[%s6 + $0x18] sm:$0xff]
    %v2048 = vld [vmem:[%s6 + $0x20] sm:$0xff]
    %v2049 = vld [vmem:[%s6 + $0x28] sm:$0xff]
    %v2050 = vld [vmem:[%s6 + $0x30] sm:$0xff]
    %v2051 = vld [vmem:[%s6 + $0x38] sm:$0xff]
    %v2052 = vld [vmem:[%s6 + $0x40] sm:$0xff]
    %v2053 = vld [vmem:[%s6 + $0x48] sm:$0xff]
    %v2054 = vld [vmem:[%s6 + $0x50] sm:$0xff]
    %v2055 = vld [vmem:[%s6 + $0x58] sm:$0xff]
    %v2056 = vld [vmem:[%s6 + $0x60] sm:$0xff]
    %v2057 = vld [vmem:[%s6 + $0x68] sm:$0xff]
    %v2058 = vld [vmem:[%s6 + $0x70] sm:$0xff]
    %v2059 = vld [vmem:[%s6 + $0x78] sm:$0xff]
    %v2060 = vld [vmem:[%s6 + $0x80] sm:$0xff]
    %v2061 = vld [vmem:[%s6 + $0x88] sm:$0xff]
    %v2062 = vld [vmem:[%s6 + $0x90] sm:$0xff]
    %v2063 = vld [vmem:[%s6 + $0x98] sm:$0xff]
    %v2064 = vld [vmem:[%s6 + $0xa0] sm:$0xff]
    %v2065 = vld [vmem:[%s6 + $0xa8] sm:$0xff]
    %v2066 = vld [vmem:[%s6 + $0xb0] sm:$0xff]
    %v2067 = vld [vmem:[%s6 + $0xb8] sm:$0xff]
    %v2068 = vld [vmem:[%s6 + $0xc0] sm:$0xff]
    %v2069 = vld [vmem:[%s6 + $0xc8] sm:$0xff]
    %v2070 = vld [vmem:[%s6 + $0xd0] sm:$0xff]
    %v2071 = vld [vmem:[%s6 + $0xd8] sm:$0xff]
    %v2072 = vld [vmem:[%s6 + $0xe0] sm:$0xff]
    %v2073 = vld [vmem:[%s6 + $0xe8] sm:$0xff]
    %v2074 = vld [vmem:[%s6 + $0xf0] sm:$0xff]
    %v2075 = vld [vmem:[%s6 + $0xf8] sm:$0xff]
    %v2077 = vlaneseq
    %v2078 = vshrl.u32 %v2077, 7
    %v2079 = vsub.s32 0, %v2078
    %v2080 = vrot.slane %v2043, %v2079
    %2082 = vmatprep.subr.mxu0 0.0
    %2083 = vmatpush1.msra.mxu0 %v2059
    %2084 = vmatprep.subr.mxu0 0.0
    %2085 = vmatpush1.msra.mxu0 %v2058
    %2086 = vmatprep.subr.mxu0 0.0
    %2087 = vmatpush1.msra.mxu0 %v2057
    %2088 = vmatprep.subr.mxu0 0.0
    %2089 = vmatpush1.msra.mxu0 %v2056
    %2090 = vmatprep.subr.mxu0 0.0
    %2091 = vmatpush1.msra.mxu0 %v2055
    %2092 = vmatprep.subr.mxu0 0.0
    %2093 = vmatpush1.msra.mxu0 %v2054
    %2094 = vmatprep.subr.mxu0 0.0
    %2095 = vmatpush1.msra.mxu0 %v2053
    %2096 = vmatprep.subr.mxu0 0.0
    %2097 = vmatpush1.msra.mxu0 %v2052
    %2098 = vmatprep.subr.mxu0 0.0
    %2099 = vmatpush1.msra.mxu0 %v2051
    %2100 = vmatprep.subr.mxu0 0.0
    %2101 = vmatpush1.msra.mxu0 %v2050
    %2102 = vmatprep.subr.mxu0 0.0
    %2103 = vmatpush1.msra.mxu0 %v2049
    %2104 = vmatprep.subr.mxu0 0.0
    %2105 = vmatpush1.msra.mxu0 %v2048
    %2106 = vmatprep.subr.mxu0 0.0
    %2107 = vmatpush1.msra.mxu0 %v2047
    %2108 = vmatprep.subr.mxu0 0.0
    %2109 = vmatpush1.msra.mxu0 %v2046
    %2110 = vmatprep.subr.mxu0 0.0
    %2111 = vmatpush1.msra.mxu0 %v2045
    %2112 = vmatprep.subr.mxu0 0.0
    %2113 = vmatpush1.msra.mxu0 %v2044
    %2114 = vmatprep.subr.mxu0 0.0
    %2115 = vmatpush2.msra.mxu0 %v2075
    %2116 = vmatprep.subr.mxu0 0.0
    %2117 = vmatpush2.msra.mxu0 %v2074
    %2118 = vmatprep.subr.mxu0 0.0
    %2119 = vmatpush2.msra.mxu0 %v2073
    %2120 = vmatprep.subr.mxu0 0.0
    %2121 = vmatpush2.msra.mxu0 %v2072
    %2122 = vmatprep.subr.mxu0 0.0
    %2123 = vmatpush2.msra.mxu0 %v2071
    %2124 = vmatprep.subr.mxu0 0.0
    %2125 = vmatpush2.msra.mxu0 %v2070
    %2126 = vmatprep.subr.mxu0 0.0
    %2127 = vmatpush2.msra.mxu0 %v2069
    %2128 = vmatprep.subr.mxu0 0.0
    %2129 = vmatpush2.msra.mxu0 %v2068
    %2130 = vmatprep.subr.mxu0 0.0
    %2131 = vmatpush2.msra.mxu0 %v2067
    %2132 = vmatprep.subr.mxu0 0.0
    %2133 = vmatpush2.msra.mxu0 %v2066
    %2134 = vmatprep.subr.mxu0 0.0
    %2135 = vmatpush2.msra.mxu0 %v2065
    %2136 = vmatprep.subr.mxu0 0.0
    %2137 = vmatpush2.msra.mxu0 %v2064
    %2138 = vmatprep.subr.mxu0 0.0
    %2139 = vmatpush2.msra.mxu0 %v2063
    %2140 = vmatprep.subr.mxu0 0.0
    %2141 = vmatpush2.msra.mxu0 %v2062
    %2142 = vmatprep.subr.mxu0 0.0
    %2143 = vmatpush2.msra.mxu0 %v2061
    %2144 = vmatprep.subr.mxu0 0.0
    %2145 = vmatpush2.msra.mxu0 %v2060
    %2146 = vmatprep.mubr.f32.mxu0 %v1507
    %2147 = vmatmul.mubr.f32.gmra.mxu0 %v1507
    %v2148 = vpop.f32.mrf.mxu0
    %v2149 = vadd.f32 %v2080, %v2148
    %v2150 = vpop.f32.mrf.mxu0
    %2151 = vdwg.mxu0
    %v2152 = vmax.f32 %v2149, 0.0
    %s2153 = scalar_lea.vmem %s6, 256
    %v2154 = vld [vmem:[%s2153] sm:$0xff]
    %v2155 = vld [vmem:[%s2153 + $0x8] sm:$0xff]
    %v2156 = vld [vmem:[%s2153 + $0x10] sm:$0xff]
    %v2157 = vld [vmem:[%s2153 + $0x18] sm:$0xff]
    %v2158 = vld [vmem:[%s2153 + $0x20] sm:$0xff]
    %v2159 = vld [vmem:[%s2153 + $0x28] sm:$0xff]
    %v2160 = vld [vmem:[%s2153 + $0x30] sm:$0xff]
    %v2161 = vld [vmem:[%s2153 + $0x38] sm:$0xff]
    %v2162 = vld [vmem:[%s2153 + $0x40] sm:$0xff]
    %v2163 = vld [vmem:[%s2153 + $0x48] sm:$0xff]
    %v2164 = vld [vmem:[%s2153 + $0x50] sm:$0xff]
    %v2165 = vld [vmem:[%s2153 + $0x58] sm:$0xff]
    %v2166 = vld [vmem:[%s2153 + $0x60] sm:$0xff]
    %v2167 = vld [vmem:[%s2153 + $0x68] sm:$0xff]
    %v2168 = vld [vmem:[%s2153 + $0x70] sm:$0xff]
    %v2169 = vld [vmem:[%s2153 + $0x78] sm:$0xff]
    %v2170 = vld [vmem:[%s2153 + $0x80] sm:$0xff]
    %v2171 = vld [vmem:[%s2153 + $0x88] sm:$0xff]
    %v2172 = vld [vmem:[%s2153 + $0x90] sm:$0xff]
    %v2173 = vld [vmem:[%s2153 + $0x98] sm:$0xff]
    %v2174 = vld [vmem:[%s2153 + $0xa0] sm:$0xff]
    %v2175 = vld [vmem:[%s2153 + $0xa8] sm:$0xff]
    %v2176 = vld [vmem:[%s2153 + $0xb0] sm:$0xff]
    %v2177 = vld [vmem:[%s2153 + $0xb8] sm:$0xff]
    %v2178 = vld [vmem:[%s2153 + $0xc0] sm:$0xff]
    %v2179 = vld [vmem:[%s2153 + $0xc8] sm:$0xff]
    %v2180 = vld [vmem:[%s2153 + $0xd0] sm:$0xff]
    %v2181 = vld [vmem:[%s2153 + $0xd8] sm:$0xff]
    %v2182 = vld [vmem:[%s2153 + $0xe0] sm:$0xff]
    %v2183 = vld [vmem:[%s2153 + $0xe8] sm:$0xff]
    %v2184 = vld [vmem:[%s2153 + $0xf0] sm:$0xff]
    %v2185 = vld [vmem:[%s2153 + $0xf8] sm:$0xff]
    %2186 = vmatprep.subr.mxu0 0.0
    %2187 = vmatpush1.msra.mxu0 %v2169
    %2188 = vmatprep.subr.mxu0 0.0
    %2189 = vmatpush1.msra.mxu0 %v2168
    %2190 = vmatprep.subr.mxu0 0.0
    %2191 = vmatpush1.msra.mxu0 %v2167
    %2192 = vmatprep.subr.mxu0 0.0
    %2193 = vmatpush1.msra.mxu0 %v2166
    %2194 = vmatprep.subr.mxu0 0.0
    %2195 = vmatpush1.msra.mxu0 %v2165
    %2196 = vmatprep.subr.mxu0 0.0
    %2197 = vmatpush1.msra.mxu0 %v2164
    %2198 = vmatprep.subr.mxu0 0.0
    %2199 = vmatpush1.msra.mxu0 %v2163
    %2200 = vmatprep.subr.mxu0 0.0
    %2201 = vmatpush1.msra.mxu0 %v2162
    %2202 = vmatprep.subr.mxu0 0.0
    %2203 = vmatpush1.msra.mxu0 %v2161
    %2204 = vmatprep.subr.mxu0 0.0
    %2205 = vmatpush1.msra.mxu0 %v2160
    %2206 = vmatprep.subr.mxu0 0.0
    %2207 = vmatpush1.msra.mxu0 %v2159
    %2208 = vmatprep.subr.mxu0 0.0
    %2209 = vmatpush1.msra.mxu0 %v2158
    %2210 = vmatprep.subr.mxu0 0.0
    %2211 = vmatpush1.msra.mxu0 %v2157
    %2212 = vmatprep.subr.mxu0 0.0
    %2213 = vmatpush1.msra.mxu0 %v2156
    %2214 = vmatprep.subr.mxu0 0.0
    %2215 = vmatpush1.msra.mxu0 %v2155
    %2216 = vmatprep.subr.mxu0 0.0
    %2217 = vmatpush1.msra.mxu0 %v2154
    %2218 = vmatprep.subr.mxu0 0.0
    %2219 = vmatpush2.msra.mxu0 %v2185
    %2220 = vmatprep.subr.mxu0 0.0
    %2221 = vmatpush2.msra.mxu0 %v2184
    %2222 = vmatprep.subr.mxu0 0.0
    %2223 = vmatpush2.msra.mxu0 %v2183
    %2224 = vmatprep.subr.mxu0 0.0
    %2225 = vmatpush2.msra.mxu0 %v2182
    %2226 = vmatprep.subr.mxu0 0.0
    %2227 = vmatpush2.msra.mxu0 %v2181
    %2228 = vmatprep.subr.mxu0 0.0
    %2229 = vmatpush2.msra.mxu0 %v2180
    %2230 = vmatprep.subr.mxu0 0.0
    %2231 = vmatpush2.msra.mxu0 %v2179
    %2232 = vmatprep.subr.mxu0 0.0
    %2233 = vmatpush2.msra.mxu0 %v2178
    %2234 = vmatprep.subr.mxu0 0.0
    %2235 = vmatpush2.msra.mxu0 %v2177
    %2236 = vmatprep.subr.mxu0 0.0
    %2237 = vmatpush2.msra.mxu0 %v2176
    %2238 = vmatprep.subr.mxu0 0.0
    %2239 = vmatpush2.msra.mxu0 %v2175
    %2240 = vmatprep.subr.mxu0 0.0
    %2241 = vmatpush2.msra.mxu0 %v2174
    %2242 = vmatprep.subr.mxu0 0.0
    %2243 = vmatpush2.msra.mxu0 %v2173
    %2244 = vmatprep.subr.mxu0 0.0
    %2245 = vmatpush2.msra.mxu0 %v2172
    %2246 = vmatprep.subr.mxu0 0.0
    %2247 = vmatpush2.msra.mxu0 %v2171
    %2248 = vmatprep.subr.mxu0 0.0
    %2249 = vmatpush2.msra.mxu0 %v2170
    %2250 = vmatprep.mubr.f32.mxu0 %v1507
    %2251 = vmatmul.mubr.f32.gmra.mxu0 %v1507
    %v2252 = vpop.f32.mrf.mxu0
    %v2253 = vadd.f32 %v2080, %v2252
    %v2254 = vpop.f32.mrf.mxu0
    %2255 = vdwg.mxu0
    %v2256 = vmax.f32 %v2253, 0.0
    %v2257 = vmax.f32 %v2152, %v2256
    %s2258 = scalar_lea.vmem %s6, 512
    %v2259 = vld [vmem:[%s2258] sm:$0xff]
    %v2260 = vld [vmem:[%s2258 + $0x8] sm:$0xff]
    %v2261 = vld [vmem:[%s2258 + $0x10] sm:$0xff]
    %v2262 = vld [vmem:[%s2258 + $0x18] sm:$0xff]
    %v2263 = vld [vmem:[%s2258 + $0x20] sm:$0xff]
    %v2264 = vld [vmem:[%s2258 + $0x28] sm:$0xff]
    %v2265 = vld [vmem:[%s2258 + $0x30] sm:$0xff]
    %v2266 = vld [vmem:[%s2258 + $0x38] sm:$0xff]
    %v2267 = vld [vmem:[%s2258 + $0x40] sm:$0xff]
    %v2268 = vld [vmem:[%s2258 + $0x48] sm:$0xff]
    %v2269 = vld [vmem:[%s2258 + $0x50] sm:$0xff]
    %v2270 = vld [vmem:[%s2258 + $0x58] sm:$0xff]
    %v2271 = vld [vmem:[%s2258 + $0x60] sm:$0xff]
    %v2272 = vld [vmem:[%s2258 + $0x68] sm:$0xff]
    %v2273 = vld [vmem:[%s2258 + $0x70] sm:$0xff]
    %v2274 = vld [vmem:[%s2258 + $0x78] sm:$0xff]
    %v2275 = vld [vmem:[%s2258 + $0x80] sm:$0xff]
    %v2276 = vld [vmem:[%s2258 + $0x88] sm:$0xff]
    %v2277 = vld [vmem:[%s2258 + $0x90] sm:$0xff]
    %v2278 = vld [vmem:[%s2258 + $0x98] sm:$0xff]
    %v2279 = vld [vmem:[%s2258 + $0xa0] sm:$0xff]
    %v2280 = vld [vmem:[%s2258 + $0xa8] sm:$0xff]
    %v2281 = vld [vmem:[%s2258 + $0xb0] sm:$0xff]
    %v2282 = vld [vmem:[%s2258 + $0xb8] sm:$0xff]
    %v2283 = vld [vmem:[%s2258 + $0xc0] sm:$0xff]
    %v2284 = vld [vmem:[%s2258 + $0xc8] sm:$0xff]
    %v2285 = vld [vmem:[%s2258 + $0xd0] sm:$0xff]
    %v2286 = vld [vmem:[%s2258 + $0xd8] sm:$0xff]
    %v2287 = vld [vmem:[%s2258 + $0xe0] sm:$0xff]
    %v2288 = vld [vmem:[%s2258 + $0xe8] sm:$0xff]
    %v2289 = vld [vmem:[%s2258 + $0xf0] sm:$0xff]
    %v2290 = vld [vmem:[%s2258 + $0xf8] sm:$0xff]
    %2291 = vmatprep.subr.mxu0 0.0
    %2292 = vmatpush1.msra.mxu0 %v2274
    %2293 = vmatprep.subr.mxu0 0.0
    %2294 = vmatpush1.msra.mxu0 %v2273
    %2295 = vmatprep.subr.mxu0 0.0
    %2296 = vmatpush1.msra.mxu0 %v2272
    %2297 = vmatprep.subr.mxu0 0.0
    %2298 = vmatpush1.msra.mxu0 %v2271
    %2299 = vmatprep.subr.mxu0 0.0
    %2300 = vmatpush1.msra.mxu0 %v2270
    %2301 = vmatprep.subr.mxu0 0.0
    %2302 = vmatpush1.msra.mxu0 %v2269
    %2303 = vmatprep.subr.mxu0 0.0
    %2304 = vmatpush1.msra.mxu0 %v2268
    %2305 = vmatprep.subr.mxu0 0.0
    %2306 = vmatpush1.msra.mxu0 %v2267
    %2307 = vmatprep.subr.mxu0 0.0
    %2308 = vmatpush1.msra.mxu0 %v2266
    %2309 = vmatprep.subr.mxu0 0.0
    %2310 = vmatpush1.msra.mxu0 %v2265
    %2311 = vmatprep.subr.mxu0 0.0
    %2312 = vmatpush1.msra.mxu0 %v2264
    %2313 = vmatprep.subr.mxu0 0.0
    %2314 = vmatpush1.msra.mxu0 %v2263
    %2315 = vmatprep.subr.mxu0 0.0
    %2316 = vmatpush1.msra.mxu0 %v2262
    %2317 = vmatprep.subr.mxu0 0.0
    %2318 = vmatpush1.msra.mxu0 %v2261
    %2319 = vmatprep.subr.mxu0 0.0
    %2320 = vmatpush1.msra.mxu0 %v2260
    %2321 = vmatprep.subr.mxu0 0.0
    %2322 = vmatpush1.msra.mxu0 %v2259
    %2323 = vmatprep.subr.mxu0 0.0
    %2324 = vmatpush2.msra.mxu0 %v2290
    %2325 = vmatprep.subr.mxu0 0.0
    %2326 = vmatpush2.msra.mxu0 %v2289
    %2327 = vmatprep.subr.mxu0 0.0
    %2328 = vmatpush2.msra.mxu0 %v2288
    %2329 = vmatprep.subr.mxu0 0.0
    %2330 = vmatpush2.msra.mxu0 %v2287
    %2331 = vmatprep.subr.mxu0 0.0
    %2332 = vmatpush2.msra.mxu0 %v2286
    %2333 = vmatprep.subr.mxu0 0.0
    %2334 = vmatpush2.msra.mxu0 %v2285
    %2335 = vmatprep.subr.mxu0 0.0
    %2336 = vmatpush2.msra.mxu0 %v2284
    %2337 = vmatprep.subr.mxu0 0.0
    %2338 = vmatpush2.msra.mxu0 %v2283
    %2339 = vmatprep.subr.mxu0 0.0
    %2340 = vmatpush2.msra.mxu0 %v2282
    %2341 = vmatprep.subr.mxu0 0.0
    %2342 = vmatpush2.msra.mxu0 %v2281
    %2343 = vmatprep.subr.mxu0 0.0
    %2344 = vmatpush2.msra.mxu0 %v2280
    %2345 = vmatprep.subr.mxu0 0.0
    %2346 = vmatpush2.msra.mxu0 %v2279
    %2347 = vmatprep.subr.mxu0 0.0
    %2348 = vmatpush2.msra.mxu0 %v2278
    %2349 = vmatprep.subr.mxu0 0.0
    %2350 = vmatpush2.msra.mxu0 %v2277
    %2351 = vmatprep.subr.mxu0 0.0
    %2352 = vmatpush2.msra.mxu0 %v2276
    %2353 = vmatprep.subr.mxu0 0.0
    %2354 = vmatpush2.msra.mxu0 %v2275
    %2355 = vmatprep.mubr.f32.mxu0 %v1507
    %2356 = vmatmul.mubr.f32.gmra.mxu0 %v1507
    %v2357 = vpop.f32.mrf.mxu0
    %v2358 = vadd.f32 %v2080, %v2357
    %v2359 = vpop.f32.mrf.mxu0
    %2360 = vdwg.mxu0
    %v2361 = vmax.f32 %v2358, 0.0
    %v2362 = vmax.f32 %v2257, %v2361
    %s2363 = scalar_lea.vmem %s6, 768
    %v2364 = vld [vmem:[%s2363] sm:$0xff]
    %v2365 = vld [vmem:[%s2363 + $0x8] sm:$0xff]
    %v2366 = vld [vmem:[%s2363 + $0x10] sm:$0xff]
    %v2367 = vld [vmem:[%s2363 + $0x18] sm:$0xff]
    %v2368 = vld [vmem:[%s2363 + $0x20] sm:$0xff]
    %v2369 = vld [vmem:[%s2363 + $0x28] sm:$0xff]
    %v2370 = vld [vmem:[%s2363 + $0x30] sm:$0xff]
    %v2371 = vld [vmem:[%s2363 + $0x38] sm:$0xff]
    %v2372 = vld [vmem:[%s2363 + $0x40] sm:$0xff]
    %v2373 = vld [vmem:[%s2363 + $0x48] sm:$0xff]
    %v2374 = vld [vmem:[%s2363 + $0x50] sm:$0xff]
    %v2375 = vld [vmem:[%s2363 + $0x58] sm:$0xff]
    %v2376 = vld [vmem:[%s2363 + $0x60] sm:$0xff]
    %v2377 = vld [vmem:[%s2363 + $0x68] sm:$0xff]
    %v2378 = vld [vmem:[%s2363 + $0x70] sm:$0xff]
    %v2379 = vld [vmem:[%s2363 + $0x78] sm:$0xff]
    %v2380 = vld [vmem:[%s2363 + $0x80] sm:$0xff]
    %v2381 = vld [vmem:[%s2363 + $0x88] sm:$0xff]
    %v2382 = vld [vmem:[%s2363 + $0x90] sm:$0xff]
    %v2383 = vld [vmem:[%s2363 + $0x98] sm:$0xff]
    %v2384 = vld [vmem:[%s2363 + $0xa0] sm:$0xff]
    %v2385 = vld [vmem:[%s2363 + $0xa8] sm:$0xff]
    %v2386 = vld [vmem:[%s2363 + $0xb0] sm:$0xff]
    %v2387 = vld [vmem:[%s2363 + $0xb8] sm:$0xff]
    %v2388 = vld [vmem:[%s2363 + $0xc0] sm:$0xff]
    %v2389 = vld [vmem:[%s2363 + $0xc8] sm:$0xff]
    %v2390 = vld [vmem:[%s2363 + $0xd0] sm:$0xff]
    %v2391 = vld [vmem:[%s2363 + $0xd8] sm:$0xff]
    %v2392 = vld [vmem:[%s2363 + $0xe0] sm:$0xff]
    %v2393 = vld [vmem:[%s2363 + $0xe8] sm:$0xff]
    %v2394 = vld [vmem:[%s2363 + $0xf0] sm:$0xff]
    %v2395 = vld [vmem:[%s2363 + $0xf8] sm:$0xff]
    %2396 = vmatprep.subr.mxu0 0.0
    %2397 = vmatpush1.msra.mxu0 %v2379
    %2398 = vmatprep.subr.mxu0 0.0
    %2399 = vmatpush1.msra.mxu0 %v2378
    %2400 = vmatprep.subr.mxu0 0.0
    %2401 = vmatpush1.msra.mxu0 %v2377
    %2402 = vmatprep.subr.mxu0 0.0
    %2403 = vmatpush1.msra.mxu0 %v2376
    %2404 = vmatprep.subr.mxu0 0.0
    %2405 = vmatpush1.msra.mxu0 %v2375
    %2406 = vmatprep.subr.mxu0 0.0
    %2407 = vmatpush1.msra.mxu0 %v2374
    %2408 = vmatprep.subr.mxu0 0.0
    %2409 = vmatpush1.msra.mxu0 %v2373
    %2410 = vmatprep.subr.mxu0 0.0
    %2411 = vmatpush1.msra.mxu0 %v2372
    %2412 = vmatprep.subr.mxu0 0.0
    %2413 = vmatpush1.msra.mxu0 %v2371
    %2414 = vmatprep.subr.mxu0 0.0
    %2415 = vmatpush1.msra.mxu0 %v2370
    %2416 = vmatprep.subr.mxu0 0.0
    %2417 = vmatpush1.msra.mxu0 %v2369
    %2418 = vmatprep.subr.mxu0 0.0
    %2419 = vmatpush1.msra.mxu0 %v2368
    %2420 = vmatprep.subr.mxu0 0.0
    %2421 = vmatpush1.msra.mxu0 %v2367
    %2422 = vmatprep.subr.mxu0 0.0
    %2423 = vmatpush1.msra.mxu0 %v2366
    %2424 = vmatprep.subr.mxu0 0.0
    %2425 = vmatpush1.msra.mxu0 %v2365
    %2426 = vmatprep.subr.mxu0 0.0
    %2427 = vmatpush1.msra.mxu0 %v2364
    %2428 = vmatprep.subr.mxu0 0.0
    %2429 = vmatpush2.msra.mxu0 %v2395
    %2430 = vmatprep.subr.mxu0 0.0
    %2431 = vmatpush2.msra.mxu0 %v2394
    %2432 = vmatprep.subr.mxu0 0.0
    %2433 = vmatpush2.msra.mxu0 %v2393
    %2434 = vmatprep.subr.mxu0 0.0
    %2435 = vmatpush2.msra.mxu0 %v2392
    %2436 = vmatprep.subr.mxu0 0.0
    %2437 = vmatpush2.msra.mxu0 %v2391
    %2438 = vmatprep.subr.mxu0 0.0
    %2439 = vmatpush2.msra.mxu0 %v2390
    %2440 = vmatprep.subr.mxu0 0.0
    %2441 = vmatpush2.msra.mxu0 %v2389
    %2442 = vmatprep.subr.mxu0 0.0
    %2443 = vmatpush2.msra.mxu0 %v2388
    %2444 = vmatprep.subr.mxu0 0.0
    %2445 = vmatpush2.msra.mxu0 %v2387
    %2446 = vmatprep.subr.mxu0 0.0
    %2447 = vmatpush2.msra.mxu0 %v2386
    %2448 = vmatprep.subr.mxu0 0.0
    %2449 = vmatpush2.msra.mxu0 %v2385
    %2450 = vmatprep.subr.mxu0 0.0
    %2451 = vmatpush2.msra.mxu0 %v2384
    %2452 = vmatprep.subr.mxu0 0.0
    %2453 = vmatpush2.msra.mxu0 %v2383
    %2454 = vmatprep.subr.mxu0 0.0
    %2455 = vmatpush2.msra.mxu0 %v2382
    %2456 = vmatprep.subr.mxu0 0.0
    %2457 = vmatpush2.msra.mxu0 %v2381
    %2458 = vmatprep.subr.mxu0 0.0
    %2459 = vmatpush2.msra.mxu0 %v2380
    %2460 = vmatprep.mubr.f32.mxu0 %v1507
    %2461 = vmatmul.mubr.f32.gmra.mxu0 %v1507
    %v2462 = vpop.f32.mrf.mxu0
    %v2463 = vadd.f32 %v2080, %v2462
    %v2464 = vpop.f32.mrf.mxu0
    %2465 = vdwg.mxu0
    %v2466 = vmax.f32 %v2463, 0.0
    %v2467 = vmax.f32 %v2362, %v2466
    %s2468 = scalar_lea.vmem %s6, 1024
    %v2469 = vld [vmem:[%s2468] sm:$0xff]
    %v2470 = vld [vmem:[%s2468 + $0x8] sm:$0xff]
    %v2471 = vld [vmem:[%s2468 + $0x10] sm:$0xff]
    %v2472 = vld [vmem:[%s2468 + $0x18] sm:$0xff]
    %v2473 = vld [vmem:[%s2468 + $0x20] sm:$0xff]
    %v2474 = vld [vmem:[%s2468 + $0x28] sm:$0xff]
    %v2475 = vld [vmem:[%s2468 + $0x30] sm:$0xff]
    %v2476 = vld [vmem:[%s2468 + $0x38] sm:$0xff]
    %v2477 = vld [vmem:[%s2468 + $0x40] sm:$0xff]
    %v2478 = vld [vmem:[%s2468 + $0x48] sm:$0xff]
    %v2479 = vld [vmem:[%s2468 + $0x50] sm:$0xff]
    %v2480 = vld [vmem:[%s2468 + $0x58] sm:$0xff]
    %v2481 = vld [vmem:[%s2468 + $0x60] sm:$0xff]
    %v2482 = vld [vmem:[%s2468 + $0x68] sm:$0xff]
    %v2483 = vld [vmem:[%s2468 + $0x70] sm:$0xff]
    %v2484 = vld [vmem:[%s2468 + $0x78] sm:$0xff]
    %v2485 = vld [vmem:[%s2468 + $0x80] sm:$0xff]
    %v2486 = vld [vmem:[%s2468 + $0x88] sm:$0xff]
    %v2487 = vld [vmem:[%s2468 + $0x90] sm:$0xff]
    %v2488 = vld [vmem:[%s2468 + $0x98] sm:$0xff]
    %v2489 = vld [vmem:[%s2468 + $0xa0] sm:$0xff]
    %v2490 = vld [vmem:[%s2468 + $0xa8] sm:$0xff]
    %v2491 = vld [vmem:[%s2468 + $0xb0] sm:$0xff]
    %v2492 = vld [vmem:[%s2468 + $0xb8] sm:$0xff]
    %v2493 = vld [vmem:[%s2468 + $0xc0] sm:$0xff]
    %v2494 = vld [vmem:[%s2468 + $0xc8] sm:$0xff]
    %v2495 = vld [vmem:[%s2468 + $0xd0] sm:$0xff]
    %v2496 = vld [vmem:[%s2468 + $0xd8] sm:$0xff]
    %v2497 = vld [vmem:[%s2468 + $0xe0] sm:$0xff]
    %v2498 = vld [vmem:[%s2468 + $0xe8] sm:$0xff]
    %v2499 = vld [vmem:[%s2468 + $0xf0] sm:$0xff]
    %v2500 = vld [vmem:[%s2468 + $0xf8] sm:$0xff]
    %2501 = vmatprep.subr.mxu0 0.0
    %2502 = vmatpush1.msra.mxu0 %v2484
    %2503 = vmatprep.subr.mxu0 0.0
    %2504 = vmatpush1.msra.mxu0 %v2483
    %2505 = vmatprep.subr.mxu0 0.0
    %2506 = vmatpush1.msra.mxu0 %v2482
    %2507 = vmatprep.subr.mxu0 0.0
    %2508 = vmatpush1.msra.mxu0 %v2481
    %2509 = vmatprep.subr.mxu0 0.0
    %2510 = vmatpush1.msra.mxu0 %v2480
    %2511 = vmatprep.subr.mxu0 0.0
    %2512 = vmatpush1.msra.mxu0 %v2479
    %2513 = vmatprep.subr.mxu0 0.0
    %2514 = vmatpush1.msra.mxu0 %v2478
    %2515 = vmatprep.subr.mxu0 0.0
    %2516 = vmatpush1.msra.mxu0 %v2477
    %2517 = vmatprep.subr.mxu0 0.0
    %2518 = vmatpush1.msra.mxu0 %v2476
    %2519 = vmatprep.subr.mxu0 0.0
    %2520 = vmatpush1.msra.mxu0 %v2475
    %2521 = vmatprep.subr.mxu0 0.0
    %2522 = vmatpush1.msra.mxu0 %v2474
    %2523 = vmatprep.subr.mxu0 0.0
    %2524 = vmatpush1.msra.mxu0 %v2473
    %2525 = vmatprep.subr.mxu0 0.0
    %2526 = vmatpush1.msra.mxu0 %v2472
    %2527 = vmatprep.subr.mxu0 0.0
    %2528 = vmatpush1.msra.mxu0 %v2471
    %2529 = vmatprep.subr.mxu0 0.0
    %2530 = vmatpush1.msra.mxu0 %v2470
    %2531 = vmatprep.subr.mxu0 0.0
    %2532 = vmatpush1.msra.mxu0 %v2469
    %2533 = vmatprep.subr.mxu0 0.0
    %2534 = vmatpush2.msra.mxu0 %v2500
    %2535 = vmatprep.subr.mxu0 0.0
    %2536 = vmatpush2.msra.mxu0 %v2499
    %2537 = vmatprep.subr.mxu0 0.0
    %2538 = vmatpush2.msra.mxu0 %v2498
    %2539 = vmatprep.subr.mxu0 0.0
    %2540 = vmatpush2.msra.mxu0 %v2497
    %2541 = vmatprep.subr.mxu0 0.0
    %2542 = vmatpush2.msra.mxu0 %v2496
    %2543 = vmatprep.subr.mxu0 0.0
    %2544 = vmatpush2.msra.mxu0 %v2495
    %2545 = vmatprep.subr.mxu0 0.0
    %2546 = vmatpush2.msra.mxu0 %v2494
    %2547 = vmatprep.subr.mxu0 0.0
    %2548 = vmatpush2.msra.mxu0 %v2493
    %2549 = vmatprep.subr.mxu0 0.0
    %2550 = vmatpush2.msra.mxu0 %v2492
    %2551 = vmatprep.subr.mxu0 0.0
    %2552 = vmatpush2.msra.mxu0 %v2491
    %2553 = vmatprep.subr.mxu0 0.0
    %2554 = vmatpush2.msra.mxu0 %v2490
    %2555 = vmatprep.subr.mxu0 0.0
    %2556 = vmatpush2.msra.mxu0 %v2489
    %2557 = vmatprep.subr.mxu0 0.0
    %2558 = vmatpush2.msra.mxu0 %v2488
    %2559 = vmatprep.subr.mxu0 0.0
    %2560 = vmatpush2.msra.mxu0 %v2487
    %2561 = vmatprep.subr.mxu0 0.0
    %2562 = vmatpush2.msra.mxu0 %v2486
    %2563 = vmatprep.subr.mxu0 0.0
    %2564 = vmatpush2.msra.mxu0 %v2485
    %2565 = vmatprep.mubr.f32.mxu0 %v1507
    %2566 = vmatmul.mubr.f32.gmra.mxu0 %v1507
    %v2567 = vpop.f32.mrf.mxu0
    %v2568 = vadd.f32 %v2080, %v2567
    %v2569 = vpop.f32.mrf.mxu0
    %2570 = vdwg.mxu0
    %v2571 = vmax.f32 %v2568, 0.0
    %v2572 = vmax.f32 %v2467, %v2571
    %s2573 = scalar_lea.vmem %s6, 1280
    %v2574 = vld [vmem:[%s2573] sm:$0xff]
    %v2575 = vld [vmem:[%s2573 + $0x8] sm:$0xff]
    %v2576 = vld [vmem:[%s2573 + $0x10] sm:$0xff]
    %v2577 = vld [vmem:[%s2573 + $0x18] sm:$0xff]
    %v2578 = vld [vmem:[%s2573 + $0x20] sm:$0xff]
    %v2579 = vld [vmem:[%s2573 + $0x28] sm:$0xff]
    %v2580 = vld [vmem:[%s2573 + $0x30] sm:$0xff]
    %v2581 = vld [vmem:[%s2573 + $0x38] sm:$0xff]
    %v2582 = vld [vmem:[%s2573 + $0x40] sm:$0xff]
    %v2583 = vld [vmem:[%s2573 + $0x48] sm:$0xff]
    %v2584 = vld [vmem:[%s2573 + $0x50] sm:$0xff]
    %v2585 = vld [vmem:[%s2573 + $0x58] sm:$0xff]
    %v2586 = vld [vmem:[%s2573 + $0x60] sm:$0xff]
    %v2587 = vld [vmem:[%s2573 + $0x68] sm:$0xff]
    %v2588 = vld [vmem:[%s2573 + $0x70] sm:$0xff]
    %v2589 = vld [vmem:[%s2573 + $0x78] sm:$0xff]
    %v2590 = vld [vmem:[%s2573 + $0x80] sm:$0xff]
    %v2591 = vld [vmem:[%s2573 + $0x88] sm:$0xff]
    %v2592 = vld [vmem:[%s2573 + $0x90] sm:$0xff]
    %v2593 = vld [vmem:[%s2573 + $0x98] sm:$0xff]
    %v2594 = vld [vmem:[%s2573 + $0xa0] sm:$0xff]
    %v2595 = vld [vmem:[%s2573 + $0xa8] sm:$0xff]
    %v2596 = vld [vmem:[%s2573 + $0xb0] sm:$0xff]
    %v2597 = vld [vmem:[%s2573 + $0xb8] sm:$0xff]
    %v2598 = vld [vmem:[%s2573 + $0xc0] sm:$0xff]
    %v2599 = vld [vmem:[%s2573 + $0xc8] sm:$0xff]
    %v2600 = vld [vmem:[%s2573 + $0xd0] sm:$0xff]
    %v2601 = vld [vmem:[%s2573 + $0xd8] sm:$0xff]
    %v2602 = vld [vmem:[%s2573 + $0xe0] sm:$0xff]
    %v2603 = vld [vmem:[%s2573 + $0xe8] sm:$0xff]
    %v2604 = vld [vmem:[%s2573 + $0xf0] sm:$0xff]
    %v2605 = vld [vmem:[%s2573 + $0xf8] sm:$0xff]
    %2606 = vmatprep.subr.mxu0 0.0
    %2607 = vmatpush1.msra.mxu0 %v2589
    %2608 = vmatprep.subr.mxu0 0.0
    %2609 = vmatpush1.msra.mxu0 %v2588
    %2610 = vmatprep.subr.mxu0 0.0
    %2611 = vmatpush1.msra.mxu0 %v2587
    %2612 = vmatprep.subr.mxu0 0.0
    %2613 = vmatpush1.msra.mxu0 %v2586
    %2614 = vmatprep.subr.mxu0 0.0
    %2615 = vmatpush1.msra.mxu0 %v2585
    %2616 = vmatprep.subr.mxu0 0.0
    %2617 = vmatpush1.msra.mxu0 %v2584
    %2618 = vmatprep.subr.mxu0 0.0
    %2619 = vmatpush1.msra.mxu0 %v2583
    %2620 = vmatprep.subr.mxu0 0.0
    %2621 = vmatpush1.msra.mxu0 %v2582
    %2622 = vmatprep.subr.mxu0 0.0
    %2623 = vmatpush1.msra.mxu0 %v2581
    %2624 = vmatprep.subr.mxu0 0.0
    %2625 = vmatpush1.msra.mxu0 %v2580
    %2626 = vmatprep.subr.mxu0 0.0
    %2627 = vmatpush1.msra.mxu0 %v2579
    %2628 = vmatprep.subr.mxu0 0.0
    %2629 = vmatpush1.msra.mxu0 %v2578
    %2630 = vmatprep.subr.mxu0 0.0
    %2631 = vmatpush1.msra.mxu0 %v2577
    %2632 = vmatprep.subr.mxu0 0.0
    %2633 = vmatpush1.msra.mxu0 %v2576
    %2634 = vmatprep.subr.mxu0 0.0
    %2635 = vmatpush1.msra.mxu0 %v2575
    %2636 = vmatprep.subr.mxu0 0.0
    %2637 = vmatpush1.msra.mxu0 %v2574
    %2638 = vmatprep.subr.mxu0 0.0
    %2639 = vmatpush2.msra.mxu0 %v2605
    %2640 = vmatprep.subr.mxu0 0.0
    %2641 = vmatpush2.msra.mxu0 %v2604
    %2642 = vmatprep.subr.mxu0 0.0
    %2643 = vmatpush2.msra.mxu0 %v2603
    %2644 = vmatprep.subr.mxu0 0.0
    %2645 = vmatpush2.msra.mxu0 %v2602
    %2646 = vmatprep.subr.mxu0 0.0
    %2647 = vmatpush2.msra.mxu0 %v2601
    %2648 = vmatprep.subr.mxu0 0.0
    %2649 = vmatpush2.msra.mxu0 %v2600
    %2650 = vmatprep.subr.mxu0 0.0
    %2651 = vmatpush2.msra.mxu0 %v2599
    %2652 = vmatprep.subr.mxu0 0.0
    %2653 = vmatpush2.msra.mxu0 %v2598
    %2654 = vmatprep.subr.mxu0 0.0
    %2655 = vmatpush2.msra.mxu0 %v2597
    %2656 = vmatprep.subr.mxu0 0.0
    %2657 = vmatpush2.msra.mxu0 %v2596
    %2658 = vmatprep.subr.mxu0 0.0
    %2659 = vmatpush2.msra.mxu0 %v2595
    %2660 = vmatprep.subr.mxu0 0.0
    %2661 = vmatpush2.msra.mxu0 %v2594
    %2662 = vmatprep.subr.mxu0 0.0
    %2663 = vmatpush2.msra.mxu0 %v2593
    %2664 = vmatprep.subr.mxu0 0.0
    %2665 = vmatpush2.msra.mxu0 %v2592
    %2666 = vmatprep.subr.mxu0 0.0
    %2667 = vmatpush2.msra.mxu0 %v2591
    %2668 = vmatprep.subr.mxu0 0.0
    %2669 = vmatpush2.msra.mxu0 %v2590
    %2670 = vmatprep.mubr.f32.mxu0 %v1507
    %2671 = vmatmul.mubr.f32.gmra.mxu0 %v1507
    %v2672 = vpop.f32.mrf.mxu0
    %v2673 = vadd.f32 %v2080, %v2672
    %v2674 = vpop.f32.mrf.mxu0
    %2675 = vdwg.mxu0
    %v2676 = vmax.f32 %v2673, 0.0
    %v2677 = vmax.f32 %v2572, %v2676
    %s2678 = scalar_lea.vmem %s6, 1536
    %v2679 = vld [vmem:[%s2678] sm:$0xff]
    %v2680 = vld [vmem:[%s2678 + $0x8] sm:$0xff]
    %v2681 = vld [vmem:[%s2678 + $0x10] sm:$0xff]
    %v2682 = vld [vmem:[%s2678 + $0x18] sm:$0xff]
    %v2683 = vld [vmem:[%s2678 + $0x20] sm:$0xff]
    %v2684 = vld [vmem:[%s2678 + $0x28] sm:$0xff]
    %v2685 = vld [vmem:[%s2678 + $0x30] sm:$0xff]
    %v2686 = vld [vmem:[%s2678 + $0x38] sm:$0xff]
    %v2687 = vld [vmem:[%s2678 + $0x40] sm:$0xff]
    %v2688 = vld [vmem:[%s2678 + $0x48] sm:$0xff]
    %v2689 = vld [vmem:[%s2678 + $0x50] sm:$0xff]
    %v2690 = vld [vmem:[%s2678 + $0x58] sm:$0xff]
    %v2691 = vld [vmem:[%s2678 + $0x60] sm:$0xff]
    %v2692 = vld [vmem:[%s2678 + $0x68] sm:$0xff]
    %v2693 = vld [vmem:[%s2678 + $0x70] sm:$0xff]
    %v2694 = vld [vmem:[%s2678 + $0x78] sm:$0xff]
    %v2695 = vld [vmem:[%s2678 + $0x80] sm:$0xff]
    %v2696 = vld [vmem:[%s2678 + $0x88] sm:$0xff]
    %v2697 = vld [vmem:[%s2678 + $0x90] sm:$0xff]
    %v2698 = vld [vmem:[%s2678 + $0x98] sm:$0xff]
    %v2699 = vld [vmem:[%s2678 + $0xa0] sm:$0xff]
    %v2700 = vld [vmem:[%s2678 + $0xa8] sm:$0xff]
    %v2701 = vld [vmem:[%s2678 + $0xb0] sm:$0xff]
    %v2702 = vld [vmem:[%s2678 + $0xb8] sm:$0xff]
    %v2703 = vld [vmem:[%s2678 + $0xc0] sm:$0xff]
    %v2704 = vld [vmem:[%s2678 + $0xc8] sm:$0xff]
    %v2705 = vld [vmem:[%s2678 + $0xd0] sm:$0xff]
    %v2706 = vld [vmem:[%s2678 + $0xd8] sm:$0xff]
    %v2707 = vld [vmem:[%s2678 + $0xe0] sm:$0xff]
    %v2708 = vld [vmem:[%s2678 + $0xe8] sm:$0xff]
    %v2709 = vld [vmem:[%s2678 + $0xf0] sm:$0xff]
    %v2710 = vld [vmem:[%s2678 + $0xf8] sm:$0xff]
    %2711 = vmatprep.subr.mxu0 0.0
    %2712 = vmatpush1.msra.mxu0 %v2694
    %2713 = vmatprep.subr.mxu0 0.0
    %2714 = vmatpush1.msra.mxu0 %v2693
    %2715 = vmatprep.subr.mxu0 0.0
    %2716 = vmatpush1.msra.mxu0 %v2692
    %2717 = vmatprep.subr.mxu0 0.0
    %2718 = vmatpush1.msra.mxu0 %v2691
    %2719 = vmatprep.subr.mxu0 0.0
    %2720 = vmatpush1.msra.mxu0 %v2690
    %2721 = vmatprep.subr.mxu0 0.0
    %2722 = vmatpush1.msra.mxu0 %v2689
    %2723 = vmatprep.subr.mxu0 0.0
    %2724 = vmatpush1.msra.mxu0 %v2688
    %2725 = vmatprep.subr.mxu0 0.0
    %2726 = vmatpush1.msra.mxu0 %v2687
    %2727 = vmatprep.subr.mxu0 0.0
    %2728 = vmatpush1.msra.mxu0 %v2686
    %2729 = vmatprep.subr.mxu0 0.0
    %2730 = vmatpush1.msra.mxu0 %v2685
    %2731 = vmatprep.subr.mxu0 0.0
    %2732 = vmatpush1.msra.mxu0 %v2684
    %2733 = vmatprep.subr.mxu0 0.0
    %2734 = vmatpush1.msra.mxu0 %v2683
    %2735 = vmatprep.subr.mxu0 0.0
    %2736 = vmatpush1.msra.mxu0 %v2682
    %2737 = vmatprep.subr.mxu0 0.0
    %2738 = vmatpush1.msra.mxu0 %v2681
    %2739 = vmatprep.subr.mxu0 0.0
    %2740 = vmatpush1.msra.mxu0 %v2680
    %2741 = vmatprep.subr.mxu0 0.0
    %2742 = vmatpush1.msra.mxu0 %v2679
    %2743 = vmatprep.subr.mxu0 0.0
    %2744 = vmatpush2.msra.mxu0 %v2710
    %2745 = vmatprep.subr.mxu0 0.0
    %2746 = vmatpush2.msra.mxu0 %v2709
    %2747 = vmatprep.subr.mxu0 0.0
    %2748 = vmatpush2.msra.mxu0 %v2708
    %2749 = vmatprep.subr.mxu0 0.0
    %2750 = vmatpush2.msra.mxu0 %v2707
    %2751 = vmatprep.subr.mxu0 0.0
    %2752 = vmatpush2.msra.mxu0 %v2706
    %2753 = vmatprep.subr.mxu0 0.0
    %2754 = vmatpush2.msra.mxu0 %v2705
    %2755 = vmatprep.subr.mxu0 0.0
    %2756 = vmatpush2.msra.mxu0 %v2704
    %2757 = vmatprep.subr.mxu0 0.0
    %2758 = vmatpush2.msra.mxu0 %v2703
    %2759 = vmatprep.subr.mxu0 0.0
    %2760 = vmatpush2.msra.mxu0 %v2702
    %2761 = vmatprep.subr.mxu0 0.0
    %2762 = vmatpush2.msra.mxu0 %v2701
    %2763 = vmatprep.subr.mxu0 0.0
    %2764 = vmatpush2.msra.mxu0 %v2700
    %2765 = vmatprep.subr.mxu0 0.0
    %2766 = vmatpush2.msra.mxu0 %v2699
    %2767 = vmatprep.subr.mxu0 0.0
    %2768 = vmatpush2.msra.mxu0 %v2698
    %2769 = vmatprep.subr.mxu0 0.0
    %2770 = vmatpush2.msra.mxu0 %v2697
    %2771 = vmatprep.subr.mxu0 0.0
    %2772 = vmatpush2.msra.mxu0 %v2696
    %2773 = vmatprep.subr.mxu0 0.0
    %2774 = vmatpush2.msra.mxu0 %v2695
    %2775 = vmatprep.mubr.f32.mxu0 %v1507
    %2776 = vmatmul.mubr.f32.gmra.mxu0 %v1507
    %v2777 = vpop.f32.mrf.mxu0
    %v2778 = vadd.f32 %v2080, %v2777
    %v2779 = vpop.f32.mrf.mxu0
    %2780 = vdwg.mxu0
    %v2781 = vmax.f32 %v2778, 0.0
    %v2782 = vmax.f32 %v2677, %v2781
    %s2783 = scalar_lea.vmem %s6, 1792
    %v2784 = vld [vmem:[%s2783] sm:$0xff]
    %v2785 = vld [vmem:[%s2783 + $0x8] sm:$0xff]
    %v2786 = vld [vmem:[%s2783 + $0x10] sm:$0xff]
    %v2787 = vld [vmem:[%s2783 + $0x18] sm:$0xff]
    %v2788 = vld [vmem:[%s2783 + $0x20] sm:$0xff]
    %v2789 = vld [vmem:[%s2783 + $0x28] sm:$0xff]
    %v2790 = vld [vmem:[%s2783 + $0x30] sm:$0xff]
    %v2791 = vld [vmem:[%s2783 + $0x38] sm:$0xff]
    %v2792 = vld [vmem:[%s2783 + $0x40] sm:$0xff]
    %v2793 = vld [vmem:[%s2783 + $0x48] sm:$0xff]
    %v2794 = vld [vmem:[%s2783 + $0x50] sm:$0xff]
    %v2795 = vld [vmem:[%s2783 + $0x58] sm:$0xff]
    %v2796 = vld [vmem:[%s2783 + $0x60] sm:$0xff]
    %v2797 = vld [vmem:[%s2783 + $0x68] sm:$0xff]
    %v2798 = vld [vmem:[%s2783 + $0x70] sm:$0xff]
    %v2799 = vld [vmem:[%s2783 + $0x78] sm:$0xff]
    %v2800 = vld [vmem:[%s2783 + $0x80] sm:$0xff]
    %v2801 = vld [vmem:[%s2783 + $0x88] sm:$0xff]
    %v2802 = vld [vmem:[%s2783 + $0x90] sm:$0xff]
    %v2803 = vld [vmem:[%s2783 + $0x98] sm:$0xff]
    %v2804 = vld [vmem:[%s2783 + $0xa0] sm:$0xff]
    %v2805 = vld [vmem:[%s2783 + $0xa8] sm:$0xff]
    %v2806 = vld [vmem:[%s2783 + $0xb0] sm:$0xff]
    %v2807 = vld [vmem:[%s2783 + $0xb8] sm:$0xff]
    %v2808 = vld [vmem:[%s2783 + $0xc0] sm:$0xff]
    %v2809 = vld [vmem:[%s2783 + $0xc8] sm:$0xff]
    %v2810 = vld [vmem:[%s2783 + $0xd0] sm:$0xff]
    %v2811 = vld [vmem:[%s2783 + $0xd8] sm:$0xff]
    %v2812 = vld [vmem:[%s2783 + $0xe0] sm:$0xff]
    %v2813 = vld [vmem:[%s2783 + $0xe8] sm:$0xff]
    %v2814 = vld [vmem:[%s2783 + $0xf0] sm:$0xff]
    %v2815 = vld [vmem:[%s2783 + $0xf8] sm:$0xff]
    %2816 = vmatprep.subr.mxu0 0.0
    %2817 = vmatpush1.msra.mxu0 %v2799
    %2818 = vmatprep.subr.mxu0 0.0
    %2819 = vmatpush1.msra.mxu0 %v2798
    %2820 = vmatprep.subr.mxu0 0.0
    %2821 = vmatpush1.msra.mxu0 %v2797
    %2822 = vmatprep.subr.mxu0 0.0
    %2823 = vmatpush1.msra.mxu0 %v2796
    %2824 = vmatprep.subr.mxu0 0.0
    %2825 = vmatpush1.msra.mxu0 %v2795
    %2826 = vmatprep.subr.mxu0 0.0
    %2827 = vmatpush1.msra.mxu0 %v2794
    %2828 = vmatprep.subr.mxu0 0.0
    %2829 = vmatpush1.msra.mxu0 %v2793
    %2830 = vmatprep.subr.mxu0 0.0
    %2831 = vmatpush1.msra.mxu0 %v2792
    %2832 = vmatprep.subr.mxu0 0.0
    %2833 = vmatpush1.msra.mxu0 %v2791
    %2834 = vmatprep.subr.mxu0 0.0
    %2835 = vmatpush1.msra.mxu0 %v2790
    %2836 = vmatprep.subr.mxu0 0.0
    %2837 = vmatpush1.msra.mxu0 %v2789
    %2838 = vmatprep.subr.mxu0 0.0
    %2839 = vmatpush1.msra.mxu0 %v2788
    %2840 = vmatprep.subr.mxu0 0.0
    %2841 = vmatpush1.msra.mxu0 %v2787
    %2842 = vmatprep.subr.mxu0 0.0
    %2843 = vmatpush1.msra.mxu0 %v2786
    %2844 = vmatprep.subr.mxu0 0.0
    %2845 = vmatpush1.msra.mxu0 %v2785
    %2846 = vmatprep.subr.mxu0 0.0
    %2847 = vmatpush1.msra.mxu0 %v2784
    %2848 = vmatprep.subr.mxu0 0.0
    %2849 = vmatpush2.msra.mxu0 %v2815
    %2850 = vmatprep.subr.mxu0 0.0
    %2851 = vmatpush2.msra.mxu0 %v2814
    %2852 = vmatprep.subr.mxu0 0.0
    %2853 = vmatpush2.msra.mxu0 %v2813
    %2854 = vmatprep.subr.mxu0 0.0
    %2855 = vmatpush2.msra.mxu0 %v2812
    %2856 = vmatprep.subr.mxu0 0.0
    %2857 = vmatpush2.msra.mxu0 %v2811
    %2858 = vmatprep.subr.mxu0 0.0
    %2859 = vmatpush2.msra.mxu0 %v2810
    %2860 = vmatprep.subr.mxu0 0.0
    %2861 = vmatpush2.msra.mxu0 %v2809
    %2862 = vmatprep.subr.mxu0 0.0
    %2863 = vmatpush2.msra.mxu0 %v2808
    %2864 = vmatprep.subr.mxu0 0.0
    %2865 = vmatpush2.msra.mxu0 %v2807
    %2866 = vmatprep.subr.mxu0 0.0
    %2867 = vmatpush2.msra.mxu0 %v2806
    %2868 = vmatprep.subr.mxu0 0.0
    %2869 = vmatpush2.msra.mxu0 %v2805
    %2870 = vmatprep.subr.mxu0 0.0
    %2871 = vmatpush2.msra.mxu0 %v2804
    %2872 = vmatprep.subr.mxu0 0.0
    %2873 = vmatpush2.msra.mxu0 %v2803
    %2874 = vmatprep.subr.mxu0 0.0
    %2875 = vmatpush2.msra.mxu0 %v2802
    %2876 = vmatprep.subr.mxu0 0.0
    %2877 = vmatpush2.msra.mxu0 %v2801
    %2878 = vmatprep.subr.mxu0 0.0
    %2879 = vmatpush2.msra.mxu0 %v2800
    %2880 = vmatprep.mubr.f32.mxu0 %v1507
    %2881 = vmatmul.mubr.f32.gmra.mxu0 %v1507
    %v2882 = vpop.f32.mrf.mxu0
    %v2883 = vadd.f32 %v2080, %v2882
    %v2884 = vpop.f32.mrf.mxu0
    %2885 = vdwg.mxu0
    %v2886 = vmax.f32 %v2883, 0.0
    %v2887 = vmax.f32 %v2782, %v2886
    %s2888 = scalar_lea.vmem %s6, 2048
    %v2889 = vld [vmem:[%s2888] sm:$0xff]
    %v2890 = vld [vmem:[%s2888 + $0x8] sm:$0xff]
    %v2891 = vld [vmem:[%s2888 + $0x10] sm:$0xff]
    %v2892 = vld [vmem:[%s2888 + $0x18] sm:$0xff]
    %v2893 = vld [vmem:[%s2888 + $0x20] sm:$0xff]
    %v2894 = vld [vmem:[%s2888 + $0x28] sm:$0xff]
    %v2895 = vld [vmem:[%s2888 + $0x30] sm:$0xff]
    %v2896 = vld [vmem:[%s2888 + $0x38] sm:$0xff]
    %v2897 = vld [vmem:[%s2888 + $0x40] sm:$0xff]
    %v2898 = vld [vmem:[%s2888 + $0x48] sm:$0xff]
    %v2899 = vld [vmem:[%s2888 + $0x50] sm:$0xff]
    %v2900 = vld [vmem:[%s2888 + $0x58] sm:$0xff]
    %v2901 = vld [vmem:[%s2888 + $0x60] sm:$0xff]
    %v2902 = vld [vmem:[%s2888 + $0x68] sm:$0xff]
    %v2903 = vld [vmem:[%s2888 + $0x70] sm:$0xff]
    %v2904 = vld [vmem:[%s2888 + $0x78] sm:$0xff]
    %v2905 = vld [vmem:[%s2888 + $0x80] sm:$0xff]
    %v2906 = vld [vmem:[%s2888 + $0x88] sm:$0xff]
    %v2907 = vld [vmem:[%s2888 + $0x90] sm:$0xff]
    %v2908 = vld [vmem:[%s2888 + $0x98] sm:$0xff]
    %v2909 = vld [vmem:[%s2888 + $0xa0] sm:$0xff]
    %v2910 = vld [vmem:[%s2888 + $0xa8] sm:$0xff]
    %v2911 = vld [vmem:[%s2888 + $0xb0] sm:$0xff]
    %v2912 = vld [vmem:[%s2888 + $0xb8] sm:$0xff]
    %v2913 = vld [vmem:[%s2888 + $0xc0] sm:$0xff]
    %v2914 = vld [vmem:[%s2888 + $0xc8] sm:$0xff]
    %v2915 = vld [vmem:[%s2888 + $0xd0] sm:$0xff]
    %v2916 = vld [vmem:[%s2888 + $0xd8] sm:$0xff]
    %v2917 = vld [vmem:[%s2888 + $0xe0] sm:$0xff]
    %v2918 = vld [vmem:[%s2888 + $0xe8] sm:$0xff]
    %v2919 = vld [vmem:[%s2888 + $0xf0] sm:$0xff]
    %v2920 = vld [vmem:[%s2888 + $0xf8] sm:$0xff]
    %2921 = vmatprep.subr.mxu0 0.0
    %2922 = vmatpush1.msra.mxu0 %v2904
    %2923 = vmatprep.subr.mxu0 0.0
    %2924 = vmatpush1.msra.mxu0 %v2903
    %2925 = vmatprep.subr.mxu0 0.0
    %2926 = vmatpush1.msra.mxu0 %v2902
    %2927 = vmatprep.subr.mxu0 0.0
    %2928 = vmatpush1.msra.mxu0 %v2901
    %2929 = vmatprep.subr.mxu0 0.0
    %2930 = vmatpush1.msra.mxu0 %v2900
    %2931 = vmatprep.subr.mxu0 0.0
    %2932 = vmatpush1.msra.mxu0 %v2899
    %2933 = vmatprep.subr.mxu0 0.0
    %2934 = vmatpush1.msra.mxu0 %v2898
    %2935 = vmatprep.subr.mxu0 0.0
    %2936 = vmatpush1.msra.mxu0 %v2897
    %2937 = vmatprep.subr.mxu0 0.0
    %2938 = vmatpush1.msra.mxu0 %v2896
    %2939 = vmatprep.subr.mxu0 0.0
    %2940 = vmatpush1.msra.mxu0 %v2895
    %2941 = vmatprep.subr.mxu0 0.0
    %2942 = vmatpush1.msra.mxu0 %v2894
    %2943 = vmatprep.subr.mxu0 0.0
    %2944 = vmatpush1.msra.mxu0 %v2893
    %2945 = vmatprep.subr.mxu0 0.0
    %2946 = vmatpush1.msra.mxu0 %v2892
    %2947 = vmatprep.subr.mxu0 0.0
    %2948 = vmatpush1.msra.mxu0 %v2891
    %2949 = vmatprep.subr.mxu0 0.0
    %2950 = vmatpush1.msra.mxu0 %v2890
    %2951 = vmatprep.subr.mxu0 0.0
    %2952 = vmatpush1.msra.mxu0 %v2889
    %2953 = vmatprep.subr.mxu0 0.0
    %2954 = vmatpush2.msra.mxu0 %v2920
    %2955 = vmatprep.subr.mxu0 0.0
    %2956 = vmatpush2.msra.mxu0 %v2919
    %2957 = vmatprep.subr.mxu0 0.0
    %2958 = vmatpush2.msra.mxu0 %v2918
    %2959 = vmatprep.subr.mxu0 0.0
    %2960 = vmatpush2.msra.mxu0 %v2917
    %2961 = vmatprep.subr.mxu0 0.0
    %2962 = vmatpush2.msra.mxu0 %v2916
    %2963 = vmatprep.subr.mxu0 0.0
    %2964 = vmatpush2.msra.mxu0 %v2915
    %2965 = vmatprep.subr.mxu0 0.0
    %2966 = vmatpush2.msra.mxu0 %v2914
    %2967 = vmatprep.subr.mxu0 0.0
    %2968 = vmatpush2.msra.mxu0 %v2913
    %2969 = vmatprep.subr.mxu0 0.0
    %2970 = vmatpush2.msra.mxu0 %v2912
    %2971 = vmatprep.subr.mxu0 0.0
    %2972 = vmatpush2.msra.mxu0 %v2911
    %2973 = vmatprep.subr.mxu0 0.0
    %2974 = vmatpush2.msra.mxu0 %v2910
    %2975 = vmatprep.subr.mxu0 0.0
    %2976 = vmatpush2.msra.mxu0 %v2909
    %2977 = vmatprep.subr.mxu0 0.0
    %2978 = vmatpush2.msra.mxu0 %v2908
    %2979 = vmatprep.subr.mxu0 0.0
    %2980 = vmatpush2.msra.mxu0 %v2907
    %2981 = vmatprep.subr.mxu0 0.0
    %2982 = vmatpush2.msra.mxu0 %v2906
    %2983 = vmatprep.subr.mxu0 0.0
    %2984 = vmatpush2.msra.mxu0 %v2905
    %2985 = vmatprep.mubr.f32.mxu0 %v1507
    %2986 = vmatmul.mubr.f32.gmra.mxu0 %v1507
    %v2987 = vpop.f32.mrf.mxu0
    %v2988 = vadd.f32 %v2080, %v2987
    %v2989 = vpop.f32.mrf.mxu0
    %2990 = vdwg.mxu0
    %v2991 = vmax.f32 %v2988, 0.0
    %v2992 = vmax.f32 %v2887, %v2991
    %v2993 = vld [vmem:[%s8] sm:$0xff]
    %v2994 = vld [vmem:[%s8 + $0x8] sm:$0xff]
    %v2995 = vld [vmem:[%s8 + $0x10] sm:$0xff]
    %v2996 = vld [vmem:[%s8 + $0x18] sm:$0xff]
    %v2997 = vld [vmem:[%s8 + $0x20] sm:$0xff]
    %v2998 = vld [vmem:[%s8 + $0x28] sm:$0xff]
    %vm2999 = vcmask 130048
    %v3001 = vsel %vm2999, %v2042, 0
    %3003 = vmatprep.subr.mxu0 0.0
    %3004 = vmatpush1.msra.mxu0 0.0
    %3005 = vmatprep.subr.mxu0 0.0
    %3006 = vmatpush1.msra.mxu0 0.0
    %3007 = vmatprep.subr.mxu0 0.0
    %3008 = vmatpush1.msra.mxu0 0.0
    %3009 = vmatprep.subr.mxu0 0.0
    %3010 = vmatpush1.msra.mxu0 0.0
    %3011 = vmatprep.subr.mxu0 0.0
    %3012 = vmatpush1.msra.mxu0 0.0
    %3013 = vmatprep.subr.mxu0 0.0
    %3014 = vmatpush1.msra.mxu0 0.0
    %3015 = vmatprep.subr.mxu0 0.0
    %3016 = vmatpush1.msra.mxu0 0.0
    %3017 = vmatprep.subr.mxu0 0.0
    %3018 = vmatpush1.msra.mxu0 0.0
    %3019 = vmatprep.subr.mxu0 0.0
    %3020 = vmatpush1.msra.mxu0 0.0
    %3021 = vmatprep.subr.mxu0 0.0
    %3022 = vmatpush1.msra.mxu0 0.0
    %3023 = vmatprep.subr.mxu0 0.0
    %3024 = vmatpush1.msra.mxu0 0.0
    %3025 = vmatprep.subr.mxu0 0.0
    %3026 = vmatpush1.msra.mxu0 0.0
    %3027 = vmatprep.subr.mxu0 0.0
    %3028 = vmatpush1.msra.mxu0 0.0
    %3029 = vmatprep.subr.mxu0 0.0
    %3030 = vmatpush1.msra.mxu0 0.0
    %3031 = vmatprep.subr.mxu0 0.0
    %3032 = vmatpush1.msra.mxu0 %v2996
    %3033 = vmatprep.subr.mxu0 0.0
    %3034 = vmatpush1.msra.mxu0 %v2995
    %3035 = vmatprep.subr.mxu0 0.0
    %3036 = vmatpush2.msra.mxu0 0.0
    %3037 = vmatprep.subr.mxu0 0.0
    %3038 = vmatpush2.msra.mxu0 0.0
    %3039 = vmatprep.subr.mxu0 0.0
    %3040 = vmatpush2.msra.mxu0 0.0
    %3041 = vmatprep.subr.mxu0 0.0
    %3042 = vmatpush2.msra.mxu0 0.0
    %3043 = vmatprep.subr.mxu0 0.0
    %3044 = vmatpush2.msra.mxu0 0.0
    %3045 = vmatprep.subr.mxu0 0.0
    %3046 = vmatpush2.msra.mxu0 0.0
    %3047 = vmatprep.subr.mxu0 0.0
    %3048 = vmatpush2.msra.mxu0 0.0
    %3049 = vmatprep.subr.mxu0 0.0
    %3050 = vmatpush2.msra.mxu0 0.0
    %3051 = vmatprep.subr.mxu0 0.0
    %3052 = vmatpush2.msra.mxu0 0.0
    %3053 = vmatprep.subr.mxu0 0.0
    %3054 = vmatpush2.msra.mxu0 0.0
    %3055 = vmatprep.subr.mxu0 0.0
    %3056 = vmatpush2.msra.mxu0 0.0
    %3057 = vmatprep.subr.mxu0 0.0
    %3058 = vmatpush2.msra.mxu0 0.0
    %3059 = vmatprep.subr.mxu0 0.0
    %3060 = vmatpush2.msra.mxu0 0.0
    %3061 = vmatprep.subr.mxu0 0.0
    %3062 = vmatpush2.msra.mxu0 0.0
    %3063 = vmatprep.subr.mxu0 0.0
    %3064 = vmatpush2.msra.mxu0 0.0
    %3065 = vmatprep.subr.mxu0 0.0
    %3066 = vmatpush2.msra.mxu0 0.0
    %3067 = vmatprep.mubr.f32.mxu0 0.0
    %3068 = vmatmul.mubr.f32.gmra.mxu0 %v3001
    %v3069 = vpop.f32.mrf.mxu0
    %v3070 = vadd.f32 0.0, %v3069
    %v3071 = vpop.f32.mrf.mxu0
    %3072 = vdwg.mxu0
    %v3074 = vsel %vm2999, %v1617, 0
    %3076 = vmatprep.subr.mxu0 0.0
    %3077 = vmatpush1.msra.mxu0 0.0
    %3078 = vmatprep.subr.mxu0 0.0
    %3079 = vmatpush1.msra.mxu0 0.0
    %3080 = vmatprep.subr.mxu0 0.0
    %3081 = vmatpush1.msra.mxu0 0.0
    %3082 = vmatprep.subr.mxu0 0.0
    %3083 = vmatpush1.msra.mxu0 0.0
    %3084 = vmatprep.subr.mxu0 0.0
    %3085 = vmatpush1.msra.mxu0 0.0
    %3086 = vmatprep.subr.mxu0 0.0
    %3087 = vmatpush1.msra.mxu0 0.0
    %3088 = vmatprep.subr.mxu0 0.0
    %3089 = vmatpush1.msra.mxu0 0.0
    %3090 = vmatprep.subr.mxu0 0.0
    %3091 = vmatpush1.msra.mxu0 0.0
    %3092 = vmatprep.subr.mxu0 0.0
    %3093 = vmatpush1.msra.mxu0 0.0
    %3094 = vmatprep.subr.mxu0 0.0
    %3095 = vmatpush1.msra.mxu0 0.0
    %3096 = vmatprep.subr.mxu0 0.0
    %3097 = vmatpush1.msra.mxu0 0.0
    %3098 = vmatprep.subr.mxu0 0.0
    %3099 = vmatpush1.msra.mxu0 0.0
    %3100 = vmatprep.subr.mxu0 0.0
    %3101 = vmatpush1.msra.mxu0 0.0
    %3102 = vmatprep.subr.mxu0 0.0
    %3103 = vmatpush1.msra.mxu0 0.0
    %3104 = vmatprep.subr.mxu0 0.0
    %3105 = vmatpush1.msra.mxu0 %v2994
    %3106 = vmatprep.subr.mxu0 0.0
    %3107 = vmatpush1.msra.mxu0 %v2993
    %3108 = vmatprep.subr.mxu0 0.0
    %3109 = vmatpush2.msra.mxu0 0.0
    %3110 = vmatprep.subr.mxu0 0.0
    %3111 = vmatpush2.msra.mxu0 0.0
    %3112 = vmatprep.subr.mxu0 0.0
    %3113 = vmatpush2.msra.mxu0 0.0
    %3114 = vmatprep.subr.mxu0 0.0
    %3115 = vmatpush2.msra.mxu0 0.0
    %3116 = vmatprep.subr.mxu0 0.0
    %3117 = vmatpush2.msra.mxu0 0.0
    %3118 = vmatprep.subr.mxu0 0.0
    %3119 = vmatpush2.msra.mxu0 0.0
    %3120 = vmatprep.subr.mxu0 0.0
    %3121 = vmatpush2.msra.mxu0 0.0
    %3122 = vmatprep.subr.mxu0 0.0
    %3123 = vmatpush2.msra.mxu0 0.0
    %3124 = vmatprep.subr.mxu0 0.0
    %3125 = vmatpush2.msra.mxu0 0.0
    %3126 = vmatprep.subr.mxu0 0.0
    %3127 = vmatpush2.msra.mxu0 0.0
    %3128 = vmatprep.subr.mxu0 0.0
    %3129 = vmatpush2.msra.mxu0 0.0
    %3130 = vmatprep.subr.mxu0 0.0
    %3131 = vmatpush2.msra.mxu0 0.0
    %3132 = vmatprep.subr.mxu0 0.0
    %3133 = vmatpush2.msra.mxu0 0.0
    %3134 = vmatprep.subr.mxu0 0.0
    %3135 = vmatpush2.msra.mxu0 0.0
    %3136 = vmatprep.subr.mxu0 0.0
    %3137 = vmatpush2.msra.mxu0 0.0
    %3138 = vmatprep.subr.mxu0 0.0
    %3139 = vmatpush2.msra.mxu0 0.0
    %3140 = vmatprep.mubr.f32.mxu0 0.0
    %3141 = vmatmul.mubr.f32.gmra.mxu0 %v3074
    %v3142 = vpop.f32.mrf.mxu0
    %v3143 = vadd.f32 %v3070, %v3142
    %v3144 = vpop.f32.mrf.mxu0
    %3145 = vdwg.mxu0
    %v3147 = vsel %vm2999, %v2992, 0
    %3149 = vmatprep.subr.mxu0 0.0
    %3150 = vmatpush1.msra.mxu0 0.0
    %3151 = vmatprep.subr.mxu0 0.0
    %3152 = vmatpush1.msra.mxu0 0.0
    %3153 = vmatprep.subr.mxu0 0.0
    %3154 = vmatpush1.msra.mxu0 0.0
    %3155 = vmatprep.subr.mxu0 0.0
    %3156 = vmatpush1.msra.mxu0 0.0
    %3157 = vmatprep.subr.mxu0 0.0
    %3158 = vmatpush1.msra.mxu0 0.0
    %3159 = vmatprep.subr.mxu0 0.0
    %3160 = vmatpush1.msra.mxu0 0.0
    %3161 = vmatprep.subr.mxu0 0.0
    %3162 = vmatpush1.msra.mxu0 0.0
    %3163 = vmatprep.subr.mxu0 0.0
    %3164 = vmatpush1.msra.mxu0 0.0
    %3165 = vmatprep.subr.mxu0 0.0
    %3166 = vmatpush1.msra.mxu0 0.0
    %3167 = vmatprep.subr.mxu0 0.0
    %3168 = vmatpush1.msra.mxu0 0.0
    %3169 = vmatprep.subr.mxu0 0.0
    %3170 = vmatpush1.msra.mxu0 0.0
    %3171 = vmatprep.subr.mxu0 0.0
    %3172 = vmatpush1.msra.mxu0 0.0
    %3173 = vmatprep.subr.mxu0 0.0
    %3174 = vmatpush1.msra.mxu0 0.0
    %3175 = vmatprep.subr.mxu0 0.0
    %3176 = vmatpush1.msra.mxu0 0.0
    %3177 = vmatprep.subr.mxu0 0.0
    %3178 = vmatpush1.msra.mxu0 %v2998
    %3179 = vmatprep.subr.mxu0 0.0
    %3180 = vmatpush1.msra.mxu0 %v2997
    %3181 = vmatprep.subr.mxu0 0.0
    %3182 = vmatpush2.msra.mxu0 0.0
    %3183 = vmatprep.subr.mxu0 0.0
    %3184 = vmatpush2.msra.mxu0 0.0
    %3185 = vmatprep.subr.mxu0 0.0
    %3186 = vmatpush2.msra.mxu0 0.0
    %3187 = vmatprep.subr.mxu0 0.0
    %3188 = vmatpush2.msra.mxu0 0.0
    %3189 = vmatprep.subr.mxu0 0.0
    %3190 = vmatpush2.msra.mxu0 0.0
    %3191 = vmatprep.subr.mxu0 0.0
    %3192 = vmatpush2.msra.mxu0 0.0
    %3193 = vmatprep.subr.mxu0 0.0
    %3194 = vmatpush2.msra.mxu0 0.0
    %3195 = vmatprep.subr.mxu0 0.0
    %3196 = vmatpush2.msra.mxu0 0.0
    %3197 = vmatprep.subr.mxu0 0.0
    %3198 = vmatpush2.msra.mxu0 0.0
    %3199 = vmatprep.subr.mxu0 0.0
    %3200 = vmatpush2.msra.mxu0 0.0
    %3201 = vmatprep.subr.mxu0 0.0
    %3202 = vmatpush2.msra.mxu0 0.0
    %3203 = vmatprep.subr.mxu0 0.0
    %3204 = vmatpush2.msra.mxu0 0.0
    %3205 = vmatprep.subr.mxu0 0.0
    %3206 = vmatpush2.msra.mxu0 0.0
    %3207 = vmatprep.subr.mxu0 0.0
    %3208 = vmatpush2.msra.mxu0 0.0
    %3209 = vmatprep.subr.mxu0 0.0
    %3210 = vmatpush2.msra.mxu0 0.0
    %3211 = vmatprep.subr.mxu0 0.0
    %3212 = vmatpush2.msra.mxu0 0.0
    %3213 = vmatprep.mubr.f32.mxu0 0.0
    %3214 = vmatmul.mubr.f32.gmra.mxu0 %v3147
    %v3215 = vpop.f32.mrf.mxu0
    %v3216 = vadd.f32 0.0, %v3215
    %v3217 = vpop.f32.mrf.mxu0
    %3218 = vdwg.mxu0
    %v3219 = vadd.f32 %v3143, %v3216
    %v3220 = vld [vmem:[%s9] sm:$0x1]
    %v3222 = vlaneseq
    %v3223 = vshrl.u32 %v3222, 7
    %v3224 = vsub.s32 0, %v3223
    %v3225 = vrot.slane %v3220, %v3224
    %v3227 = vadd.f32 %v3219, %v3225
    %vm3228 = vcmask 39936
    %3229 = vst.msk [vmem:[#allocation2] sm:$0xff] %vm3228, %v3227
    // Predicated region
    $region42: #{tpu_custom_call.1} parent=1 // pred_check
      _
    $region43: #{tpu_custom_call.1} parent=1 // pred_check_branch
      %3231 = sbr.rel (0) target = $region45
    $region44: #{tpu_custom_call.1} parent=1 // pred_region
      %s3233 = ssub.s32 128, 128
      %3234 = vsyncadd [#allocation3], %s3233
      %s3236 = sshll.u32 [#allocation2], 4
      %s3237 = int_to_ptr.vmem [resolvable:$true] %s3236
      %3239 = dma.vmem_to_hbm [thread:$0]  %s3237, 128, %s10, [#allocation3]
    $region45: #{tpu_custom_call.1} parent=1 // pred_fallthru
      _
    // Predicated region
    $region46: #{tpu_custom_call.1} parent=1 // pred_check
      _
    $region47: #{tpu_custom_call.1} parent=1 // pred_check_branch
      %3241 = sbr.rel (0) target = $region49
    $region48: #{tpu_custom_call.1} parent=1 // pred_region
      %3242 = dma.done [#allocation3], 128
    $region49: #{tpu_custom_call.1} parent=1 // pred_fallthru
      _
    %3243 = vsyncpa [#allocation3], 1

</llo_original>
